<compile_context>
chip_gen: v6e
topology: v6e:2x2x1
jax: 0.10.0
libtpu: 0.0.40
codegen_flags: <defaults>
</compile_context>

<pallas_src>
import functools
from typing import NamedTuple

import jax
import jax.numpy as jnp
import numpy as np
from jax import lax
from jax.experimental import pallas as pl
from jax.experimental.pallas import tpu as pltpu


def _round_up(a, m):
    return (a + m - 1) // m * m


# ---------------------------------------------------------------------------
# Static layout of the packed parameter slab / packed per-step outputs
# ---------------------------------------------------------------------------
class VRNNLayout(NamedTuple):
    x_dim: int
    h_dim: int
    z_dim: int
    r_dim: int
    ncol: int       # fused layer-0 + GRU column count = 2*h + 3*r
    slab_w: int     # lane width of the parameter slab
    out_w: int      # lane width of the packed per-step output
    n_rows: int     # rows of the parameter slab
    # row offsets inside the parameter slab (all multiples of 8)
    wh_r: int       # fused weights applied to h            (r, ncol)
    wx_r: int       # fused weights applied to x            (x, ncol)
    w1_r: int       # block-diag hidden layer 1             (2h, 2h)
    w2_r: int       # block-diag hidden layer 2             (2h, 2h)
    wg_r: int       # fused Gaussian heads                  (2h, 4z)
    f0_r: int       # phi_z layer 0                         (z, h)
    f1_r: int
    f2_r: int
    f3_r: int
    wip_r: int      # GRU input weight, phi_z rows          (h, 3r)
    b0_r: int
    b1_r: int
    b2_r: int
    bg_r: int
    fb0_r: int
    fb1_r: int
    fb2_r: int
    fb3_r: int
    bih_r: int
    bhh_r: int


def make_layout(x_dim, h_dim, z_dim, r_dim):
    ncol = 2 * h_dim + 3 * r_dim
    slab_w = _round_up(max(ncol, 4 * z_dim, 3 * r_dim, h_dim), 128)
    out_w = _round_up(4 * z_dim + r_dim + h_dim + z_dim, 128)

    off = [0]

    def take(n):
        start = off[0]
        off[0] += _round_up(n, 8)
        return start

    wh_r = take(r_dim)
    wx_r = take(x_dim)
    w1_r = take(2 * h_dim)
    w2_r = take(2 * h_dim)
    wg_r = take(2 * h_dim)
    f0_r = take(z_dim)
    f1_r = take(h_dim)
    f2_r = take(h_dim)
    f3_r = take(h_dim)
    wip_r = take(h_dim)
    b0_r = take(1)
    b1_r = take(1)
    b2_r = take(1)
    bg_r = take(1)
    fb0_r = take(1)
    fb1_r = take(1)
    fb2_r = take(1)
    fb3_r = take(1)
    bih_r = take(1)
    bhh_r = take(1)
    n_rows = _round_up(off[0], 8)

    return VRNNLayout(x_dim, h_dim, z_dim, r_dim, ncol, slab_w, out_w, n_rows,
                      wh_r, wx_r, w1_r, w2_r, wg_r, f0_r, f1_r, f2_r, f3_r, wip_r,
                      b0_r, b1_r, b2_r, bg_r, fb0_r, fb1_r, fb2_r, fb3_r, bih_r, bhh_r)


def pack_param_slab(flat_params, L):
    """Pack the 28 PyTorch-equivalent parameter arrays into one lane-dense slab."""
    (pw0, pb0, pw1, pb1, pw2, pb2, pwg, pbg,
     qw0, qb0, qw1, qb1, qw2, qb2, qwg, qbg,
     fw0, fb0, fw1, fb1, fw2, fb2, fw3, fb3,
     wih, bih, whh, bhh) = [np.asarray(a, np.float32) for a in flat_params]
    X, H, Z, R = L.x_dim, L.h_dim, L.z_dim, L.r_dim
    s = np.zeros((L.n_rows, L.slab_w), np.float32)

    # fused weights applied to h: [prior L0 | posterior L0 (h rows) | GRU W_hh]
    s[L.wh_r:L.wh_r + R, 0:H] = pw0
    s[L.wh_r:L.wh_r + R, H:2 * H] = qw0[:R]
    s[L.wh_r:L.wh_r + R, 2 * H:2 * H + 3 * R] = whh
    # fused weights applied to x: [0 | posterior L0 (x rows) | GRU W_ih (x rows)]
    s[L.wx_r:L.wx_r + X, H:2 * H] = qw0[R:R + X]
    s[L.wx_r:L.wx_r + X, 2 * H:2 * H + 3 * R] = wih[:X]
    # block-diagonal hidden layers (prior | posterior)
    s[L.w1_r:L.w1_r + H, 0:H] = pw1
    s[L.w1_r + H:L.w1_r + 2 * H, H:2 * H] = qw1
    s[L.w2_r:L.w2_r + H, 0:H] = pw2
    s[L.w2_r + H:L.w2_r + 2 * H, H:2 * H] = qw2
    # fused Gaussian heads
    s[L.wg_r:L.wg_r + H, 0:2 * Z] = pwg
    s[L.wg_r + H:L.wg_r + 2 * H, 2 * Z:4 * Z] = qwg
    # phi_z MLP
    s[L.f0_r:L.f0_r + Z, 0:H] = fw0
    s[L.f1_r:L.f1_r + H, 0:H] = fw1
    s[L.f2_r:L.f2_r + H, 0:H] = fw2
    s[L.f3_r:L.f3_r + H, 0:H] = fw3
    # GRU input weight, phi_z rows
    s[L.wip_r:L.wip_r + H, 0:3 * R] = wih[X:X + H]
    # biases (one 8-row-aligned row each)
    s[L.b0_r, 0:H] = pb0[0];  s[L.b0_r, H:2 * H] = qb0[0]
    s[L.b1_r, 0:H] = pb1[0];  s[L.b1_r, H:2 * H] = qb1[0]
    s[L.b2_r, 0:H] = pb2[0];  s[L.b2_r, H:2 * H] = qb2[0]
    s[L.bg_r, 0:2 * Z] = pbg[0];  s[L.bg_r, 2 * Z:4 * Z] = qbg[0]
    s[L.fb0_r, 0:H] = fb0[0]
    s[L.fb1_r, 0:H] = fb1[0]
    s[L.fb2_r, 0:H] = fb2[0]
    s[L.fb3_r, 0:H] = fb3[0]
    s[L.bih_r, 0:3 * R] = bih[0]
    s[L.bhh_r, 0:3 * R] = bhh[0]
    return jnp.asarray(s)


# ---------------------------------------------------------------------------
# Pallas kernel: one grid step = TB VRNN timesteps.  Weights stay VMEM-resident.
# ---------------------------------------------------------------------------
def _vrnn_seq_kernel(L, TB, x_ref, eps_ref, h0_ref, w_ref, out_ref, h_scr):
    f32 = jnp.float32
    X, H, Z, R = L.x_dim, L.h_dim, L.z_dim, L.r_dim
    B = h_scr.shape[0]

    @pl.when(pl.program_id(0) == 0)
    def _():
        h_scr[...] = h0_ref[...]

    relu = lambda a: jnp.maximum(a, 0.0)
    softplus = lambda a: jnp.logaddexp(a, 0.0)
    mm = lambda a, w: jnp.dot(a, w, preferred_element_type=f32)

    # --- loop-invariant parameter loads hoisted out of the per-timestep loop ---
    W_h = w_ref[L.wh_r:L.wh_r + R, 0:L.ncol]
    W_x = w_ref[L.wx_r:L.wx_r + X, 0:L.ncol]
    W1 = w_ref[L.w1_r:L.w1_r + 2 * H, 0:2 * H]
    W2 = w_ref[L.w2_r:L.w2_r + 2 * H, 0:2 * H]
    Wg = w_ref[L.wg_r:L.wg_r + 2 * H, 0:4 * Z]
    F0 = w_ref[L.f0_r:L.f0_r + Z, 0:H]
    F1 = w_ref[L.f1_r:L.f1_r + H, 0:H]
    F2 = w_ref[L.f2_r:L.f2_r + H, 0:H]
    F3 = w_ref[L.f3_r:L.f3_r + H, 0:H]
    Wip = w_ref[L.wip_r:L.wip_r + H, 0:3 * R]
    b0 = w_ref[L.b0_r:L.b0_r + 1, 0:2 * H]
    b1 = w_ref[L.b1_r:L.b1_r + 1, 0:2 * H]
    b2 = w_ref[L.b2_r:L.b2_r + 1, 0:2 * H]
    bg = w_ref[L.bg_r:L.bg_r + 1, 0:4 * Z]
    fb0 = w_ref[L.fb0_r:L.fb0_r + 1, 0:H]
    fb1 = w_ref[L.fb1_r:L.fb1_r + 1, 0:H]
    fb2 = w_ref[L.fb2_r:L.fb2_r + 1, 0:H]
    fb3 = w_ref[L.fb3_r:L.fb3_r + 1, 0:H]
    bih = w_ref[L.bih_r:L.bih_r + 1, 0:3 * R]
    bhh = w_ref[L.bhh_r:L.bhh_r + 1, 0:3 * R]

    # lane mask selecting the sd columns of the fused Gaussian head output
    col = lax.broadcasted_iota(jnp.int32, (B, 4 * Z), 1)
    sd_mask = ((col >= Z) & (col < 2 * Z)) | (col >= 3 * Z)

    h = h_scr[...]   # (B, R): hidden state, carried across grid steps via scratch

    # --- fully-unrolled static timestep loop (TB steps per grid point) ---
    for t in range(TB):
        x = x_ref[t]       # (B, X)
        eps = eps_ref[t]   # (B, Z)

        # fused layer-0 + GRU matmuls (concat-free: split matmuls on block weights)
        HA = mm(h, W_h)    # (B, 2H+3R): [prior L0 | post L0 (h part) | GRU W_hh]
        XA = mm(x, W_x)    # (B, 2H+3R): [0        | post L0 (x part) | GRU W_ih(x)]

        t0 = relu(HA[:, 0:2 * H] + XA[:, 0:2 * H] + b0)   # [prior branch | post branch]
        gh = HA[:, 2 * H:L.ncol] + bhh                    # GRU hidden gates (r|z|n), h-only
        gi = XA[:, 2 * H:L.ncol] + bih                    # GRU input gates, x part

        # fused prior/posterior hidden layers + Gaussian heads (block-diagonal)
        t1 = relu(mm(t0, W1) + b1)
        t2 = relu(mm(t1, W2) + b2)
        g = mm(t2, Wg) + bg                               # [p_mu | p_raw | e_mu | e_raw]
        g = jnp.where(sd_mask, softplus(g), g)            # softplus on sd lanes only

        enc_mu = g[:, 2 * Z:3 * Z]
        enc_sd = g[:, 3 * Z:4 * Z]
        z = enc_mu + enc_sd * eps                         # rsample_gaussian

        # phi_z MLP
        f = relu(mm(z, F0) + fb0)
        f = relu(mm(f, F1) + fb1)
        f = relu(mm(f, F2) + fb2)
        phi_z = relu(mm(f, F3) + fb3)

        # GRU cell (PyTorch gate order r, z, n; one sigmoid over the r|z lanes)
        gi = gi + mm(phi_z, Wip)
        rz = jax.nn.sigmoid(gi[:, 0:2 * R] + gh[:, 0:2 * R])
        r_g = rz[:, 0:R]
        z_g = rz[:, R:2 * R]
        n_g = jnp.tanh(gi[:, 2 * R:3 * R] + r_g * gh[:, 2 * R:3 * R])
        h = (1.0 - z_g) * n_g + z_g * h

        # packed lane-dense output: [prior_mu|prior_sd|enc_mu|enc_sd | h | phi_z | z]
        # (pad lanes beyond 4Z+R+H+Z are never read by the wrapper)
        out_ref[t, :, 0:4 * Z] = g
        out_ref[t, :, 4 * Z:4 * Z + R] = h
        out_ref[t, :, 4 * Z + R:4 * Z + R + H] = phi_z
        out_ref[t, :, 4 * Z + R + H:4 * Z + R + H + Z] = z

    h_scr[...] = h   # single full store of the carried hidden state per grid step


# ---------------------------------------------------------------------------
# Wrappers
# ---------------------------------------------------------------------------
def vrnn_sequence_forward(x_seq, h0, eps_seq, flat_params, *,
                          x_dim, h_dim, z_dim, r_dim, timestep_block=8):
    """Run the VRNN cell over a whole sequence in ONE pallas_call (blocked grid over T)."""
    T, B, _ = x_seq.shape
    L = make_layout(x_dim, h_dim, z_dim, r_dim)
    TB = max(1, min(timestep_block, T))
    T_pad = _round_up(T, TB)

    w_slab = pack_param_slab(flat_params, L)
    x_pad = jnp.zeros((T_pad, B, x_dim), jnp.float32).at[:T].set(x_seq.astype(jnp.float32))
    eps_pad = jnp.zeros((T_pad, B, z_dim), jnp.float32).at[:T].set(eps_seq.astype(jnp.float32))
    h0_f = h0.astype(jnp.float32)

    # --- cost estimate + explicit VMEM budget (cheap scheduling hints) ---
    H, Z, R, X, ncol = h_dim, z_dim, r_dim, x_dim, L.ncol
    flops_step = 2 * B * (R * ncol + X * ncol + 2 * (2 * H) * (2 * H)
                          + (2 * H) * (4 * Z) + Z * H + 3 * H * H + H * 3 * R)
    trans_step = B * (8 * Z + 3 * R)
    bytes_accessed = 4 * (x_pad.size + eps_pad.size + h0_f.size + w_slab.size
                          + T_pad * B * L.out_w)
    cost = pl.CostEstimate(flops=int(flops_step * T_pad),
                           transcendentals=int(trans_step * T_pad),
                           bytes_accessed=int(bytes_accessed))
    vmem_bytes = 4 * (2 * TB * B * (x_dim + z_dim + L.out_w)   # double-buffered in/out blocks
                      + L.n_rows * L.slab_w                    # resident weight slab
                      + 2 * B * r_dim)                         # h0 + h scratch
    vmem_limit = int(max(2 * vmem_bytes, 16 * 1024 * 1024))

    kernel = functools.partial(_vrnn_seq_kernel, L, TB)
    out = pl.pallas_call(
        kernel,
        out_shape=jax.ShapeDtypeStruct((T_pad, B, L.out_w), jnp.float32),
        grid_spec=pltpu.PrefetchScalarGridSpec(
            num_scalar_prefetch=0,
            grid=(T_pad // TB,),
            in_specs=[
                pl.BlockSpec((TB, B, x_dim), lambda g: (g, 0, 0)),        # x block
                pl.BlockSpec((TB, B, z_dim), lambda g: (g, 0, 0)),        # eps block
                pl.BlockSpec((B, r_dim), lambda g: (0, 0)),               # h0 (loaded once)
                pl.BlockSpec((L.n_rows, L.slab_w), lambda g: (0, 0)),     # weights (resident)
            ],
            out_specs=pl.BlockSpec((TB, B, L.out_w), lambda g: (g, 0, 0)),
            scratch_shapes=[pltpu.VMEM((B, r_dim), jnp.float32)],         # carried hidden state
        ),
        compiler_params=pltpu.CompilerParams(
            dimension_semantics=("arbitrary",),
            vmem_limit_bytes=vmem_limit),
        cost_estimate=cost,
    )(x_pad, eps_pad, h0_f, w_slab)

    Z4 = 4 * z_dim
    prior_mu = out[:T, :, 0:z_dim]
    prior_sd = out[:T, :, z_dim:2 * z_dim]
    enc_mu = out[:T, :, 2 * z_dim:3 * z_dim]
    enc_sd = out[:T, :, 3 * z_dim:4 * z_dim]
    h_seq = out[:T, :, Z4:Z4 + r_dim]
    phi_z = out[:T, :, Z4 + r_dim:Z4 + r_dim + h_dim]
    z_seq = out[:T, :, Z4 + r_dim + h_dim:Z4 + r_dim + h_dim + z_dim]
    return h_seq, z_seq, enc_mu, enc_sd, prior_mu, prior_sd, phi_z


def vrnn_cell_forward(x, h, eps, flat_params, *, x_dim, h_dim, z_dim, r_dim):
    """Single-step forward, mirroring VRNNCell.forward (T=1 sequence)."""
    outs = vrnn_sequence_forward(x[None], h, eps[None], flat_params,
                                 x_dim=x_dim, h_dim=h_dim, z_dim=z_dim, r_dim=r_dim,
                                 timestep_block=1)
    return tuple(o[0] for o in outs)


# ---------------------------------------------------------------------------
# Deterministic parameter construction (mirrors VRNNCell.__init__ shapes)
# ---------------------------------------------------------------------------
def _linear_params(key, d_in, d_out):
    kw, kb = jax.random.split(key)
    bound = 1.0 / np.sqrt(d_in)
    w = jax.random.uniform(kw, (d_in, d_out), jnp.float32, -bound, bound)
    b = jax.random.uniform(kb, (1, d_out), jnp.float32, -bound, bound)
    return w, b


def make_params(key, x_dim, h_dim, z_dim, r_dim):
    keys = jax.random.split(key, 16)
    flat = []
    for i, (di, do) in enumerate([(r_dim, h_dim), (h_dim, h_dim), (h_dim, h_dim), (h_dim, 2 * z_dim)]):
        flat += list(_linear_params(keys[i], di, do))
    for i, (di, do) in enumerate([(x_dim + r_dim, h_dim), (h_dim, h_dim), (h_dim, h_dim), (h_dim, 2 * z_dim)]):
        flat += list(_linear_params(keys[4 + i], di, do))
    for i, (di, do) in enumerate([(z_dim, h_dim), (h_dim, h_dim), (h_dim, h_dim), (h_dim, h_dim)]):
        flat += list(_linear_params(keys[8 + i], di, do))
    gru_in = x_dim + h_dim
    bound = 1.0 / np.sqrt(r_dim)
    wih = jax.random.uniform(keys[12], (gru_in, 3 * r_dim), jnp.float32, -bound, bound)
    bih = jax.random.uniform(keys[13], (1, 3 * r_dim), jnp.float32, -bound, bound)
    whh = jax.nn.initializers.orthogonal()(keys[14], (3 * r_dim, r_dim), jnp.float32).T  # stored (r, 3r)
    bhh = jax.random.uniform(keys[15], (1, 3 * r_dim), jnp.float32, -bound, bound)
    flat += [wih, bih, whh, bhh]
    return flat


# ---------------------------------------------------------------------------
# Pure-JAX per-step reference (the original module math, un-fused)
# ---------------------------------------------------------------------------
def vrnn_reference_step(x, h, eps, p, *, z_dim, r_dim):
    def lin(a, w, b):
        return jnp.dot(a, w, precision=lax.Precision.HIGHEST) + b

    (pw0, pb0, pw1, pb1, pw2, pb2, pwg, pbg,
     qw0, qb0, qw1, qb1, qw2, qb2, qwg, qbg,
     fw0, fb0, fw1, fb1, fw2, fb2, fw3, fb3,
     wih, bih, whh, bhh) = p

    relu = lambda t: jnp.maximum(t, 0.0)
    sp = lambda t: jnp.logaddexp(t, 0.0)

    t = relu(lin(h, pw0, pb0)); t = relu(lin(t, pw1, pb1)); t = relu(lin(t, pw2, pb2))
    g = lin(t, pwg, pbg)
    prior_mu, prior_sd = g[:, :z_dim], sp(g[:, z_dim:])

    hx = jnp.concatenate([h, x], -1)
    t = relu(lin(hx, qw0, qb0)); t = relu(lin(t, qw1, qb1)); t = relu(lin(t, qw2, qb2))
    g = lin(t, qwg, qbg)
    enc_mu, enc_sd = g[:, :z_dim], sp(g[:, z_dim:])

    z = enc_mu + enc_sd * eps

    t = relu(lin(z, fw0, fb0)); t = relu(lin(t, fw1, fb1)); t = relu(lin(t, fw2, fb2))
    phi_z = relu(lin(t, fw3, fb3))

    xin = jnp.concatenate([x, phi_z], -1)
    gi = lin(xin, wih, bih)
    gh = lin(h, whh, bhh)
    r = jax.nn.sigmoid(gi[:, :r_dim] + gh[:, :r_dim])
    zg = jax.nn.sigmoid(gi[:, r_dim:2 * r_dim] + gh[:, r_dim:2 * r_dim])
    n = jnp.tanh(gi[:, 2 * r_dim:] + r * gh[:, 2 * r_dim:])
    h_new = (1.0 - zg) * n + zg * h
    return h_new, z, enc_mu, enc_sd, prior_mu, prior_sd, phi_z


# ---------------------------------------------------------------------------
if __name__ == "__main__":
    B, T = 8, 8
    x_dim, h_dim, z_dim = 16, 32, 16
    r_dim = 2 * h_dim  # default r_dim = 2*h_dim

    key = jax.random.PRNGKey(0)
    kx, kh, keps, kp = jax.random.split(key, 4)
    x_seq = jax.random.normal(kx, (T, B, x_dim), jnp.float32)
    h0 = jax.random.normal(kh, (B, r_dim), jnp.float32)
    eps_seq = jax.random.normal(keps, (T, B, z_dim), jnp.float32)  # rsample noise
    params = make_params(kp, x_dim, h_dim, z_dim, r_dim)

    # --- sequence kernel (recurrence inside the kernel, TB=4 so the grid carry is exercised) ---
    outs = vrnn_sequence_forward(x_seq, h0, eps_seq, params,
                                 x_dim=x_dim, h_dim=h_dim, z_dim=z_dim, r_dim=r_dim,
                                 timestep_block=4)
    outs = jax.block_until_ready(outs)

    # --- pure-JAX reference: unrolled per-step loop of the original module math ---
    refs, h = [], h0
    for t in range(T):
        step = vrnn_reference_step(x_seq[t], h, eps_seq[t], params, z_dim=z_dim, r_dim=r_dim)
        refs.append(step)
        h = step[0]
    refs = tuple(jnp.stack([s[i] for s in refs], axis=0) for i in range(7))

    # Tolerance 2e-3 is intentional: kernel matmuls use the TPU's default f32 MXU
    # passes while the reference pins lax.Precision.HIGHEST.
    for got, want in zip(outs, refs):
        np.testing.assert_allclose(np.asarray(got), np.asarray(want), rtol=2e-3, atol=2e-3)

    # --- single-step entry point (mirrors VRNNCell.forward) ---
    step_outs = vrnn_cell_forward(x_seq[0], h0, eps_seq[0], params,
                                  x_dim=x_dim, h_dim=h_dim, z_dim=z_dim, r_dim=r_dim)
    step_outs = jax.block_until_ready(step_outs)
    for got, want in zip(step_outs, refs):
        np.testing.assert_allclose(np.asarray(got), np.asarray(want[0]), rtol=2e-3, atol=2e-3)

    print("KERNEL_OK")
</pallas_src>

<mosaic_0001>
module attributes {stable_mosaic.version = 11 : i64} {
  func.func @_vrnn_seq_kernel(%arg0: i32, %arg1: memref<4x8x16xf32, #tpu.memory_space<vmem>>, %arg2: memref<4x8x16xf32, #tpu.memory_space<vmem>>, %arg3: memref<8x64xf32, #tpu.memory_space<vmem>>, %arg4: memref<496x256xf32, #tpu.memory_space<vmem>>, %arg5: memref<4x8x256xf32, #tpu.memory_space<vmem>>, %arg6: memref<8x64xf32, #tpu.memory_space<vmem>>) attributes {dimension_semantics = [#tpu.dimension_semantics<arbitrary>], iteration_bounds = array<i64: 2>, scalar_prefetch = 0 : i64, scratch_operands = 1 : i64, tpu.core_type = #tpu.core_type<tc>, window_params = [{transform_indices = @transform_0, window_bounds = array<i64: 4, 8, 16>}, {transform_indices = @transform_1, window_bounds = array<i64: 4, 8, 16>}, {pipeline_mode = #tpu.pipeline_mode<synchronous>, transform_indices = @transform_2, window_bounds = array<i64: 8, 64>}, {pipeline_mode = #tpu.pipeline_mode<synchronous>, transform_indices = @transform_3, window_bounds = array<i64: 496, 256>}, {transform_indices = @transform_4, window_bounds = array<i64: 4, 8, 256>}]} {
    %c0_i32 = arith.constant 0 : i32
    %0 = arith.cmpi eq, %arg0, %c0_i32 : i32
    %1 = arith.extui %0 : i1 to i32
    %c0_i32_0 = arith.constant 0 : i32
    %2 = arith.cmpi ne, %1, %c0_i32_0 : i32
    scf.if %2 {
      %c0_175 = arith.constant 0 : index
      %c0_176 = arith.constant 0 : index
      %454 = vector.load %arg3[%c0_175, %c0_176] : memref<8x64xf32, #tpu.memory_space<vmem>>, vector<8x64xf32>
      %c0_177 = arith.constant 0 : index
      %c0_178 = arith.constant 0 : index
      %455 = vector.load %arg6[%c0_177, %c0_178] : memref<8x64xf32, #tpu.memory_space<vmem>>, vector<8x64xf32>
      tpu.vector_store %arg6[%c0_177, %c0_178], %454 {strides = array<i32>} : memref<8x64xf32, #tpu.memory_space<vmem>>, vector<8x64xf32>,
    } else {
    }
    %c0 = arith.constant 0 : index
    %c0_1 = arith.constant 0 : index
    %3 = vector.load %arg4[%c0, %c0_1] : memref<496x256xf32, #tpu.memory_space<vmem>>, vector<64x256xf32>
    %c64 = arith.constant 64 : index
    %c0_2 = arith.constant 0 : index
    %4 = vector.load %arg4[%c64, %c0_2] : memref<496x256xf32, #tpu.memory_space<vmem>>, vector<16x256xf32>
    %c80 = arith.constant 80 : index
    %c0_3 = arith.constant 0 : index
    %5 = vector.load %arg4[%c80, %c0_3] : memref<496x256xf32, #tpu.memory_space<vmem>>, vector<64x64xf32>
    %c144 = arith.constant 144 : index
    %c0_4 = arith.constant 0 : index
    %6 = vector.load %arg4[%c144, %c0_4] : memref<496x256xf32, #tpu.memory_space<vmem>>, vector<64x64xf32>
    %c208 = arith.constant 208 : index
    %c0_5 = arith.constant 0 : index
    %7 = vector.load %arg4[%c208, %c0_5] : memref<496x256xf32, #tpu.memory_space<vmem>>, vector<64x64xf32>
    %c272 = arith.constant 272 : index
    %c0_6 = arith.constant 0 : index
    %8 = vector.load %arg4[%c272, %c0_6] : memref<496x256xf32, #tpu.memory_space<vmem>>, vector<16x32xf32>
    %c288 = arith.constant 288 : index
    %c0_7 = arith.constant 0 : index
    %9 = vector.load %arg4[%c288, %c0_7] : memref<496x256xf32, #tpu.memory_space<vmem>>, vector<32x32xf32>
    %c320 = arith.constant 320 : index
    %c0_8 = arith.constant 0 : index
    %10 = vector.load %arg4[%c320, %c0_8] : memref<496x256xf32, #tpu.memory_space<vmem>>, vector<32x32xf32>
    %c352 = arith.constant 352 : index
    %c0_9 = arith.constant 0 : index
    %11 = vector.load %arg4[%c352, %c0_9] : memref<496x256xf32, #tpu.memory_space<vmem>>, vector<32x32xf32>
    %c384 = arith.constant 384 : index
    %c0_10 = arith.constant 0 : index
    %12 = vector.load %arg4[%c384, %c0_10] : memref<496x256xf32, #tpu.memory_space<vmem>>, vector<32x192xf32>
    %c416 = arith.constant 416 : index
    %c0_11 = arith.constant 0 : index
    %13 = vector.load %arg4[%c416, %c0_11] : memref<496x256xf32, #tpu.memory_space<vmem>>, vector<1x64xf32>
    %c424 = arith.constant 424 : index
    %c0_12 = arith.constant 0 : index
    %14 = vector.load %arg4[%c424, %c0_12] : memref<496x256xf32, #tpu.memory_space<vmem>>, vector<1x64xf32>
    %c432 = arith.constant 432 : index
    %c0_13 = arith.constant 0 : index
    %15 = vector.load %arg4[%c432, %c0_13] : memref<496x256xf32, #tpu.memory_space<vmem>>, vector<1x64xf32>
    %c440 = arith.constant 440 : index
    %c0_14 = arith.constant 0 : index
    %16 = vector.load %arg4[%c440, %c0_14] : memref<496x256xf32, #tpu.memory_space<vmem>>, vector<1x64xf32>
    %c448 = arith.constant 448 : index
    %c0_15 = arith.constant 0 : index
    %17 = vector.load %arg4[%c448, %c0_15] : memref<496x256xf32, #tpu.memory_space<vmem>>, vector<1x32xf32>
    %c456 = arith.constant 456 : index
    %c0_16 = arith.constant 0 : index
    %18 = vector.load %arg4[%c456, %c0_16] : memref<496x256xf32, #tpu.memory_space<vmem>>, vector<1x32xf32>
    %c464 = arith.constant 464 : index
    %c0_17 = arith.constant 0 : index
    %19 = vector.load %arg4[%c464, %c0_17] : memref<496x256xf32, #tpu.memory_space<vmem>>, vector<1x32xf32>
    %c472 = arith.constant 472 : index
    %c0_18 = arith.constant 0 : index
    %20 = vector.load %arg4[%c472, %c0_18] : memref<496x256xf32, #tpu.memory_space<vmem>>, vector<1x32xf32>
    %c480 = arith.constant 480 : index
    %c0_19 = arith.constant 0 : index
    %21 = vector.load %arg4[%c480, %c0_19] : memref<496x256xf32, #tpu.memory_space<vmem>>, vector<1x192xf32>
    %c488 = arith.constant 488 : index
    %c0_20 = arith.constant 0 : index
    %22 = vector.load %arg4[%c488, %c0_20] : memref<496x256xf32, #tpu.memory_space<vmem>>, vector<1x192xf32>
    %23 = tpu.iota {dimensions = array<i32: 1>} : vector<8x64xi32>
    %c16_i32 = arith.constant 16 : i32
    %24 = vector.broadcast %c16_i32 : i32 to vector<8x64xi32>
    %25 = arith.cmpi sge, %23, %24 : vector<8x64xi32>
    %c32_i32 = arith.constant 32 : i32
    %26 = vector.broadcast %c32_i32 : i32 to vector<8x64xi32>
    %27 = arith.cmpi slt, %23, %26 : vector<8x64xi32>
    %28 = arith.andi %25, %27 : vector<8x64xi1>
    %c48_i32 = arith.constant 48 : i32
    %29 = vector.broadcast %c48_i32 : i32 to vector<8x64xi32>
    %30 = arith.cmpi sge, %23, %29 : vector<8x64xi32>
    %31 = arith.ori %28, %30 : vector<8x64xi1>
    %c0_21 = arith.constant 0 : index
    %c0_22 = arith.constant 0 : index
    %32 = vector.load %arg6[%c0_21, %c0_22] : memref<8x64xf32, #tpu.memory_space<vmem>>, vector<8x64xf32>
    %c0_23 = arith.constant 0 : index
    %c0_24 = arith.constant 0 : index
    %c0_25 = arith.constant 0 : index
    %33 = vector.load %arg1[%c0_23, %c0_24, %c0_25] : memref<4x8x16xf32, #tpu.memory_space<vmem>>, vector<1x8x16xf32>
    %34 = vector.shape_cast %33 : vector<1x8x16xf32> to vector<8x16xf32>
    %c0_26 = arith.constant 0 : index
    %c0_27 = arith.constant 0 : index
    %c0_28 = arith.constant 0 : index
    %35 = vector.load %arg2[%c0_26, %c0_27, %c0_28] : memref<4x8x16xf32, #tpu.memory_space<vmem>>, vector<1x8x16xf32>
    %36 = vector.shape_cast %35 : vector<1x8x16xf32> to vector<8x16xf32>
    %cst = arith.constant dense<0.000000e+00> : vector<8x256xf32>
    %37 = tpu.matmul %32, %3, %cst {dimension_numbers = #tpu.dot_dimension_numbers<[1], [0], [0], [1], [0, 0, 1, 1], [], []>} : vector<8x64xf32>, vector<64x256xf32>, vector<8x256xf32> -> vector<8x256xf32>
    %cst_29 = arith.constant dense<0.000000e+00> : vector<8x256xf32>
    %38 = tpu.matmul %34, %4, %cst_29 {dimension_numbers = #tpu.dot_dimension_numbers<[1], [0], [0], [1], [0, 0, 1, 1], [], []>} : vector<8x16xf32>, vector<16x256xf32>, vector<8x256xf32> -> vector<8x256xf32>
    %39 = vector.extract_strided_slice %37 {offsets = [0, 0], sizes = [8, 64], strides = [1, 1]} : vector<8x256xf32> to vector<8x64xf32>
    %40 = vector.extract_strided_slice %38 {offsets = [0, 0], sizes = [8, 64], strides = [1, 1]} : vector<8x256xf32> to vector<8x64xf32>
    %41 = arith.addf %39, %40 : vector<8x64xf32>
    %42 = vector.broadcast %13 : vector<1x64xf32> to vector<8x64xf32>
    %43 = arith.addf %41, %42 : vector<8x64xf32>
    %cst_30 = arith.constant 0.000000e+00 : f32
    %44 = vector.broadcast %cst_30 : f32 to vector<8x64xf32>
    %45 = arith.maximumf %43, %44 : vector<8x64xf32>
    %46 = vector.extract_strided_slice %37 {offsets = [0, 64], sizes = [8, 192], strides = [1, 1]} : vector<8x256xf32> to vector<8x192xf32>
    %47 = vector.broadcast %22 : vector<1x192xf32> to vector<8x192xf32>
    %48 = arith.addf %46, %47 : vector<8x192xf32>
    %49 = vector.extract_strided_slice %38 {offsets = [0, 64], sizes = [8, 192], strides = [1, 1]} : vector<8x256xf32> to vector<8x192xf32>
    %50 = vector.broadcast %21 : vector<1x192xf32> to vector<8x192xf32>
    %51 = arith.addf %49, %50 : vector<8x192xf32>
    %cst_31 = arith.constant dense<0.000000e+00> : vector<8x64xf32>
    %52 = tpu.matmul %45, %5, %cst_31 {dimension_numbers = #tpu.dot_dimension_numbers<[1], [0], [0], [1], [0, 0, 1, 1], [], []>} : vector<8x64xf32>, vector<64x64xf32>, vector<8x64xf32> -> vector<8x64xf32>
    %53 = vector.broadcast %14 : vector<1x64xf32> to vector<8x64xf32>
    %54 = arith.addf %52, %53 : vector<8x64xf32>
    %cst_32 = arith.constant 0.000000e+00 : f32
    %55 = vector.broadcast %cst_32 : f32 to vector<8x64xf32>
    %56 = arith.maximumf %54, %55 : vector<8x64xf32>
    %cst_33 = arith.constant dense<0.000000e+00> : vector<8x64xf32>
    %57 = tpu.matmul %56, %6, %cst_33 {dimension_numbers = #tpu.dot_dimension_numbers<[1], [0], [0], [1], [0, 0, 1, 1], [], []>} : vector<8x64xf32>, vector<64x64xf32>, vector<8x64xf32> -> vector<8x64xf32>
    %58 = vector.broadcast %15 : vector<1x64xf32> to vector<8x64xf32>
    %59 = arith.addf %57, %58 : vector<8x64xf32>
    %cst_34 = arith.constant 0.000000e+00 : f32
    %60 = vector.broadcast %cst_34 : f32 to vector<8x64xf32>
    %61 = arith.maximumf %59, %60 : vector<8x64xf32>
    %cst_35 = arith.constant dense<0.000000e+00> : vector<8x64xf32>
    %62 = tpu.matmul %61, %7, %cst_35 {dimension_numbers = #tpu.dot_dimension_numbers<[1], [0], [0], [1], [0, 0, 1, 1], [], []>} : vector<8x64xf32>, vector<64x64xf32>, vector<8x64xf32> -> vector<8x64xf32>
    %63 = vector.broadcast %16 : vector<1x64xf32> to vector<8x64xf32>
    %64 = arith.addf %62, %63 : vector<8x64xf32>
    %cst_36 = arith.constant 0.000000e+00 : f32
    %65 = vector.broadcast %cst_36 : f32 to vector<8x64xf32>
    %66 = arith.maximumf %64, %65 : vector<8x64xf32>
    %67 = vector.broadcast %cst_36 : f32 to vector<8x64xf32>
    %68 = arith.subf %64, %67 : vector<8x64xf32>
    %69 = arith.cmpf one, %68, %68 : vector<8x64xf32>
    %70 = vector.broadcast %cst_36 : f32 to vector<8x64xf32>
    %71 = arith.addf %64, %70 : vector<8x64xf32>
    %72 = math.absf %68 : vector<8x64xf32>
    %cst_37 = arith.constant 0.000000e+00 : f32
    %73 = vector.broadcast %cst_37 : f32 to vector<8x64xf32>
    %74 = arith.subf %73, %72 : vector<8x64xf32>
    %75 = math.exp %74 : vector<8x64xf32>
    %76 = math.log1p %75 : vector<8x64xf32>
    %77 = arith.addf %66, %76 : vector<8x64xf32>
    %78 = arith.select %69, %71, %77 : vector<8x64xi1>, vector<8x64xf32>
    %79 = arith.select %31, %78, %64 : vector<8x64xi1>, vector<8x64xf32>
    %80 = vector.extract_strided_slice %79 {offsets = [0, 32], sizes = [8, 16], strides = [1, 1]} : vector<8x64xf32> to vector<8x16xf32>
    %81 = vector.extract_strided_slice %79 {offsets = [0, 48], sizes = [8, 16], strides = [1, 1]} : vector<8x64xf32> to vector<8x16xf32>
    %82 = arith.mulf %81, %36 : vector<8x16xf32>
    %83 = arith.addf %80, %82 : vector<8x16xf32>
    %cst_38 = arith.constant dense<0.000000e+00> : vector<8x32xf32>
    %84 = tpu.matmul %83, %8, %cst_38 {dimension_numbers = #tpu.dot_dimension_numbers<[1], [0], [0], [1], [0, 0, 1, 1], [], []>} : vector<8x16xf32>, vector<16x32xf32>, vector<8x32xf32> -> vector<8x32xf32>
    %85 = vector.broadcast %17 : vector<1x32xf32> to vector<8x32xf32>
    %86 = arith.addf %84, %85 : vector<8x32xf32>
    %cst_39 = arith.constant 0.000000e+00 : f32
    %87 = vector.broadcast %cst_39 : f32 to vector<8x32xf32>
    %88 = arith.maximumf %86, %87 : vector<8x32xf32>
    %cst_40 = arith.constant dense<0.000000e+00> : vector<8x32xf32>
    %89 = tpu.matmul %88, %9, %cst_40 {dimension_numbers = #tpu.dot_dimension_numbers<[1], [0], [0], [1], [0, 0, 1, 1], [], []>} : vector<8x32xf32>, vector<32x32xf32>, vector<8x32xf32> -> vector<8x32xf32>
    %90 = vector.broadcast %18 : vector<1x32xf32> to vector<8x32xf32>
    %91 = arith.addf %89, %90 : vector<8x32xf32>
    %cst_41 = arith.constant 0.000000e+00 : f32
    %92 = vector.broadcast %cst_41 : f32 to vector<8x32xf32>
    %93 = arith.maximumf %91, %92 : vector<8x32xf32>
    %cst_42 = arith.constant dense<0.000000e+00> : vector<8x32xf32>
    %94 = tpu.matmul %93, %10, %cst_42 {dimension_numbers = #tpu.dot_dimension_numbers<[1], [0], [0], [1], [0, 0, 1, 1], [], []>} : vector<8x32xf32>, vector<32x32xf32>, vector<8x32xf32> -> vector<8x32xf32>
    %95 = vector.broadcast %19 : vector<1x32xf32> to vector<8x32xf32>
    %96 = arith.addf %94, %95 : vector<8x32xf32>
    %cst_43 = arith.constant 0.000000e+00 : f32
    %97 = vector.broadcast %cst_43 : f32 to vector<8x32xf32>
    %98 = arith.maximumf %96, %97 : vector<8x32xf32>
    %cst_44 = arith.constant dense<0.000000e+00> : vector<8x32xf32>
    %99 = tpu.matmul %98, %11, %cst_44 {dimension_numbers = #tpu.dot_dimension_numbers<[1], [0], [0], [1], [0, 0, 1, 1], [], []>} : vector<8x32xf32>, vector<32x32xf32>, vector<8x32xf32> -> vector<8x32xf32>
    %100 = vector.broadcast %20 : vector<1x32xf32> to vector<8x32xf32>
    %101 = arith.addf %99, %100 : vector<8x32xf32>
    %cst_45 = arith.constant 0.000000e+00 : f32
    %102 = vector.broadcast %cst_45 : f32 to vector<8x32xf32>
    %103 = arith.maximumf %101, %102 : vector<8x32xf32>
    %cst_46 = arith.constant dense<0.000000e+00> : vector<8x192xf32>
    %104 = tpu.matmul %103, %12, %cst_46 {dimension_numbers = #tpu.dot_dimension_numbers<[1], [0], [0], [1], [0, 0, 1, 1], [], []>} : vector<8x32xf32>, vector<32x192xf32>, vector<8x192xf32> -> vector<8x192xf32>
    %105 = arith.addf %51, %104 : vector<8x192xf32>
    %106 = vector.extract_strided_slice %105 {offsets = [0, 0], sizes = [8, 128], strides = [1, 1]} : vector<8x192xf32> to vector<8x128xf32>
    %107 = vector.extract_strided_slice %48 {offsets = [0, 0], sizes = [8, 128], strides = [1, 1]} : vector<8x192xf32> to vector<8x128xf32>
    %108 = arith.addf %106, %107 : vector<8x128xf32>
    %109 = arith.negf %108 : vector<8x128xf32>
    %110 = math.exp %109 : vector<8x128xf32>
    %cst_47 = arith.constant 1.000000e+00 : f32
    %111 = vector.broadcast %cst_47 : f32 to vector<8x128xf32>
    %112 = arith.addf %111, %110 : vector<8x128xf32>
    %113 = arith.divf %111, %112 : vector<8x128xf32>
    %114 = vector.extract_strided_slice %113 {offsets = [0, 0], sizes = [8, 64], strides = [1, 1]} : vector<8x128xf32> to vector<8x64xf32>
    %115 = vector.extract_strided_slice %113 {offsets = [0, 64], sizes = [8, 64], strides = [1, 1]} : vector<8x128xf32> to vector<8x64xf32>
    %116 = vector.extract_strided_slice %105 {offsets = [0, 128], sizes = [8, 64], strides = [1, 1]} : vector<8x192xf32> to vector<8x64xf32>
    %117 = vector.extract_strided_slice %48 {offsets = [0, 128], sizes = [8, 64], strides = [1, 1]} : vector<8x192xf32> to vector<8x64xf32>
    %118 = arith.mulf %114, %117 : vector<8x64xf32>
    %119 = arith.addf %116, %118 : vector<8x64xf32>
    %120 = math.tanh %119 : vector<8x64xf32>
    %cst_48 = arith.constant 1.000000e+00 : f32
    %121 = vector.broadcast %cst_48 : f32 to vector<8x64xf32>
    %122 = arith.subf %121, %115 : vector<8x64xf32>
    %123 = arith.mulf %122, %120 : vector<8x64xf32>
    %124 = arith.mulf %115, %32 : vector<8x64xf32>
    %125 = arith.addf %123, %124 : vector<8x64xf32>
    %c0_49 = arith.constant 0 : index
    %c0_50 = arith.constant 0 : index
    %c0_51 = arith.constant 0 : index
    %126 = vector.load %arg5[%c0_49, %c0_50, %c0_51] : memref<4x8x256xf32, #tpu.memory_space<vmem>>, vector<1x8x64xf32>
    %127 = vector.shape_cast %126 : vector<1x8x64xf32> to vector<8x64xf32>
    %128 = vector.shape_cast %79 : vector<8x64xf32> to vector<1x8x64xf32>
    tpu.vector_store %arg5[%c0_49, %c0_50, %c0_51], %128 {strides = array<i32>} : memref<4x8x256xf32, #tpu.memory_space<vmem>>, vector<1x8x64xf32>,
    %c0_52 = arith.constant 0 : index
    %c0_53 = arith.constant 0 : index
    %c64_54 = arith.constant 64 : index
    %129 = vector.load %arg5[%c0_52, %c0_53, %c64_54] : memref<4x8x256xf32, #tpu.memory_space<vmem>>, vector<1x8x64xf32>
    %130 = vector.shape_cast %129 : vector<1x8x64xf32> to vector<8x64xf32>
    %131 = vector.shape_cast %125 : vector<8x64xf32> to vector<1x8x64xf32>
    tpu.vector_store %arg5[%c0_52, %c0_53, %c64_54], %131 {strides = array<i32>} : memref<4x8x256xf32, #tpu.memory_space<vmem>>, vector<1x8x64xf32>,
    %c0_55 = arith.constant 0 : index
    %c0_56 = arith.constant 0 : index
    %c128 = arith.constant 128 : index
    %132 = vector.load %arg5[%c0_55, %c0_56, %c128] : memref<4x8x256xf32, #tpu.memory_space<vmem>>, vector<1x8x32xf32>
    %133 = vector.shape_cast %132 : vector<1x8x32xf32> to vector<8x32xf32>
    %134 = vector.shape_cast %103 : vector<8x32xf32> to vector<1x8x32xf32>
    tpu.vector_store %arg5[%c0_55, %c0_56, %c128], %134 {strides = array<i32>} : memref<4x8x256xf32, #tpu.memory_space<vmem>>, vector<1x8x32xf32>,
    %c0_57 = arith.constant 0 : index
    %c0_58 = arith.constant 0 : index
    %c160 = arith.constant 160 : index
    %135 = vector.load %arg5[%c0_57, %c0_58, %c160] : memref<4x8x256xf32, #tpu.memory_space<vmem>>, vector<1x8x16xf32>
    %136 = vector.shape_cast %135 : vector<1x8x16xf32> to vector<8x16xf32>
    %137 = vector.shape_cast %83 : vector<8x16xf32> to vector<1x8x16xf32>
    tpu.vector_store %arg5[%c0_57, %c0_58, %c160], %137 {strides = array<i32>} : memref<4x8x256xf32, #tpu.memory_space<vmem>>, vector<1x8x16xf32>,
    %c1 = arith.constant 1 : index
    %c0_59 = arith.constant 0 : index
    %c0_60 = arith.constant 0 : index
    %138 = vector.load %arg1[%c1, %c0_59, %c0_60] : memref<4x8x16xf32, #tpu.memory_space<vmem>>, vector<1x8x16xf32>
    %139 = vector.shape_cast %138 : vector<1x8x16xf32> to vector<8x16xf32>
    %c1_61 = arith.constant 1 : index
    %c0_62 = arith.constant 0 : index
    %c0_63 = arith.constant 0 : index
    %140 = vector.load %arg2[%c1_61, %c0_62, %c0_63] : memref<4x8x16xf32, #tpu.memory_space<vmem>>, vector<1x8x16xf32>
    %141 = vector.shape_cast %140 : vector<1x8x16xf32> to vector<8x16xf32>
    %cst_64 = arith.constant dense<0.000000e+00> : vector<8x256xf32>
    %142 = tpu.matmul %125, %3, %cst_64 {dimension_numbers = #tpu.dot_dimension_numbers<[1], [0], [0], [1], [0, 0, 1, 1], [], []>} : vector<8x64xf32>, vector<64x256xf32>, vector<8x256xf32> -> vector<8x256xf32>
    %cst_65 = arith.constant dense<0.000000e+00> : vector<8x256xf32>
    %143 = tpu.matmul %139, %4, %cst_65 {dimension_numbers = #tpu.dot_dimension_numbers<[1], [0], [0], [1], [0, 0, 1, 1], [], []>} : vector<8x16xf32>, vector<16x256xf32>, vector<8x256xf32> -> vector<8x256xf32>
    %144 = vector.extract_strided_slice %142 {offsets = [0, 0], sizes = [8, 64], strides = [1, 1]} : vector<8x256xf32> to vector<8x64xf32>
    %145 = vector.extract_strided_slice %143 {offsets = [0, 0], sizes = [8, 64], strides = [1, 1]} : vector<8x256xf32> to vector<8x64xf32>
    %146 = arith.addf %144, %145 : vector<8x64xf32>
    %147 = vector.broadcast %13 : vector<1x64xf32> to vector<8x64xf32>
    %148 = arith.addf %146, %147 : vector<8x64xf32>
    %cst_66 = arith.constant 0.000000e+00 : f32
    %149 = vector.broadcast %cst_66 : f32 to vector<8x64xf32>
    %150 = arith.maximumf %148, %149 : vector<8x64xf32>
    %151 = vector.extract_strided_slice %142 {offsets = [0, 64], sizes = [8, 192], strides = [1, 1]} : vector<8x256xf32> to vector<8x192xf32>
    %152 = vector.broadcast %22 : vector<1x192xf32> to vector<8x192xf32>
    %153 = arith.addf %151, %152 : vector<8x192xf32>
    %154 = vector.extract_strided_slice %143 {offsets = [0, 64], sizes = [8, 192], strides = [1, 1]} : vector<8x256xf32> to vector<8x192xf32>
    %155 = vector.broadcast %21 : vector<1x192xf32> to vector<8x192xf32>
    %156 = arith.addf %154, %155 : vector<8x192xf32>
    %cst_67 = arith.constant dense<0.000000e+00> : vector<8x64xf32>
    %157 = tpu.matmul %150, %5, %cst_67 {dimension_numbers = #tpu.dot_dimension_numbers<[1], [0], [0], [1], [0, 0, 1, 1], [], []>} : vector<8x64xf32>, vector<64x64xf32>, vector<8x64xf32> -> vector<8x64xf32>
    %158 = vector.broadcast %14 : vector<1x64xf32> to vector<8x64xf32>
    %159 = arith.addf %157, %158 : vector<8x64xf32>
    %cst_68 = arith.constant 0.000000e+00 : f32
    %160 = vector.broadcast %cst_68 : f32 to vector<8x64xf32>
    %161 = arith.maximumf %159, %160 : vector<8x64xf32>
    %cst_69 = arith.constant dense<0.000000e+00> : vector<8x64xf32>
    %162 = tpu.matmul %161, %6, %cst_69 {dimension_numbers = #tpu.dot_dimension_numbers<[1], [0], [0], [1], [0, 0, 1, 1], [], []>} : vector<8x64xf32>, vector<64x64xf32>, vector<8x64xf32> -> vector<8x64xf32>
    %163 = vector.broadcast %15 : vector<1x64xf32> to vector<8x64xf32>
    %164 = arith.addf %162, %163 : vector<8x64xf32>
    %cst_70 = arith.constant 0.000000e+00 : f32
    %165 = vector.broadcast %cst_70 : f32 to vector<8x64xf32>
    %166 = arith.maximumf %164, %165 : vector<8x64xf32>
    %cst_71 = arith.constant dense<0.000000e+00> : vector<8x64xf32>
    %167 = tpu.matmul %166, %7, %cst_71 {dimension_numbers = #tpu.dot_dimension_numbers<[1], [0], [0], [1], [0, 0, 1, 1], [], []>} : vector<8x64xf32>, vector<64x64xf32>, vector<8x64xf32> -> vector<8x64xf32>
    %168 = vector.broadcast %16 : vector<1x64xf32> to vector<8x64xf32>
    %169 = arith.addf %167, %168 : vector<8x64xf32>
    %cst_72 = arith.constant 0.000000e+00 : f32
    %170 = vector.broadcast %cst_72 : f32 to vector<8x64xf32>
    %171 = arith.maximumf %169, %170 : vector<8x64xf32>
    %172 = vector.broadcast %cst_72 : f32 to vector<8x64xf32>
    %173 = arith.subf %169, %172 : vector<8x64xf32>
    %174 = arith.cmpf one, %173, %173 : vector<8x64xf32>
    %175 = vector.broadcast %cst_72 : f32 to vector<8x64xf32>
    %176 = arith.addf %169, %175 : vector<8x64xf32>
    %177 = math.absf %173 : vector<8x64xf32>
    %cst_73 = arith.constant 0.000000e+00 : f32
    %178 = vector.broadcast %cst_73 : f32 to vector<8x64xf32>
    %179 = arith.subf %178, %177 : vector<8x64xf32>
    %180 = math.exp %179 : vector<8x64xf32>
    %181 = math.log1p %180 : vector<8x64xf32>
    %182 = arith.addf %171, %181 : vector<8x64xf32>
    %183 = arith.select %174, %176, %182 : vector<8x64xi1>, vector<8x64xf32>
    %184 = arith.select %31, %183, %169 : vector<8x64xi1>, vector<8x64xf32>
    %185 = vector.extract_strided_slice %184 {offsets = [0, 32], sizes = [8, 16], strides = [1, 1]} : vector<8x64xf32> to vector<8x16xf32>
    %186 = vector.extract_strided_slice %184 {offsets = [0, 48], sizes = [8, 16], strides = [1, 1]} : vector<8x64xf32> to vector<8x16xf32>
    %187 = arith.mulf %186, %141 : vector<8x16xf32>
    %188 = arith.addf %185, %187 : vector<8x16xf32>
    %cst_74 = arith.constant dense<0.000000e+00> : vector<8x32xf32>
    %189 = tpu.matmul %188, %8, %cst_74 {dimension_numbers = #tpu.dot_dimension_numbers<[1], [0], [0], [1], [0, 0, 1, 1], [], []>} : vector<8x16xf32>, vector<16x32xf32>, vector<8x32xf32> -> vector<8x32xf32>
    %190 = vector.broadcast %17 : vector<1x32xf32> to vector<8x32xf32>
    %191 = arith.addf %189, %190 : vector<8x32xf32>
    %cst_75 = arith.constant 0.000000e+00 : f32
    %192 = vector.broadcast %cst_75 : f32 to vector<8x32xf32>
    %193 = arith.maximumf %191, %192 : vector<8x32xf32>
    %cst_76 = arith.constant dense<0.000000e+00> : vector<8x32xf32>
    %194 = tpu.matmul %193, %9, %cst_76 {dimension_numbers = #tpu.dot_dimension_numbers<[1], [0], [0], [1], [0, 0, 1, 1], [], []>} : vector<8x32xf32>, vector<32x32xf32>, vector<8x32xf32> -> vector<8x32xf32>
    %195 = vector.broadcast %18 : vector<1x32xf32> to vector<8x32xf32>
    %196 = arith.addf %194, %195 : vector<8x32xf32>
    %cst_77 = arith.constant 0.000000e+00 : f32
    %197 = vector.broadcast %cst_77 : f32 to vector<8x32xf32>
    %198 = arith.maximumf %196, %197 : vector<8x32xf32>
    %cst_78 = arith.constant dense<0.000000e+00> : vector<8x32xf32>
    %199 = tpu.matmul %198, %10, %cst_78 {dimension_numbers = #tpu.dot_dimension_numbers<[1], [0], [0], [1], [0, 0, 1, 1], [], []>} : vector<8x32xf32>, vector<32x32xf32>, vector<8x32xf32> -> vector<8x32xf32>
    %200 = vector.broadcast %19 : vector<1x32xf32> to vector<8x32xf32>
    %201 = arith.addf %199, %200 : vector<8x32xf32>
    %cst_79 = arith.constant 0.000000e+00 : f32
    %202 = vector.broadcast %cst_79 : f32 to vector<8x32xf32>
    %203 = arith.maximumf %201, %202 : vector<8x32xf32>
    %cst_80 = arith.constant dense<0.000000e+00> : vector<8x32xf32>
    %204 = tpu.matmul %203, %11, %cst_80 {dimension_numbers = #tpu.dot_dimension_numbers<[1], [0], [0], [1], [0, 0, 1, 1], [], []>} : vector<8x32xf32>, vector<32x32xf32>, vector<8x32xf32> -> vector<8x32xf32>
    %205 = vector.broadcast %20 : vector<1x32xf32> to vector<8x32xf32>
    %206 = arith.addf %204, %205 : vector<8x32xf32>
    %cst_81 = arith.constant 0.000000e+00 : f32
    %207 = vector.broadcast %cst_81 : f32 to vector<8x32xf32>
    %208 = arith.maximumf %206, %207 : vector<8x32xf32>
    %cst_82 = arith.constant dense<0.000000e+00> : vector<8x192xf32>
    %209 = tpu.matmul %208, %12, %cst_82 {dimension_numbers = #tpu.dot_dimension_numbers<[1], [0], [0], [1], [0, 0, 1, 1], [], []>} : vector<8x32xf32>, vector<32x192xf32>, vector<8x192xf32> -> vector<8x192xf32>
    %210 = arith.addf %156, %209 : vector<8x192xf32>
    %211 = vector.extract_strided_slice %210 {offsets = [0, 0], sizes = [8, 128], strides = [1, 1]} : vector<8x192xf32> to vector<8x128xf32>
    %212 = vector.extract_strided_slice %153 {offsets = [0, 0], sizes = [8, 128], strides = [1, 1]} : vector<8x192xf32> to vector<8x128xf32>
    %213 = arith.addf %211, %212 : vector<8x128xf32>
    %214 = arith.negf %213 : vector<8x128xf32>
    %215 = math.exp %214 : vector<8x128xf32>
    %cst_83 = arith.constant 1.000000e+00 : f32
    %216 = vector.broadcast %cst_83 : f32 to vector<8x128xf32>
    %217 = arith.addf %216, %215 : vector<8x128xf32>
    %218 = arith.divf %216, %217 : vector<8x128xf32>
    %219 = vector.extract_strided_slice %218 {offsets = [0, 0], sizes = [8, 64], strides = [1, 1]} : vector<8x128xf32> to vector<8x64xf32>
    %220 = vector.extract_strided_slice %218 {offsets = [0, 64], sizes = [8, 64], strides = [1, 1]} : vector<8x128xf32> to vector<8x64xf32>
    %221 = vector.extract_strided_slice %210 {offsets = [0, 128], sizes = [8, 64], strides = [1, 1]} : vector<8x192xf32> to vector<8x64xf32>
    %222 = vector.extract_strided_slice %153 {offsets = [0, 128], sizes = [8, 64], strides = [1, 1]} : vector<8x192xf32> to vector<8x64xf32>
    %223 = arith.mulf %219, %222 : vector<8x64xf32>
    %224 = arith.addf %221, %223 : vector<8x64xf32>
    %225 = math.tanh %224 : vector<8x64xf32>
    %cst_84 = arith.constant 1.000000e+00 : f32
    %226 = vector.broadcast %cst_84 : f32 to vector<8x64xf32>
    %227 = arith.subf %226, %220 : vector<8x64xf32>
    %228 = arith.mulf %227, %225 : vector<8x64xf32>
    %229 = arith.mulf %220, %125 : vector<8x64xf32>
    %230 = arith.addf %228, %229 : vector<8x64xf32>
    %c1_85 = arith.constant 1 : index
    %c0_86 = arith.constant 0 : index
    %c0_87 = arith.constant 0 : index
    %231 = vector.load %arg5[%c1_85, %c0_86, %c0_87] : memref<4x8x256xf32, #tpu.memory_space<vmem>>, vector<1x8x64xf32>
    %232 = vector.shape_cast %231 : vector<1x8x64xf32> to vector<8x64xf32>
    %233 = vector.shape_cast %184 : vector<8x64xf32> to vector<1x8x64xf32>
    tpu.vector_store %arg5[%c1_85, %c0_86, %c0_87], %233 {strides = array<i32>} : memref<4x8x256xf32, #tpu.memory_space<vmem>>, vector<1x8x64xf32>,
    %c1_88 = arith.constant 1 : index
    %c0_89 = arith.constant 0 : index
    %c64_90 = arith.constant 64 : index
    %234 = vector.load %arg5[%c1_88, %c0_89, %c64_90] : memref<4x8x256xf32, #tpu.memory_space<vmem>>, vector<1x8x64xf32>
    %235 = vector.shape_cast %234 : vector<1x8x64xf32> to vector<8x64xf32>
    %236 = vector.shape_cast %230 : vector<8x64xf32> to vector<1x8x64xf32>
    tpu.vector_store %arg5[%c1_88, %c0_89, %c64_90], %236 {strides = array<i32>} : memref<4x8x256xf32, #tpu.memory_space<vmem>>, vector<1x8x64xf32>,
    %c1_91 = arith.constant 1 : index
    %c0_92 = arith.constant 0 : index
    %c128_93 = arith.constant 128 : index
    %237 = vector.load %arg5[%c1_91, %c0_92, %c128_93] : memref<4x8x256xf32, #tpu.memory_space<vmem>>, vector<1x8x32xf32>
    %238 = vector.shape_cast %237 : vector<1x8x32xf32> to vector<8x32xf32>
    %239 = vector.shape_cast %208 : vector<8x32xf32> to vector<1x8x32xf32>
    tpu.vector_store %arg5[%c1_91, %c0_92, %c128_93], %239 {strides = array<i32>} : memref<4x8x256xf32, #tpu.memory_space<vmem>>, vector<1x8x32xf32>,
    %c1_94 = arith.constant 1 : index
    %c0_95 = arith.constant 0 : index
    %c160_96 = arith.constant 160 : index
    %240 = vector.load %arg5[%c1_94, %c0_95, %c160_96] : memref<4x8x256xf32, #tpu.memory_space<vmem>>, vector<1x8x16xf32>
    %241 = vector.shape_cast %240 : vector<1x8x16xf32> to vector<8x16xf32>
    %242 = vector.shape_cast %188 : vector<8x16xf32> to vector<1x8x16xf32>
    tpu.vector_store %arg5[%c1_94, %c0_95, %c160_96], %242 {strides = array<i32>} : memref<4x8x256xf32, #tpu.memory_space<vmem>>, vector<1x8x16xf32>,
    %c2 = arith.constant 2 : index
    %c0_97 = arith.constant 0 : index
    %c0_98 = arith.constant 0 : index
    %243 = vector.load %arg1[%c2, %c0_97, %c0_98] : memref<4x8x16xf32, #tpu.memory_space<vmem>>, vector<1x8x16xf32>
    %244 = vector.shape_cast %243 : vector<1x8x16xf32> to vector<8x16xf32>
    %c2_99 = arith.constant 2 : index
    %c0_100 = arith.constant 0 : index
    %c0_101 = arith.constant 0 : index
    %245 = vector.load %arg2[%c2_99, %c0_100, %c0_101] : memref<4x8x16xf32, #tpu.memory_space<vmem>>, vector<1x8x16xf32>
    %246 = vector.shape_cast %245 : vector<1x8x16xf32> to vector<8x16xf32>
    %cst_102 = arith.constant dense<0.000000e+00> : vector<8x256xf32>
    %247 = tpu.matmul %230, %3, %cst_102 {dimension_numbers = #tpu.dot_dimension_numbers<[1], [0], [0], [1], [0, 0, 1, 1], [], []>} : vector<8x64xf32>, vector<64x256xf32>, vector<8x256xf32> -> vector<8x256xf32>
    %cst_103 = arith.constant dense<0.000000e+00> : vector<8x256xf32>
    %248 = tpu.matmul %244, %4, %cst_103 {dimension_numbers = #tpu.dot_dimension_numbers<[1], [0], [0], [1], [0, 0, 1, 1], [], []>} : vector<8x16xf32>, vector<16x256xf32>, vector<8x256xf32> -> vector<8x256xf32>
    %249 = vector.extract_strided_slice %247 {offsets = [0, 0], sizes = [8, 64], strides = [1, 1]} : vector<8x256xf32> to vector<8x64xf32>
    %250 = vector.extract_strided_slice %248 {offsets = [0, 0], sizes = [8, 64], strides = [1, 1]} : vector<8x256xf32> to vector<8x64xf32>
    %251 = arith.addf %249, %250 : vector<8x64xf32>
    %252 = vector.broadcast %13 : vector<1x64xf32> to vector<8x64xf32>
    %253 = arith.addf %251, %252 : vector<8x64xf32>
    %cst_104 = arith.constant 0.000000e+00 : f32
    %254 = vector.broadcast %cst_104 : f32 to vector<8x64xf32>
    %255 = arith.maximumf %253, %254 : vector<8x64xf32>
    %256 = vector.extract_strided_slice %247 {offsets = [0, 64], sizes = [8, 192], strides = [1, 1]} : vector<8x256xf32> to vector<8x192xf32>
    %257 = vector.broadcast %22 : vector<1x192xf32> to vector<8x192xf32>
    %258 = arith.addf %256, %257 : vector<8x192xf32>
    %259 = vector.extract_strided_slice %248 {offsets = [0, 64], sizes = [8, 192], strides = [1, 1]} : vector<8x256xf32> to vector<8x192xf32>
    %260 = vector.broadcast %21 : vector<1x192xf32> to vector<8x192xf32>
    %261 = arith.addf %259, %260 : vector<8x192xf32>
    %cst_105 = arith.constant dense<0.000000e+00> : vector<8x64xf32>
    %262 = tpu.matmul %255, %5, %cst_105 {dimension_numbers = #tpu.dot_dimension_numbers<[1], [0], [0], [1], [0, 0, 1, 1], [], []>} : vector<8x64xf32>, vector<64x64xf32>, vector<8x64xf32> -> vector<8x64xf32>
    %263 = vector.broadcast %14 : vector<1x64xf32> to vector<8x64xf32>
    %264 = arith.addf %262, %263 : vector<8x64xf32>
    %cst_106 = arith.constant 0.000000e+00 : f32
    %265 = vector.broadcast %cst_106 : f32 to vector<8x64xf32>
    %266 = arith.maximumf %264, %265 : vector<8x64xf32>
    %cst_107 = arith.constant dense<0.000000e+00> : vector<8x64xf32>
    %267 = tpu.matmul %266, %6, %cst_107 {dimension_numbers = #tpu.dot_dimension_numbers<[1], [0], [0], [1], [0, 0, 1, 1], [], []>} : vector<8x64xf32>, vector<64x64xf32>, vector<8x64xf32> -> vector<8x64xf32>
    %268 = vector.broadcast %15 : vector<1x64xf32> to vector<8x64xf32>
    %269 = arith.addf %267, %268 : vector<8x64xf32>
    %cst_108 = arith.constant 0.000000e+00 : f32
    %270 = vector.broadcast %cst_108 : f32 to vector<8x64xf32>
    %271 = arith.maximumf %269, %270 : vector<8x64xf32>
    %cst_109 = arith.constant dense<0.000000e+00> : vector<8x64xf32>
    %272 = tpu.matmul %271, %7, %cst_109 {dimension_numbers = #tpu.dot_dimension_numbers<[1], [0], [0], [1], [0, 0, 1, 1], [], []>} : vector<8x64xf32>, vector<64x64xf32>, vector<8x64xf32> -> vector<8x64xf32>
    %273 = vector.broadcast %16 : vector<1x64xf32> to vector<8x64xf32>
    %274 = arith.addf %272, %273 : vector<8x64xf32>
    %cst_110 = arith.constant 0.000000e+00 : f32
    %275 = vector.broadcast %cst_110 : f32 to vector<8x64xf32>
    %276 = arith.maximumf %274, %275 : vector<8x64xf32>
    %277 = vector.broadcast %cst_110 : f32 to vector<8x64xf32>
    %278 = arith.subf %274, %277 : vector<8x64xf32>
    %279 = arith.cmpf one, %278, %278 : vector<8x64xf32>
    %280 = vector.broadcast %cst_110 : f32 to vector<8x64xf32>
    %281 = arith.addf %274, %280 : vector<8x64xf32>
    %282 = math.absf %278 : vector<8x64xf32>
    %cst_111 = arith.constant 0.000000e+00 : f32
    %283 = vector.broadcast %cst_111 : f32 to vector<8x64xf32>
    %284 = arith.subf %283, %282 : vector<8x64xf32>
    %285 = math.exp %284 : vector<8x64xf32>
    %286 = math.log1p %285 : vector<8x64xf32>
    %287 = arith.addf %276, %286 : vector<8x64xf32>
    %288 = arith.select %279, %281, %287 : vector<8x64xi1>, vector<8x64xf32>
    %289 = arith.select %31, %288, %274 : vector<8x64xi1>, vector<8x64xf32>
    %290 = vector.extract_strided_slice %289 {offsets = [0, 32], sizes = [8, 16], strides = [1, 1]} : vector<8x64xf32> to vector<8x16xf32>
    %291 = vector.extract_strided_slice %289 {offsets = [0, 48], sizes = [8, 16], strides = [1, 1]} : vector<8x64xf32> to vector<8x16xf32>
    %292 = arith.mulf %291, %246 : vector<8x16xf32>
    %293 = arith.addf %290, %292 : vector<8x16xf32>
    %cst_112 = arith.constant dense<0.000000e+00> : vector<8x32xf32>
    %294 = tpu.matmul %293, %8, %cst_112 {dimension_numbers = #tpu.dot_dimension_numbers<[1], [0], [0], [1], [0, 0, 1, 1], [], []>} : vector<8x16xf32>, vector<16x32xf32>, vector<8x32xf32> -> vector<8x32xf32>
    %295 = vector.broadcast %17 : vector<1x32xf32> to vector<8x32xf32>
    %296 = arith.addf %294, %295 : vector<8x32xf32>
    %cst_113 = arith.constant 0.000000e+00 : f32
    %297 = vector.broadcast %cst_113 : f32 to vector<8x32xf32>
    %298 = arith.maximumf %296, %297 : vector<8x32xf32>
    %cst_114 = arith.constant dense<0.000000e+00> : vector<8x32xf32>
    %299 = tpu.matmul %298, %9, %cst_114 {dimension_numbers = #tpu.dot_dimension_numbers<[1], [0], [0], [1], [0, 0, 1, 1], [], []>} : vector<8x32xf32>, vector<32x32xf32>, vector<8x32xf32> -> vector<8x32xf32>
    %300 = vector.broadcast %18 : vector<1x32xf32> to vector<8x32xf32>
    %301 = arith.addf %299, %300 : vector<8x32xf32>
    %cst_115 = arith.constant 0.000000e+00 : f32
    %302 = vector.broadcast %cst_115 : f32 to vector<8x32xf32>
    %303 = arith.maximumf %301, %302 : vector<8x32xf32>
    %cst_116 = arith.constant dense<0.000000e+00> : vector<8x32xf32>
    %304 = tpu.matmul %303, %10, %cst_116 {dimension_numbers = #tpu.dot_dimension_numbers<[1], [0], [0], [1], [0, 0, 1, 1], [], []>} : vector<8x32xf32>, vector<32x32xf32>, vector<8x32xf32> -> vector<8x32xf32>
    %305 = vector.broadcast %19 : vector<1x32xf32> to vector<8x32xf32>
    %306 = arith.addf %304, %305 : vector<8x32xf32>
    %cst_117 = arith.constant 0.000000e+00 : f32
    %307 = vector.broadcast %cst_117 : f32 to vector<8x32xf32>
    %308 = arith.maximumf %306, %307 : vector<8x32xf32>
    %cst_118 = arith.constant dense<0.000000e+00> : vector<8x32xf32>
    %309 = tpu.matmul %308, %11, %cst_118 {dimension_numbers = #tpu.dot_dimension_numbers<[1], [0], [0], [1], [0, 0, 1, 1], [], []>} : vector<8x32xf32>, vector<32x32xf32>, vector<8x32xf32> -> vector<8x32xf32>
    %310 = vector.broadcast %20 : vector<1x32xf32> to vector<8x32xf32>
    %311 = arith.addf %309, %310 : vector<8x32xf32>
    %cst_119 = arith.constant 0.000000e+00 : f32
    %312 = vector.broadcast %cst_119 : f32 to vector<8x32xf32>
    %313 = arith.maximumf %311, %312 : vector<8x32xf32>
    %cst_120 = arith.constant dense<0.000000e+00> : vector<8x192xf32>
    %314 = tpu.matmul %313, %12, %cst_120 {dimension_numbers = #tpu.dot_dimension_numbers<[1], [0], [0], [1], [0, 0, 1, 1], [], []>} : vector<8x32xf32>, vector<32x192xf32>, vector<8x192xf32> -> vector<8x192xf32>
    %315 = arith.addf %261, %314 : vector<8x192xf32>
    %316 = vector.extract_strided_slice %315 {offsets = [0, 0], sizes = [8, 128], strides = [1, 1]} : vector<8x192xf32> to vector<8x128xf32>
    %317 = vector.extract_strided_slice %258 {offsets = [0, 0], sizes = [8, 128], strides = [1, 1]} : vector<8x192xf32> to vector<8x128xf32>
    %318 = arith.addf %316, %317 : vector<8x128xf32>
    %319 = arith.negf %318 : vector<8x128xf32>
    %320 = math.exp %319 : vector<8x128xf32>
    %cst_121 = arith.constant 1.000000e+00 : f32
    %321 = vector.broadcast %cst_121 : f32 to vector<8x128xf32>
    %322 = arith.addf %321, %320 : vector<8x128xf32>
    %323 = arith.divf %321, %322 : vector<8x128xf32>
    %324 = vector.extract_strided_slice %323 {offsets = [0, 0], sizes = [8, 64], strides = [1, 1]} : vector<8x128xf32> to vector<8x64xf32>
    %325 = vector.extract_strided_slice %323 {offsets = [0, 64], sizes = [8, 64], strides = [1, 1]} : vector<8x128xf32> to vector<8x64xf32>
    %326 = vector.extract_strided_slice %315 {offsets = [0, 128], sizes = [8, 64], strides = [1, 1]} : vector<8x192xf32> to vector<8x64xf32>
    %327 = vector.extract_strided_slice %258 {offsets = [0, 128], sizes = [8, 64], strides = [1, 1]} : vector<8x192xf32> to vector<8x64xf32>
    %328 = arith.mulf %324, %327 : vector<8x64xf32>
    %329 = arith.addf %326, %328 : vector<8x64xf32>
    %330 = math.tanh %329 : vector<8x64xf32>
    %cst_122 = arith.constant 1.000000e+00 : f32
    %331 = vector.broadcast %cst_122 : f32 to vector<8x64xf32>
    %332 = arith.subf %331, %325 : vector<8x64xf32>
    %333 = arith.mulf %332, %330 : vector<8x64xf32>
    %334 = arith.mulf %325, %230 : vector<8x64xf32>
    %335 = arith.addf %333, %334 : vector<8x64xf32>
    %c2_123 = arith.constant 2 : index
    %c0_124 = arith.constant 0 : index
    %c0_125 = arith.constant 0 : index
    %336 = vector.load %arg5[%c2_123, %c0_124, %c0_125] : memref<4x8x256xf32, #tpu.memory_space<vmem>>, vector<1x8x64xf32>
    %337 = vector.shape_cast %336 : vector<1x8x64xf32> to vector<8x64xf32>
    %338 = vector.shape_cast %289 : vector<8x64xf32> to vector<1x8x64xf32>
    tpu.vector_store %arg5[%c2_123, %c0_124, %c0_125], %338 {strides = array<i32>} : memref<4x8x256xf32, #tpu.memory_space<vmem>>, vector<1x8x64xf32>,
    %c2_126 = arith.constant 2 : index
    %c0_127 = arith.constant 0 : index
    %c64_128 = arith.constant 64 : index
    %339 = vector.load %arg5[%c2_126, %c0_127, %c64_128] : memref<4x8x256xf32, #tpu.memory_space<vmem>>, vector<1x8x64xf32>
    %340 = vector.shape_cast %339 : vector<1x8x64xf32> to vector<8x64xf32>
    %341 = vector.shape_cast %335 : vector<8x64xf32> to vector<1x8x64xf32>
    tpu.vector_store %arg5[%c2_126, %c0_127, %c64_128], %341 {strides = array<i32>} : memref<4x8x256xf32, #tpu.memory_space<vmem>>, vector<1x8x64xf32>,
    %c2_129 = arith.constant 2 : index
    %c0_130 = arith.constant 0 : index
    %c128_131 = arith.constant 128 : index
    %342 = vector.load %arg5[%c2_129, %c0_130, %c128_131] : memref<4x8x256xf32, #tpu.memory_space<vmem>>, vector<1x8x32xf32>
    %343 = vector.shape_cast %342 : vector<1x8x32xf32> to vector<8x32xf32>
    %344 = vector.shape_cast %313 : vector<8x32xf32> to vector<1x8x32xf32>
    tpu.vector_store %arg5[%c2_129, %c0_130, %c128_131], %344 {strides = array<i32>} : memref<4x8x256xf32, #tpu.memory_space<vmem>>, vector<1x8x32xf32>,
    %c2_132 = arith.constant 2 : index
    %c0_133 = arith.constant 0 : index
    %c160_134 = arith.constant 160 : index
    %345 = vector.load %arg5[%c2_132, %c0_133, %c160_134] : memref<4x8x256xf32, #tpu.memory_space<vmem>>, vector<1x8x16xf32>
    %346 = vector.shape_cast %345 : vector<1x8x16xf32> to vector<8x16xf32>
    %347 = vector.shape_cast %293 : vector<8x16xf32> to vector<1x8x16xf32>
    tpu.vector_store %arg5[%c2_132, %c0_133, %c160_134], %347 {strides = array<i32>} : memref<4x8x256xf32, #tpu.memory_space<vmem>>, vector<1x8x16xf32>,
    %c3 = arith.constant 3 : index
    %c0_135 = arith.constant 0 : index
    %c0_136 = arith.constant 0 : index
    %348 = vector.load %arg1[%c3, %c0_135, %c0_136] : memref<4x8x16xf32, #tpu.memory_space<vmem>>, vector<1x8x16xf32>
    %349 = vector.shape_cast %348 : vector<1x8x16xf32> to vector<8x16xf32>
    %c3_137 = arith.constant 3 : index
    %c0_138 = arith.constant 0 : index
    %c0_139 = arith.constant 0 : index
    %350 = vector.load %arg2[%c3_137, %c0_138, %c0_139] : memref<4x8x16xf32, #tpu.memory_space<vmem>>, vector<1x8x16xf32>
    %351 = vector.shape_cast %350 : vector<1x8x16xf32> to vector<8x16xf32>
    %cst_140 = arith.constant dense<0.000000e+00> : vector<8x256xf32>
    %352 = tpu.matmul %335, %3, %cst_140 {dimension_numbers = #tpu.dot_dimension_numbers<[1], [0], [0], [1], [0, 0, 1, 1], [], []>} : vector<8x64xf32>, vector<64x256xf32>, vector<8x256xf32> -> vector<8x256xf32>
    %cst_141 = arith.constant dense<0.000000e+00> : vector<8x256xf32>
    %353 = tpu.matmul %349, %4, %cst_141 {dimension_numbers = #tpu.dot_dimension_numbers<[1], [0], [0], [1], [0, 0, 1, 1], [], []>} : vector<8x16xf32>, vector<16x256xf32>, vector<8x256xf32> -> vector<8x256xf32>
    %354 = vector.extract_strided_slice %352 {offsets = [0, 0], sizes = [8, 64], strides = [1, 1]} : vector<8x256xf32> to vector<8x64xf32>
    %355 = vector.extract_strided_slice %353 {offsets = [0, 0], sizes = [8, 64], strides = [1, 1]} : vector<8x256xf32> to vector<8x64xf32>
    %356 = arith.addf %354, %355 : vector<8x64xf32>
    %357 = vector.broadcast %13 : vector<1x64xf32> to vector<8x64xf32>
    %358 = arith.addf %356, %357 : vector<8x64xf32>
    %cst_142 = arith.constant 0.000000e+00 : f32
    %359 = vector.broadcast %cst_142 : f32 to vector<8x64xf32>
    %360 = arith.maximumf %358, %359 : vector<8x64xf32>
    %361 = vector.extract_strided_slice %352 {offsets = [0, 64], sizes = [8, 192], strides = [1, 1]} : vector<8x256xf32> to vector<8x192xf32>
    %362 = vector.broadcast %22 : vector<1x192xf32> to vector<8x192xf32>
    %363 = arith.addf %361, %362 : vector<8x192xf32>
    %364 = vector.extract_strided_slice %353 {offsets = [0, 64], sizes = [8, 192], strides = [1, 1]} : vector<8x256xf32> to vector<8x192xf32>
    %365 = vector.broadcast %21 : vector<1x192xf32> to vector<8x192xf32>
    %366 = arith.addf %364, %365 : vector<8x192xf32>
    %cst_143 = arith.constant dense<0.000000e+00> : vector<8x64xf32>
    %367 = tpu.matmul %360, %5, %cst_143 {dimension_numbers = #tpu.dot_dimension_numbers<[1], [0], [0], [1], [0, 0, 1, 1], [], []>} : vector<8x64xf32>, vector<64x64xf32>, vector<8x64xf32> -> vector<8x64xf32>
    %368 = vector.broadcast %14 : vector<1x64xf32> to vector<8x64xf32>
    %369 = arith.addf %367, %368 : vector<8x64xf32>
    %cst_144 = arith.constant 0.000000e+00 : f32
    %370 = vector.broadcast %cst_144 : f32 to vector<8x64xf32>
    %371 = arith.maximumf %369, %370 : vector<8x64xf32>
    %cst_145 = arith.constant dense<0.000000e+00> : vector<8x64xf32>
    %372 = tpu.matmul %371, %6, %cst_145 {dimension_numbers = #tpu.dot_dimension_numbers<[1], [0], [0], [1], [0, 0, 1, 1], [], []>} : vector<8x64xf32>, vector<64x64xf32>, vector<8x64xf32> -> vector<8x64xf32>
    %373 = vector.broadcast %15 : vector<1x64xf32> to vector<8x64xf32>
    %374 = arith.addf %372, %373 : vector<8x64xf32>
    %cst_146 = arith.constant 0.000000e+00 : f32
    %375 = vector.broadcast %cst_146 : f32 to vector<8x64xf32>
    %376 = arith.maximumf %374, %375 : vector<8x64xf32>
    %cst_147 = arith.constant dense<0.000000e+00> : vector<8x64xf32>
    %377 = tpu.matmul %376, %7, %cst_147 {dimension_numbers = #tpu.dot_dimension_numbers<[1], [0], [0], [1], [0, 0, 1, 1], [], []>} : vector<8x64xf32>, vector<64x64xf32>, vector<8x64xf32> -> vector<8x64xf32>
    %378 = vector.broadcast %16 : vector<1x64xf32> to vector<8x64xf32>
    %379 = arith.addf %377, %378 : vector<8x64xf32>
    %cst_148 = arith.constant 0.000000e+00 : f32
    %380 = vector.broadcast %cst_148 : f32 to vector<8x64xf32>
    %381 = arith.maximumf %379, %380 : vector<8x64xf32>
    %382 = vector.broadcast %cst_148 : f32 to vector<8x64xf32>
    %383 = arith.subf %379, %382 : vector<8x64xf32>
    %384 = arith.cmpf one, %383, %383 : vector<8x64xf32>
    %385 = vector.broadcast %cst_148 : f32 to vector<8x64xf32>
    %386 = arith.addf %379, %385 : vector<8x64xf32>
    %387 = math.absf %383 : vector<8x64xf32>
    %cst_149 = arith.constant 0.000000e+00 : f32
    %388 = vector.broadcast %cst_149 : f32 to vector<8x64xf32>
    %389 = arith.subf %388, %387 : vector<8x64xf32>
    %390 = math.exp %389 : vector<8x64xf32>
    %391 = math.log1p %390 : vector<8x64xf32>
    %392 = arith.addf %381, %391 : vector<8x64xf32>
    %393 = arith.select %384, %386, %392 : vector<8x64xi1>, vector<8x64xf32>
    %394 = arith.select %31, %393, %379 : vector<8x64xi1>, vector<8x64xf32>
    %395 = vector.extract_strided_slice %394 {offsets = [0, 32], sizes = [8, 16], strides = [1, 1]} : vector<8x64xf32> to vector<8x16xf32>
    %396 = vector.extract_strided_slice %394 {offsets = [0, 48], sizes = [8, 16], strides = [1, 1]} : vector<8x64xf32> to vector<8x16xf32>
    %397 = arith.mulf %396, %351 : vector<8x16xf32>
    %398 = arith.addf %395, %397 : vector<8x16xf32>
    %cst_150 = arith.constant dense<0.000000e+00> : vector<8x32xf32>
    %399 = tpu.matmul %398, %8, %cst_150 {dimension_numbers = #tpu.dot_dimension_numbers<[1], [0], [0], [1], [0, 0, 1, 1], [], []>} : vector<8x16xf32>, vector<16x32xf32>, vector<8x32xf32> -> vector<8x32xf32>
    %400 = vector.broadcast %17 : vector<1x32xf32> to vector<8x32xf32>
    %401 = arith.addf %399, %400 : vector<8x32xf32>
    %cst_151 = arith.constant 0.000000e+00 : f32
    %402 = vector.broadcast %cst_151 : f32 to vector<8x32xf32>
    %403 = arith.maximumf %401, %402 : vector<8x32xf32>
    %cst_152 = arith.constant dense<0.000000e+00> : vector<8x32xf32>
    %404 = tpu.matmul %403, %9, %cst_152 {dimension_numbers = #tpu.dot_dimension_numbers<[1], [0], [0], [1], [0, 0, 1, 1], [], []>} : vector<8x32xf32>, vector<32x32xf32>, vector<8x32xf32> -> vector<8x32xf32>
    %405 = vector.broadcast %18 : vector<1x32xf32> to vector<8x32xf32>
    %406 = arith.addf %404, %405 : vector<8x32xf32>
    %cst_153 = arith.constant 0.000000e+00 : f32
    %407 = vector.broadcast %cst_153 : f32 to vector<8x32xf32>
    %408 = arith.maximumf %406, %407 : vector<8x32xf32>
    %cst_154 = arith.constant dense<0.000000e+00> : vector<8x32xf32>
    %409 = tpu.matmul %408, %10, %cst_154 {dimension_numbers = #tpu.dot_dimension_numbers<[1], [0], [0], [1], [0, 0, 1, 1], [], []>} : vector<8x32xf32>, vector<32x32xf32>, vector<8x32xf32> -> vector<8x32xf32>
    %410 = vector.broadcast %19 : vector<1x32xf32> to vector<8x32xf32>
    %411 = arith.addf %409, %410 : vector<8x32xf32>
    %cst_155 = arith.constant 0.000000e+00 : f32
    %412 = vector.broadcast %cst_155 : f32 to vector<8x32xf32>
    %413 = arith.maximumf %411, %412 : vector<8x32xf32>
    %cst_156 = arith.constant dense<0.000000e+00> : vector<8x32xf32>
    %414 = tpu.matmul %413, %11, %cst_156 {dimension_numbers = #tpu.dot_dimension_numbers<[1], [0], [0], [1], [0, 0, 1, 1], [], []>} : vector<8x32xf32>, vector<32x32xf32>, vector<8x32xf32> -> vector<8x32xf32>
    %415 = vector.broadcast %20 : vector<1x32xf32> to vector<8x32xf32>
    %416 = arith.addf %414, %415 : vector<8x32xf32>
    %cst_157 = arith.constant 0.000000e+00 : f32
    %417 = vector.broadcast %cst_157 : f32 to vector<8x32xf32>
    %418 = arith.maximumf %416, %417 : vector<8x32xf32>
    %cst_158 = arith.constant dense<0.000000e+00> : vector<8x192xf32>
    %419 = tpu.matmul %418, %12, %cst_158 {dimension_numbers = #tpu.dot_dimension_numbers<[1], [0], [0], [1], [0, 0, 1, 1], [], []>} : vector<8x32xf32>, vector<32x192xf32>, vector<8x192xf32> -> vector<8x192xf32>
    %420 = arith.addf %366, %419 : vector<8x192xf32>
    %421 = vector.extract_strided_slice %420 {offsets = [0, 0], sizes = [8, 128], strides = [1, 1]} : vector<8x192xf32> to vector<8x128xf32>
    %422 = vector.extract_strided_slice %363 {offsets = [0, 0], sizes = [8, 128], strides = [1, 1]} : vector<8x192xf32> to vector<8x128xf32>
    %423 = arith.addf %421, %422 : vector<8x128xf32>
    %424 = arith.negf %423 : vector<8x128xf32>
    %425 = math.exp %424 : vector<8x128xf32>
    %cst_159 = arith.constant 1.000000e+00 : f32
    %426 = vector.broadcast %cst_159 : f32 to vector<8x128xf32>
    %427 = arith.addf %426, %425 : vector<8x128xf32>
    %428 = arith.divf %426, %427 : vector<8x128xf32>
    %429 = vector.extract_strided_slice %428 {offsets = [0, 0], sizes = [8, 64], strides = [1, 1]} : vector<8x128xf32> to vector<8x64xf32>
    %430 = vector.extract_strided_slice %428 {offsets = [0, 64], sizes = [8, 64], strides = [1, 1]} : vector<8x128xf32> to vector<8x64xf32>
    %431 = vector.extract_strided_slice %420 {offsets = [0, 128], sizes = [8, 64], strides = [1, 1]} : vector<8x192xf32> to vector<8x64xf32>
    %432 = vector.extract_strided_slice %363 {offsets = [0, 128], sizes = [8, 64], strides = [1, 1]} : vector<8x192xf32> to vector<8x64xf32>
    %433 = arith.mulf %429, %432 : vector<8x64xf32>
    %434 = arith.addf %431, %433 : vector<8x64xf32>
    %435 = math.tanh %434 : vector<8x64xf32>
    %cst_160 = arith.constant 1.000000e+00 : f32
    %436 = vector.broadcast %cst_160 : f32 to vector<8x64xf32>
    %437 = arith.subf %436, %430 : vector<8x64xf32>
    %438 = arith.mulf %437, %435 : vector<8x64xf32>
    %439 = arith.mulf %430, %335 : vector<8x64xf32>
    %440 = arith.addf %438, %439 : vector<8x64xf32>
    %c3_161 = arith.constant 3 : index
    %c0_162 = arith.constant 0 : index
    %c0_163 = arith.constant 0 : index
    %441 = vector.load %arg5[%c3_161, %c0_162, %c0_163] : memref<4x8x256xf32, #tpu.memory_space<vmem>>, vector<1x8x64xf32>
    %442 = vector.shape_cast %441 : vector<1x8x64xf32> to vector<8x64xf32>
    %443 = vector.shape_cast %394 : vector<8x64xf32> to vector<1x8x64xf32>
    tpu.vector_store %arg5[%c3_161, %c0_162, %c0_163], %443 {strides = array<i32>} : memref<4x8x256xf32, #tpu.memory_space<vmem>>, vector<1x8x64xf32>,
    %c3_164 = arith.constant 3 : index
    %c0_165 = arith.constant 0 : index
    %c64_166 = arith.constant 64 : index
    %444 = vector.load %arg5[%c3_164, %c0_165, %c64_166] : memref<4x8x256xf32, #tpu.memory_space<vmem>>, vector<1x8x64xf32>
    %445 = vector.shape_cast %444 : vector<1x8x64xf32> to vector<8x64xf32>
    %446 = vector.shape_cast %440 : vector<8x64xf32> to vector<1x8x64xf32>
    tpu.vector_store %arg5[%c3_164, %c0_165, %c64_166], %446 {strides = array<i32>} : memref<4x8x256xf32, #tpu.memory_space<vmem>>, vector<1x8x64xf32>,
    %c3_167 = arith.constant 3 : index
    %c0_168 = arith.constant 0 : index
    %c128_169 = arith.constant 128 : index
    %447 = vector.load %arg5[%c3_167, %c0_168, %c128_169] : memref<4x8x256xf32, #tpu.memory_space<vmem>>, vector<1x8x32xf32>
    %448 = vector.shape_cast %447 : vector<1x8x32xf32> to vector<8x32xf32>
    %449 = vector.shape_cast %418 : vector<8x32xf32> to vector<1x8x32xf32>
    tpu.vector_store %arg5[%c3_167, %c0_168, %c128_169], %449 {strides = array<i32>} : memref<4x8x256xf32, #tpu.memory_space<vmem>>, vector<1x8x32xf32>,
    %c3_170 = arith.constant 3 : index
    %c0_171 = arith.constant 0 : index
    %c160_172 = arith.constant 160 : index
    %450 = vector.load %arg5[%c3_170, %c0_171, %c160_172] : memref<4x8x256xf32, #tpu.memory_space<vmem>>, vector<1x8x16xf32>
    %451 = vector.shape_cast %450 : vector<1x8x16xf32> to vector<8x16xf32>
    %452 = vector.shape_cast %398 : vector<8x16xf32> to vector<1x8x16xf32>
    tpu.vector_store %arg5[%c3_170, %c0_171, %c160_172], %452 {strides = array<i32>} : memref<4x8x256xf32, #tpu.memory_space<vmem>>, vector<1x8x16xf32>,
    %c0_173 = arith.constant 0 : index
    %c0_174 = arith.constant 0 : index
    %453 = vector.load %arg6[%c0_173, %c0_174] : memref<8x64xf32, #tpu.memory_space<vmem>>, vector<8x64xf32>
    tpu.vector_store %arg6[%c0_173, %c0_174], %440 {strides = array<i32>} : memref<8x64xf32, #tpu.memory_space<vmem>>, vector<8x64xf32>,
    return
  }
  func.func @transform_0(%arg0: i32) -> (i32, i32, i32) {
    %c0_i32 = arith.constant 0 : i32
    %c0_i32_0 = arith.constant 0 : i32
    %c0_i32_1 = arith.constant 0 : i32
    return %arg0, %c0_i32, %c0_i32_0 : i32, i32, i32
  }
  func.func @transform_1(%arg0: i32) -> (i32, i32, i32) {
    %c0_i32 = arith.constant 0 : i32
    %c0_i32_0 = arith.constant 0 : i32
    %c0_i32_1 = arith.constant 0 : i32
    return %arg0, %c0_i32, %c0_i32_0 : i32, i32, i32
  }
  func.func @transform_2(%arg0: i32) -> (i32, i32) {
    %c0_i32 = arith.constant 0 : i32
    %c0_i32_0 = arith.constant 0 : i32
    %c0_i32_1 = arith.constant 0 : i32
    return %c0_i32, %c0_i32_0 : i32, i32
  }
  func.func @transform_3(%arg0: i32) -> (i32, i32) {
    %c0_i32 = arith.constant 0 : i32
    %c0_i32_0 = arith.constant 0 : i32
    %c0_i32_1 = arith.constant 0 : i32
    return %c0_i32, %c0_i32_0 : i32, i32
  }
  func.func @transform_4(%arg0: i32) -> (i32, i32, i32) {
    %c0_i32 = arith.constant 0 : i32
    %c0_i32_0 = arith.constant 0 : i32
    %c0_i32_1 = arith.constant 0 : i32
    return %arg0, %c0_i32, %c0_i32_0 : i32, i32, i32
  }
}

</mosaic_0001>

<llo_original>
// kernel: tpu_custom_call.1
$region0: #{tpu_custom_call.1}
  #allocation0 [shape = 'u32[]', space=smem, size = 0x4, offset = 0x4, fixed_abs, tag = 'smem constant byte address 0x4 - core index']
  #allocation1 [shape = 'u32[144,128]{1,0:T(1,128)}', space=vmem, size = 0x12000, scoped, tag = 'internal scratch']
  #allocation2 [shape = 'f32[8,64]{1,0:T(8,128)}', space=vmem, size = 0x1000, scoped, tag = 'scratch operand']
  %s0 = inlined_call_operand.hbm [shape: f32[8,8,16], index: 0, kind: input, shape index: {}]
  %s1 = inlined_call_operand.hbm [shape: f32[8,8,16], index: 1, kind: input, shape index: {}]
  %s2 = inlined_call_operand.hbm [shape: f32[8,64], index: 2, kind: input, shape index: {}]
  %s3 = inlined_call_operand.hbm [shape: f32[496,256], index: 3, kind: input, shape index: {}]
  %s4 = inlined_call_operand.hbm [shape: f32[8,8,256], index: 4, kind: output, shape index: {}]
  %s5 = sld [smem:[#allocation0]]
  $region69: #{tpu_custom_call.1} parent=0
    _
  %s7 = ssub.s32 1, %s5
  %s8 = scalar_select 0, %s7, %s5
  $region1: #{tpu_custom_call.1} parent=0
    #allocation3 [shape = 'u8[32768]{0}', space=vmem, size = 0x8000, scoped, tag = 'input window, operand 0']
    #allocation4 [shape = 's32[2]{0}', space=sflag, size = 0x8, scoped, tag = 'scoped memory for tpu_custom_call.1']
    #allocation5 [shape = 's32[2]{0}', space=sflag, size = 0x8, scoped, tag = 'scoped memory for tpu_custom_call.1']
    #allocation6 [shape = 'u8[32768]{0}', space=vmem, size = 0x8000, scoped, tag = 'input window, operand 1']
    #allocation7 [shape = 's32[2]{0}', space=sflag, size = 0x8, scoped, tag = 'scoped memory for tpu_custom_call.1']
    #allocation8 [shape = 'u8[4096]{0}', space=vmem, size = 0x1000, scoped, tag = 'input window, operand 2, single buffered']
    #allocation9 [shape = 'u8[507904]{0}', space=vmem, size = 0x7c000, scoped, tag = 'input window, operand 3, single buffered']
    #allocation10 [shape = 's32[1]{0}', space=sflag, size = 0x4, scoped, tag = 'scoped memory for tpu_custom_call.1']
    #allocation11 [shape = 'u8[65536]{0}', space=vmem, size = 0x10000, scoped, tag = 'output window, operand 0']
    %9 = vsyncpa [#allocation4], 0
    %s10 = scalar_lea.sflag [#allocation4], 1
    %11 = vsyncpa %s10, 0
    %12 = vsyncpa [#allocation7], 0
    %s13 = scalar_lea.sflag [#allocation7], 1
    %14 = vsyncpa %s13, 0
    %15 = vsyncpa [#allocation10], 0
    %16 = vsyncpa [#allocation5], 0
    %s17 = scalar_lea.sflag [#allocation5], 1
    %18 = vsyncpa %s17, 0
    loop: start=0, step=1, limit=4
    $region2: #{tpu_custom_call.1} parent=1 // loop_pre_header
      _
    $region3: #{tpu_custom_call.1} parent=1 // loop_header
      %s20 = sphi 0, %s24
      %p21 = scmp.ge.s32.totalorder %s20, 4
      %s30 = sphi 0, %s32
      %s33 = sphi 0, %s30
      %s34 = sphi 0, %s33
      %s50 = sphi 0, %s34
      %s56 = sphi 0, %s58
      %s59 = sphi 0, %s56
      %s60 = sphi 0, %s59
      %s76 = sphi 0, %s60
      %s80 = sphi 0, %s80
      %s82 = sphi 0, %s80
      %s83 = sphi 0, %s82
      %s97 = sphi 0, %s83
      %s101 = sphi 0, %s101
      %s103 = sphi 0, %s101
      %s104 = sphi 0, %s103
      %s118 = sphi 0, %s104
      %s124 = sphi 0, %s126
      %s127 = sphi 0, %s124
      %s128 = sphi 0, %s127
      %s144 = sphi 0, %s128
    $region4: #{tpu_custom_call.1} parent=1 // loop_header_branch
      %23 = sbr.rel (%p21) target = $region8
    $region5: #{tpu_custom_call.1} parent=1 // loop_body
      %s25 = ssub.s32 %s20, 1
      %s26 = ssub.s32 %s20, 2
      %s27 = sadd.s32 %s20, 1
      %s28 = ssub.s32 %s20, %s27
      %p29 = scmp.eq.s32.totalorder %s28, 0
      %s31 = sadd.s32 %s30, 1
      %s32 = scalar_select %p29, %s30, %s31
      %p35 = pneg %p29
      %p36 = scmp.eq.s32.totalorder %s20, 1
      %p37 = por %p35, %p36
      %p38 = scmp.ne.s32.totalorder %s30, %s33
      %p39 = scmp.eq.s32.totalorder %s20, 0
      %p40 = por %p38, %p39
      %p41 = scmp.ne.s32.totalorder %s30, %s33
      %p42 = scmp.eq.s32.totalorder %s25, 1
      %p43 = por %p41, %p42
      %p44 = scmp.ne.s32.totalorder %s33, %s34
      %p45 = scmp.eq.s32.totalorder %s25, 0
      %p46 = por %p44, %p45
      %p47 = scmp.ne.s32.totalorder %s33, %s34
      %p48 = scmp.eq.s32.totalorder %s26, 1
      %p49 = por %p47, %p48
      %p51 = scmp.ne.s32.totalorder %s34, %s50
      %p52 = scmp.eq.s32.totalorder %s26, 0
      %p53 = por %p51, %p52
      %s54 = ssub.s32 %s20, %s27
      %p55 = scmp.eq.s32.totalorder %s54, 0
      %s57 = sadd.s32 %s56, 1
      %s58 = scalar_select %p55, %s56, %s57
      %p61 = pneg %p55
      %p62 = scmp.eq.s32.totalorder %s20, 1
      %p63 = por %p61, %p62
      %p64 = scmp.ne.s32.totalorder %s56, %s59
      %p65 = scmp.eq.s32.totalorder %s20, 0
      %p66 = por %p64, %p65
      %p67 = scmp.ne.s32.totalorder %s56, %s59
      %p68 = scmp.eq.s32.totalorder %s25, 1
      %p69 = por %p67, %p68
      %p70 = scmp.ne.s32.totalorder %s59, %s60
      %p71 = scmp.eq.s32.totalorder %s25, 0
      %p72 = por %p70, %p71
      %p73 = scmp.ne.s32.totalorder %s59, %s60
      %p74 = scmp.eq.s32.totalorder %s26, 1
      %p75 = por %p73, %p74
      %p77 = scmp.ne.s32.totalorder %s60, %s76
      %p78 = scmp.eq.s32.totalorder %s26, 0
      %p79 = por %p77, %p78
      %s81 = sadd.s32 %s80, 1
      %p84 = scmp.eq.s32.totalorder %s20, 1
      %p85 = scmp.ne.s32.totalorder %s80, %s82
      %p86 = scmp.eq.s32.totalorder %s20, 0
      %p87 = por %p85, %p86
      %p88 = scmp.ne.s32.totalorder %s80, %s82
      %p89 = scmp.eq.s32.totalorder %s25, 1
      %p90 = por %p88, %p89
      %p91 = scmp.ne.s32.totalorder %s82, %s83
      %p92 = scmp.eq.s32.totalorder %s25, 0
      %p93 = por %p91, %p92
      %p94 = scmp.ne.s32.totalorder %s82, %s83
      %p95 = scmp.eq.s32.totalorder %s26, 1
      %p96 = por %p94, %p95
      %p98 = scmp.ne.s32.totalorder %s83, %s97
      %p99 = scmp.eq.s32.totalorder %s26, 0
      %p100 = por %p98, %p99
      %s102 = sadd.s32 %s101, 1
      %p105 = scmp.eq.s32.totalorder %s20, 1
      %p106 = scmp.ne.s32.totalorder %s101, %s103
      %p107 = scmp.eq.s32.totalorder %s20, 0
      %p108 = por %p106, %p107
      %p109 = scmp.ne.s32.totalorder %s101, %s103
      %p110 = scmp.eq.s32.totalorder %s25, 1
      %p111 = por %p109, %p110
      %p112 = scmp.ne.s32.totalorder %s103, %s104
      %p113 = scmp.eq.s32.totalorder %s25, 0
      %p114 = por %p112, %p113
      %p115 = scmp.ne.s32.totalorder %s103, %s104
      %p116 = scmp.eq.s32.totalorder %s26, 1
      %p117 = por %p115, %p116
      %p119 = scmp.ne.s32.totalorder %s104, %s118
      %p120 = scmp.eq.s32.totalorder %s26, 0
      %p121 = por %p119, %p120
      %s122 = ssub.s32 %s20, %s27
      %p123 = scmp.eq.s32.totalorder %s122, 0
      %s125 = sadd.s32 %s124, 1
      %s126 = scalar_select %p123, %s124, %s125
      %p129 = pneg %p123
      %p130 = scmp.eq.s32.totalorder %s20, 1
      %p131 = por %p129, %p130
      %p132 = scmp.ne.s32.totalorder %s124, %s127
      %p133 = scmp.eq.s32.totalorder %s20, 0
      %p134 = por %p132, %p133
      %p135 = scmp.ne.s32.totalorder %s124, %s127
      %p136 = scmp.eq.s32.totalorder %s25, 1
      %p137 = por %p135, %p136
      %p138 = scmp.ne.s32.totalorder %s127, %s128
      %p139 = scmp.eq.s32.totalorder %s25, 0
      %p140 = por %p138, %p139
      %p141 = scmp.ne.s32.totalorder %s127, %s128
      %p142 = scmp.eq.s32.totalorder %s26, 1
      %p143 = por %p141, %p142
      %p145 = scmp.ne.s32.totalorder %s128, %s144
      %p146 = scmp.eq.s32.totalorder %s26, 0
      %p147 = por %p145, %p146
      %p148 = scmp.le.s32.totalorder 1, %s20
      %p149 = scmp.lt.s32.totalorder %s20, 3
      %p150 = pnand %p148, %p149
      %p151 = pneg %p150
      // Predicated region
      $region9: #{tpu_custom_call.1} parent=5 // pred_check
        _
      $region10: #{tpu_custom_call.1} parent=5 // pred_check_branch
        %153 = sbr.rel (%p150) target = $region12
      $region11: #{tpu_custom_call.1} parent=5 // pred_region
        %s154 = ssub.s32 %s20, 1
        // Predicated region
        $region13: #{tpu_custom_call.1} parent=11 // pred_check
          %p155 = pneg %p93
        $region14: #{tpu_custom_call.1} parent=11 // pred_check_branch
          %157 = sbr.rel (%p155) target = $region16
        $region15: #{tpu_custom_call.1} parent=11 // pred_region
          %s159 = ssub.s32 128, 128
          %160 = vsyncadd [#allocation7], %s159
          %s162 = sshll.u32 [#allocation8], 4
          %s163 = int_to_ptr.vmem [resolvable:$true] %s162
          %165 = dma.hbm_to_vmem [thread:$0]  %s2, 128, %s163, [#allocation7]
        $region16: #{tpu_custom_call.1} parent=11 // pred_fallthru
          _
        // Predicated region
        $region17: #{tpu_custom_call.1} parent=11 // pred_check
          %p166 = pneg %p114
        $region18: #{tpu_custom_call.1} parent=11 // pred_check_branch
          %168 = sbr.rel (%p166) target = $region20
        $region19: #{tpu_custom_call.1} parent=11 // pred_region
          %s170 = ssub.s32 15872, 15872
          %171 = vsyncadd [#allocation10], %s170
          %s172 = sshll.u32 [#allocation9], 4
          %s173 = int_to_ptr.vmem [resolvable:$true] %s172
          %178 = dma.hbm_to_vmem [thread:$0]  %s3, 15872, %s173, [#allocation10], 256, 256, 16
        $region20: #{tpu_custom_call.1} parent=11 // pred_fallthru
          _
      $region12: #{tpu_custom_call.1} parent=5 // pred_fallthru
        _
      %p179 = scmp.lt.s32.totalorder %s20, 2
      // Predicated region
      $region21: #{tpu_custom_call.1} parent=5 // pred_check
        %p180 = pneg %p179
      $region22: #{tpu_custom_call.1} parent=5 // pred_check_branch
        %182 = sbr.rel (%p180) target = $region24
      $region23: #{tpu_custom_call.1} parent=5 // pred_region
        // Predicated region
        $region25: #{tpu_custom_call.1} parent=23 // pred_check
          %p183 = pneg %p40
        $region26: #{tpu_custom_call.1} parent=23 // pred_check_branch
          %185 = sbr.rel (%p183) target = $region28
        $region27: #{tpu_custom_call.1} parent=23 // pred_region
          %s186 = sand.u32 %s30, 1
          %s187 = scalar_lea.sflag [#allocation4], %s186
          %s188 = sand.u32 %s30, 1
          %s189 = smul.addr %s188, 32
          %s190 = scalar_lea.vmem [#allocation3], %s189
          %s191 = smul.u32 4, %s20
          %s193 = ssub.s32 512, 512
          %194 = vsyncadd %s187, %s193
          %s195 = smul.addr %s191, 128
          %s196 = scalar_lea.hbm %s0, %s195
          %s197 = sshll.u32 %s190, 4
          %s198 = int_to_ptr.vmem [resolvable:$true] %s197
          %203 = dma.hbm_to_vmem [thread:$0]  %s196, 512, %s198, %s187, 128, 128, 8
        $region28: #{tpu_custom_call.1} parent=23 // pred_fallthru
          _
        // Predicated region
        $region29: #{tpu_custom_call.1} parent=23 // pred_check
          %p204 = pneg %p66
        $region30: #{tpu_custom_call.1} parent=23 // pred_check_branch
          %206 = sbr.rel (%p204) target = $region32
        $region31: #{tpu_custom_call.1} parent=23 // pred_region
          %s207 = sand.u32 %s20, 1
          %s208 = scalar_lea.sflag [#allocation7], %s207
          %s209 = sand.u32 %s56, 1
          %s210 = smul.addr %s209, 32
          %s211 = scalar_lea.vmem [#allocation6], %s210
          %s212 = smul.u32 4, %s20
          %s214 = ssub.s32 512, 512
          %215 = vsyncadd %s208, %s214
          %s216 = smul.addr %s212, 128
          %s217 = scalar_lea.hbm %s1, %s216
          %s218 = sshll.u32 %s211, 4
          %s219 = int_to_ptr.vmem [resolvable:$true] %s218
          %224 = dma.hbm_to_vmem [thread:$0]  %s217, 512, %s219, %s208, 128, 128, 8
        $region32: #{tpu_custom_call.1} parent=23 // pred_fallthru
          _
      $region24: #{tpu_custom_call.1} parent=5 // pred_fallthru
        _
      %p225 = scmp.le.s32.totalorder 1, %s20
      %p226 = scmp.lt.s32.totalorder %s20, 3
      %p227 = pnand %p225, %p226
      %p228 = pneg %p227
      // Predicated region
      $region33: #{tpu_custom_call.1} parent=5 // pred_check
        _
      $region34: #{tpu_custom_call.1} parent=5 // pred_check_branch
        %230 = sbr.rel (%p227) target = $region36
      $region35: #{tpu_custom_call.1} parent=5 // pred_region
        %s231 = ssub.s32 %s20, 1
        %s232 = sand.u32 %s33, 1
        %s233 = scalar_lea.sflag [#allocation4], %s232
        %s234 = sand.u32 %s33, 1
        %s235 = smul.addr %s234, 32
        %s236 = scalar_lea.vmem [#allocation3], %s235
        // Predicated region
        $region37: #{tpu_custom_call.1} parent=35 // pred_check
          %p237 = pneg %p46
        $region38: #{tpu_custom_call.1} parent=35 // pred_check_branch
          %239 = sbr.rel (%p237) target = $region40
        $region39: #{tpu_custom_call.1} parent=35 // pred_region
          %240 = dma.done %s233, 512
        $region40: #{tpu_custom_call.1} parent=35 // pred_fallthru
          _
        %s241 = sand.u32 %s25, 1
        %s242 = scalar_lea.sflag [#allocation7], %s241
        %s243 = sand.u32 %s59, 1
        %s244 = smul.addr %s243, 32
        %s245 = scalar_lea.vmem [#allocation6], %s244
        // Predicated region
        $region41: #{tpu_custom_call.1} parent=35 // pred_check
          %p246 = pneg %p72
        $region42: #{tpu_custom_call.1} parent=35 // pred_check_branch
          %248 = sbr.rel (%p246) target = $region44
        $region43: #{tpu_custom_call.1} parent=35 // pred_region
          %249 = dma.done %s242, 512
        $region44: #{tpu_custom_call.1} parent=35 // pred_fallthru
          _
        // Predicated region
        $region45: #{tpu_custom_call.1} parent=35 // pred_check
          %p250 = pneg %p93
        $region46: #{tpu_custom_call.1} parent=35 // pred_check_branch
          %252 = sbr.rel (%p250) target = $region48
        $region47: #{tpu_custom_call.1} parent=35 // pred_region
          %253 = dma.done [#allocation7], 128
        $region48: #{tpu_custom_call.1} parent=35 // pred_fallthru
          _
        // Predicated region
        $region49: #{tpu_custom_call.1} parent=35 // pred_check
          %p254 = pneg %p114
        $region50: #{tpu_custom_call.1} parent=35 // pred_check_branch
          %256 = sbr.rel (%p254) target = $region52
        $region51: #{tpu_custom_call.1} parent=35 // pred_region
          %257 = dma.done [#allocation10], 15872
        $region52: #{tpu_custom_call.1} parent=35 // pred_fallthru
          _
        %s258 = sand.u32 %s33, 1
        %s259 = scalar_lea.sflag [#allocation4], %s258
        %s260 = sand.u32 %s33, 1
        %s261 = smul.addr %s260, 32
        %s262 = scalar_lea.vmem [#allocation3], %s261
        %p263 = pneg %p46
        %p264 = pneg %p43
        %s265 = sand.u32 %s25, 1
        %s266 = scalar_lea.sflag [#allocation7], %s265
        %s267 = sand.u32 %s59, 1
        %s268 = smul.addr %s267, 32
        %s269 = scalar_lea.vmem [#allocation6], %s268
        %p270 = pneg %p72
        %p271 = pneg %p69
        %p272 = pneg %p93
        %p273 = pneg %p90
        %p274 = pneg %p114
        %p275 = pneg %p111
        %p276 = pneg %p140
        %p277 = pneg %p137
        %s278 = sand.u32 %s127, 1
        %s279 = scalar_lea.sflag [#allocation5], %s278
        %s280 = sand.u32 %s127, 1
        %s281 = smul.addr %s280, 64
        %s282 = scalar_lea.vmem [#allocation11], %s281
        %s283 = smul.u32 4, %s25
        %s284 = smul.u32 4, %s25
        %s285 = smul.u32 4, %s25
        %p286 = scmp.eq.s32.totalorder %s25, 0
        // Predicated region
        $region53: #{tpu_custom_call.1} parent=35 // pred_check
          %p287 = pneg %p286
        $region54: #{tpu_custom_call.1} parent=35 // pred_check_branch
          %289 = sbr.rel (%p287) target = $region56
        $region55: #{tpu_custom_call.1} parent=35 // pred_region
          %v290 = vld [vmem:[#allocation8] sm:$0xff]
          %vm291 = vcmask 523264
          %292 = vst.msk [vmem:[#allocation2] sm:$0xff] %vm291, %v290
        $region56: #{tpu_custom_call.1} parent=35 // pred_fallthru
          _
        %v293 = vld [vmem:[#allocation9] sm:$0xff]
        %v294 = vld [vmem:[#allocation9 + $0x8] sm:$0xff]
        %v295 = vld [vmem:[#allocation9 + $0x10] sm:$0xff]
        %v296 = vld [vmem:[#allocation9 + $0x18] sm:$0xff]
        %v297 = vld [vmem:[#allocation9 + $0x20] sm:$0xff]
        %v298 = vld [vmem:[#allocation9 + $0x28] sm:$0xff]
        %v299 = vld [vmem:[#allocation9 + $0x30] sm:$0xff]
        %v300 = vld [vmem:[#allocation9 + $0x38] sm:$0xff]
        %v301 = vld [vmem:[#allocation9 + $0x40] sm:$0xff]
        %v302 = vld [vmem:[#allocation9 + $0x48] sm:$0xff]
        %v303 = vld [vmem:[#allocation9 + $0x50] sm:$0xff]
        %v304 = vld [vmem:[#allocation9 + $0x58] sm:$0xff]
        %v305 = vld [vmem:[#allocation9 + $0x60] sm:$0xff]
        %v306 = vld [vmem:[#allocation9 + $0x68] sm:$0xff]
        %v307 = vld [vmem:[#allocation9 + $0x70] sm:$0xff]
        %v308 = vld [vmem:[#allocation9 + $0x78] sm:$0xff]
        %v309 = vld [vmem:[#allocation9 + $0x80] sm:$0xff]
        %v310 = vld [vmem:[#allocation9 + $0x88] sm:$0xff]
        %v311 = vld [vmem:[#allocation9 + $0x90] sm:$0xff]
        %v312 = vld [vmem:[#allocation9 + $0x98] sm:$0xff]
        %v313 = vld [vmem:[#allocation9 + $0xa0] sm:$0xff]
        %v314 = vld [vmem:[#allocation9 + $0xb0] sm:$0xff]
        %v315 = vld [vmem:[#allocation9 + $0xc0] sm:$0xff]
        %v316 = vld [vmem:[#allocation9 + $0xd0] sm:$0xff]
        %v317 = vld [vmem:[#allocation9 + $0xe0] sm:$0xff]
        %v318 = vld [vmem:[#allocation9 + $0xf0] sm:$0xff]
        %v319 = vld [vmem:[#allocation9 + $0x100] sm:$0xff]
        %v320 = vld [vmem:[#allocation9 + $0x110] sm:$0xff]
        %v321 = vld [vmem:[#allocation9 + $0x120] sm:$0xff]
        %v322 = vld [vmem:[#allocation9 + $0x130] sm:$0xff]
        %v323 = vld [vmem:[#allocation9 + $0x140] sm:$0xff]
        %v324 = vld [vmem:[#allocation9 + $0x150] sm:$0xff]
        %v325 = vld [vmem:[#allocation9 + $0x160] sm:$0xff]
        %v326 = vld [vmem:[#allocation9 + $0x170] sm:$0xff]
        %v327 = vld [vmem:[#allocation9 + $0x180] sm:$0xff]
        %v328 = vld [vmem:[#allocation9 + $0x190] sm:$0xff]
        %v329 = vld [vmem:[#allocation9 + $0x1a0] sm:$0xff]
        %v330 = vld [vmem:[#allocation9 + $0x1b0] sm:$0xff]
        %v331 = vld [vmem:[#allocation9 + $0x1c0] sm:$0xff]
        %v332 = vld [vmem:[#allocation9 + $0x1d0] sm:$0xff]
        %v333 = vld [vmem:[#allocation9 + $0x1e0] sm:$0xff]
        %v334 = vld [vmem:[#allocation9 + $0x1f0] sm:$0xff]
        %v335 = vld [vmem:[#allocation9 + $0x200] sm:$0xff]
        %v336 = vld [vmem:[#allocation9 + $0x210] sm:$0xff]
        %v337 = vld [vmem:[#allocation9 + $0x220] sm:$0xff]
        %v338 = vld [vmem:[#allocation9 + $0x230] sm:$0xff]
        %v339 = vld [vmem:[#allocation9 + $0x240] sm:$0xff]
        %v340 = vld [vmem:[#allocation9 + $0x250] sm:$0xff]
        %v341 = vld [vmem:[#allocation9 + $0x260] sm:$0xff]
        %v342 = vld [vmem:[#allocation9 + $0x270] sm:$0xff]
        %v343 = vld [vmem:[#allocation9 + $0x280] sm:$0xff]
        %v344 = vld [vmem:[#allocation9 + $0x290] sm:$0xff]
        %v345 = vld [vmem:[#allocation9 + $0x2a0] sm:$0xff]
        %v346 = vld [vmem:[#allocation9 + $0x2b0] sm:$0xff]
        %v347 = vld [vmem:[#allocation9 + $0x2c0] sm:$0xff]
        %v348 = vld [vmem:[#allocation9 + $0x2d0] sm:$0xff]
        %v349 = vld [vmem:[#allocation9 + $0x2e0] sm:$0xff]
        %v350 = vld [vmem:[#allocation9 + $0x2f0] sm:$0xff]
        %v351 = vld [vmem:[#allocation9 + $0x300] sm:$0xff]
        %v352 = vld [vmem:[#allocation9 + $0x308] sm:$0xff]
        %v353 = vld [vmem:[#allocation9 + $0x310] sm:$0xff]
        %v354 = vld [vmem:[#allocation9 + $0x318] sm:$0xff]
        %v355 = vld [vmem:[#allocation9 + $0x320] sm:$0xff]
        %v356 = vld [vmem:[#allocation9 + $0x328] sm:$0xff]
        %v357 = vld [vmem:[#allocation9 + $0x330] sm:$0xff]
        %v358 = vld [vmem:[#allocation9 + $0x338] sm:$0xff]
        %v359 = vld [vmem:[#allocation9 + $0x340] ss:$0 sm:$0xff]
        %v360 = vld [vmem:[#allocation9 + $0x350] ss:$0 sm:$0xff]
        %v361 = vld [vmem:[#allocation9 + $0x360] ss:$0 sm:$0xff]
        %v362 = vld [vmem:[#allocation9 + $0x370] ss:$0 sm:$0xff]
        %v363 = vld [vmem:[#allocation9 + $0x380] ss:$0 sm:$0xff]
        %v364 = vld [vmem:[#allocation9 + $0x390] ss:$0 sm:$0xff]
        %v365 = vld [vmem:[#allocation9 + $0x3a0] ss:$0 sm:$0xff]
        %v366 = vld [vmem:[#allocation9 + $0x3b0] ss:$0 sm:$0xff]
        %s367 = scalar_lea.vmem [#allocation9], 960
        %v368 = vld [vmem:[%s367] ss:$8 sm:$0x3]
        %s369 = scalar_lea.vmem [#allocation9], 976
        %v370 = vld [vmem:[%s369] ss:$8 sm:$0x3]
        %v371 = vlaneseq
        %v372 = vand.u32 %v371, 127
        %vm373 = vcmp.ge.s32.totalorder %v372, 16
        %vm374 = vcmp.lt.s32.totalorder %v372, 32
        %vm375 = vmand %vm373, %vm374
        %vm376 = vcmp.ge.s32.totalorder %v372, 48
        %vm377 = vmor %vm375, %vm376
        %v378 = vld [vmem:[#allocation2] sm:$0xff]
        %v379 = vld [vmem:[%s236] sm:$0xff]
        %v380 = vld [vmem:[%s245] sm:$0xff]
        %vm381 = vcmask 523264
        %v383 = vsel %vm381, %v378, 0
        %385 = vmatprep.subr.mxu0 0.0
        %386 = vmatpush1.msra.mxu0 0.0
        %387 = vmatprep.subr.mxu0 0.0
        %388 = vmatpush1.msra.mxu0 0.0
        %389 = vmatprep.subr.mxu0 0.0
        %390 = vmatpush1.msra.mxu0 0.0
        %391 = vmatprep.subr.mxu0 0.0
        %392 = vmatpush1.msra.mxu0 0.0
        %393 = vmatprep.subr.mxu0 0.0
        %394 = vmatpush1.msra.mxu0 0.0
        %395 = vmatprep.subr.mxu0 0.0
        %396 = vmatpush1.msra.mxu0 0.0
        %397 = vmatprep.subr.mxu0 0.0
        %398 = vmatpush1.msra.mxu0 0.0
        %399 = vmatprep.subr.mxu0 0.0
        %400 = vmatpush1.msra.mxu0 0.0
        %401 = vmatprep.subr.mxu0 %v308
        %402 = vmatpush1.msra.mxu0 %v307
        %403 = vmatprep.subr.mxu0 %v306
        %404 = vmatpush1.msra.mxu0 %v305
        %405 = vmatprep.subr.mxu0 %v304
        %406 = vmatpush1.msra.mxu0 %v303
        %407 = vmatprep.subr.mxu0 %v302
        %408 = vmatpush1.msra.mxu0 %v301
        %409 = vmatprep.subr.mxu0 %v300
        %410 = vmatpush1.msra.mxu0 %v299
        %411 = vmatprep.subr.mxu0 %v298
        %412 = vmatpush1.msra.mxu0 %v297
        %413 = vmatprep.subr.mxu0 %v296
        %414 = vmatpush1.msra.mxu0 %v295
        %415 = vmatprep.subr.mxu0 %v294
        %416 = vmatpush1.msra.mxu0 %v293
        %417 = vmatprep.subr.mxu0 0.0
        %418 = vmatpush2.msra.mxu0 0.0
        %419 = vmatprep.subr.mxu0 0.0
        %420 = vmatpush2.msra.mxu0 0.0
        %421 = vmatprep.subr.mxu0 0.0
        %422 = vmatpush2.msra.mxu0 0.0
        %423 = vmatprep.subr.mxu0 0.0
        %424 = vmatpush2.msra.mxu0 0.0
        %425 = vmatprep.subr.mxu0 0.0
        %426 = vmatpush2.msra.mxu0 0.0
        %427 = vmatprep.subr.mxu0 0.0
        %428 = vmatpush2.msra.mxu0 0.0
        %429 = vmatprep.subr.mxu0 0.0
        %430 = vmatpush2.msra.mxu0 0.0
        %431 = vmatprep.subr.mxu0 0.0
        %432 = vmatpush2.msra.mxu0 0.0
        %433 = vmatprep.subr.mxu0 0.0
        %434 = vmatpush2.msra.mxu0 0.0
        %435 = vmatprep.subr.mxu0 0.0
        %436 = vmatpush2.msra.mxu0 0.0
        %437 = vmatprep.subr.mxu0 0.0
        %438 = vmatpush2.msra.mxu0 0.0
        %439 = vmatprep.subr.mxu0 0.0
        %440 = vmatpush2.msra.mxu0 0.0
        %441 = vmatprep.subr.mxu0 0.0
        %442 = vmatpush2.msra.mxu0 0.0
        %443 = vmatprep.subr.mxu0 0.0
        %444 = vmatpush2.msra.mxu0 0.0
        %445 = vmatprep.subr.mxu0 0.0
        %446 = vmatpush2.msra.mxu0 0.0
        %447 = vmatprep.subr.mxu0 0.0
        %448 = vmatpush2.msra.mxu0 0.0
        %449 = vmatprep.mubr.f32.mxu0 0.0
        %450 = vmatmul.mubr.f32.gmra.mxu0 %v383
        %v451 = vpop.f32.mrf.mxu0
        %v452 = vadd.f32 0.0, %v451
        %v453 = vpop.f32.mrf.mxu0
        %v454 = vadd.f32 0.0, %v453
        %455 = vdwg.mxu0
        %vm456 = vcmask 130048
        %v458 = vsel %vm456, %v379, 0
        %460 = vmatprep.subr.mxu0 0.0
        %461 = vmatpush1.msra.mxu0 0.0
        %462 = vmatprep.subr.mxu0 0.0
        %463 = vmatpush1.msra.mxu0 0.0
        %464 = vmatprep.subr.mxu0 0.0
        %465 = vmatpush1.msra.mxu0 0.0
        %466 = vmatprep.subr.mxu0 0.0
        %467 = vmatpush1.msra.mxu0 0.0
        %468 = vmatprep.subr.mxu0 0.0
        %469 = vmatpush1.msra.mxu0 0.0
        %470 = vmatprep.subr.mxu0 0.0
        %471 = vmatpush1.msra.mxu0 0.0
        %472 = vmatprep.subr.mxu0 0.0
        %473 = vmatpush1.msra.mxu0 0.0
        %474 = vmatprep.subr.mxu0 0.0
        %475 = vmatpush1.msra.mxu0 0.0
        %476 = vmatprep.subr.mxu0 0.0
        %477 = vmatpush1.msra.mxu0 0.0
        %478 = vmatprep.subr.mxu0 0.0
        %479 = vmatpush1.msra.mxu0 0.0
        %480 = vmatprep.subr.mxu0 0.0
        %481 = vmatpush1.msra.mxu0 0.0
        %482 = vmatprep.subr.mxu0 0.0
        %483 = vmatpush1.msra.mxu0 0.0
        %484 = vmatprep.subr.mxu0 0.0
        %485 = vmatpush1.msra.mxu0 0.0
        %486 = vmatprep.subr.mxu0 0.0
        %487 = vmatpush1.msra.mxu0 0.0
        %488 = vmatprep.subr.mxu0 %v312
        %489 = vmatpush1.msra.mxu0 %v311
        %490 = vmatprep.subr.mxu0 %v310
        %491 = vmatpush1.msra.mxu0 %v309
        %492 = vmatprep.subr.mxu0 0.0
        %493 = vmatpush2.msra.mxu0 0.0
        %494 = vmatprep.subr.mxu0 0.0
        %495 = vmatpush2.msra.mxu0 0.0
        %496 = vmatprep.subr.mxu0 0.0
        %497 = vmatpush2.msra.mxu0 0.0
        %498 = vmatprep.subr.mxu0 0.0
        %499 = vmatpush2.msra.mxu0 0.0
        %500 = vmatprep.subr.mxu0 0.0
        %501 = vmatpush2.msra.mxu0 0.0
        %502 = vmatprep.subr.mxu0 0.0
        %503 = vmatpush2.msra.mxu0 0.0
        %504 = vmatprep.subr.mxu0 0.0
        %505 = vmatpush2.msra.mxu0 0.0
        %506 = vmatprep.subr.mxu0 0.0
        %507 = vmatpush2.msra.mxu0 0.0
        %508 = vmatprep.subr.mxu0 0.0
        %509 = vmatpush2.msra.mxu0 0.0
        %510 = vmatprep.subr.mxu0 0.0
        %511 = vmatpush2.msra.mxu0 0.0
        %512 = vmatprep.subr.mxu0 0.0
        %513 = vmatpush2.msra.mxu0 0.0
        %514 = vmatprep.subr.mxu0 0.0
        %515 = vmatpush2.msra.mxu0 0.0
        %516 = vmatprep.subr.mxu0 0.0
        %517 = vmatpush2.msra.mxu0 0.0
        %518 = vmatprep.subr.mxu0 0.0
        %519 = vmatpush2.msra.mxu0 0.0
        %520 = vmatprep.subr.mxu0 0.0
        %521 = vmatpush2.msra.mxu0 0.0
        %522 = vmatprep.subr.mxu0 0.0
        %523 = vmatpush2.msra.mxu0 0.0
        %524 = vmatprep.mubr.f32.mxu0 0.0
        %525 = vmatmul.mubr.f32.gmra.mxu0 %v458
        %v526 = vpop.f32.mrf.mxu0
        %v527 = vadd.f32 0.0, %v526
        %v528 = vpop.f32.mrf.mxu0
        %v529 = vadd.f32 0.0, %v528
        %530 = vdwg.mxu0
        %v531 = vadd.f32 %v452, %v527
        %v532 = vadd.f32 %v531, %v359
        %v533 = vmax.f32 %v532, 0.0
        %v535 = vlaneseq
        %v536 = vshrl.u32 %v535, 7
        %v537 = vsub.s32 0, %v536
        %v538 = vrot.slane %v370, %v537
        %v539 = vlaneseq
        %v540 = vshrl.u32 %v539, 7
        %v541 = vsub.s32 1, %v540
        %v542 = vrot.slane %v370, %v541
        %543 = vrot.lane.b32.xlu0 %v538, 64
        %v544 = vpop.permute.xlu0 %543
        %545 = vrot.lane.b32.xlu0 %v542, 64
        %v546 = vpop.permute.xlu0 %545
        %v547 = vsel %vm381, %v544, %v546
        %v550 = vadd.f32 %v452, %v544
        %v551 = vadd.f32 %v454, %v547
        %v553 = vlaneseq
        %v554 = vshrl.u32 %v553, 7
        %v555 = vsub.s32 0, %v554
        %v556 = vrot.slane %v368, %v555
        %v557 = vlaneseq
        %v558 = vshrl.u32 %v557, 7
        %v559 = vsub.s32 1, %v558
        %v560 = vrot.slane %v368, %v559
        %561 = vrot.lane.b32.xlu0 %v556, 64
        %v562 = vpop.permute.xlu0 %561
        %563 = vrot.lane.b32.xlu0 %v560, 64
        %v564 = vpop.permute.xlu0 %563
        %v565 = vsel %vm381, %v562, %v564
        %v568 = vadd.f32 %v527, %v562
        %v569 = vadd.f32 %v529, %v565
        %v571 = vsel %vm381, %v533, 0
        %573 = vmatprep.subr.mxu0 0.0
        %574 = vmatpush1.msra.mxu0 0.0
        %575 = vmatprep.subr.mxu0 0.0
        %576 = vmatpush1.msra.mxu0 0.0
        %577 = vmatprep.subr.mxu0 0.0
        %578 = vmatpush1.msra.mxu0 0.0
        %579 = vmatprep.subr.mxu0 0.0
        %580 = vmatpush1.msra.mxu0 0.0
        %581 = vmatprep.subr.mxu0 0.0
        %582 = vmatpush1.msra.mxu0 0.0
        %583 = vmatprep.subr.mxu0 0.0
        %584 = vmatpush1.msra.mxu0 0.0
        %585 = vmatprep.subr.mxu0 0.0
        %586 = vmatpush1.msra.mxu0 0.0
        %587 = vmatprep.subr.mxu0 0.0
        %588 = vmatpush1.msra.mxu0 0.0
        %589 = vmatprep.subr.mxu0 0.0
        %590 = vmatpush1.msra.mxu0 %v320
        %591 = vmatprep.subr.mxu0 0.0
        %592 = vmatpush1.msra.mxu0 %v319
        %593 = vmatprep.subr.mxu0 0.0
        %594 = vmatpush1.msra.mxu0 %v318
        %595 = vmatprep.subr.mxu0 0.0
        %596 = vmatpush1.msra.mxu0 %v317
        %597 = vmatprep.subr.mxu0 0.0
        %598 = vmatpush1.msra.mxu0 %v316
        %599 = vmatprep.subr.mxu0 0.0
        %600 = vmatpush1.msra.mxu0 %v315
        %601 = vmatprep.subr.mxu0 0.0
        %602 = vmatpush1.msra.mxu0 %v314
        %603 = vmatprep.subr.mxu0 0.0
        %604 = vmatpush1.msra.mxu0 %v313
        %605 = vmatprep.subr.mxu0 0.0
        %606 = vmatpush2.msra.mxu0 0.0
        %607 = vmatprep.subr.mxu0 0.0
        %608 = vmatpush2.msra.mxu0 0.0
        %609 = vmatprep.subr.mxu0 0.0
        %610 = vmatpush2.msra.mxu0 0.0
        %611 = vmatprep.subr.mxu0 0.0
        %612 = vmatpush2.msra.mxu0 0.0
        %613 = vmatprep.subr.mxu0 0.0
        %614 = vmatpush2.msra.mxu0 0.0
        %615 = vmatprep.subr.mxu0 0.0
        %616 = vmatpush2.msra.mxu0 0.0
        %617 = vmatprep.subr.mxu0 0.0
        %618 = vmatpush2.msra.mxu0 0.0
        %619 = vmatprep.subr.mxu0 0.0
        %620 = vmatpush2.msra.mxu0 0.0
        %621 = vmatprep.subr.mxu0 0.0
        %622 = vmatpush2.msra.mxu0 0.0
        %623 = vmatprep.subr.mxu0 0.0
        %624 = vmatpush2.msra.mxu0 0.0
        %625 = vmatprep.subr.mxu0 0.0
        %626 = vmatpush2.msra.mxu0 0.0
        %627 = vmatprep.subr.mxu0 0.0
        %628 = vmatpush2.msra.mxu0 0.0
        %629 = vmatprep.subr.mxu0 0.0
        %630 = vmatpush2.msra.mxu0 0.0
        %631 = vmatprep.subr.mxu0 0.0
        %632 = vmatpush2.msra.mxu0 0.0
        %633 = vmatprep.subr.mxu0 0.0
        %634 = vmatpush2.msra.mxu0 0.0
        %635 = vmatprep.subr.mxu0 0.0
        %636 = vmatpush2.msra.mxu0 0.0
        %637 = vmatprep.mubr.f32.mxu0 0.0
        %638 = vmatmul.mubr.f32.gmra.mxu0 %v571
        %v639 = vpop.f32.mrf.mxu0
        %v640 = vadd.f32 %v360, %v639
        %v641 = vpop.f32.mrf.mxu0
        %642 = vdwg.mxu0
        %v643 = vmax.f32 %v640, 0.0
        %v645 = vsel %vm381, %v643, 0
        %647 = vmatprep.subr.mxu0 0.0
        %648 = vmatpush1.msra.mxu0 0.0
        %649 = vmatprep.subr.mxu0 0.0
        %650 = vmatpush1.msra.mxu0 0.0
        %651 = vmatprep.subr.mxu0 0.0
        %652 = vmatpush1.msra.mxu0 0.0
        %653 = vmatprep.subr.mxu0 0.0
        %654 = vmatpush1.msra.mxu0 0.0
        %655 = vmatprep.subr.mxu0 0.0
        %656 = vmatpush1.msra.mxu0 0.0
        %657 = vmatprep.subr.mxu0 0.0
        %658 = vmatpush1.msra.mxu0 0.0
        %659 = vmatprep.subr.mxu0 0.0
        %660 = vmatpush1.msra.mxu0 0.0
        %661 = vmatprep.subr.mxu0 0.0
        %662 = vmatpush1.msra.mxu0 0.0
        %663 = vmatprep.subr.mxu0 0.0
        %664 = vmatpush1.msra.mxu0 %v328
        %665 = vmatprep.subr.mxu0 0.0
        %666 = vmatpush1.msra.mxu0 %v327
        %667 = vmatprep.subr.mxu0 0.0
        %668 = vmatpush1.msra.mxu0 %v326
        %669 = vmatprep.subr.mxu0 0.0
        %670 = vmatpush1.msra.mxu0 %v325
        %671 = vmatprep.subr.mxu0 0.0
        %672 = vmatpush1.msra.mxu0 %v324
        %673 = vmatprep.subr.mxu0 0.0
        %674 = vmatpush1.msra.mxu0 %v323
        %675 = vmatprep.subr.mxu0 0.0
        %676 = vmatpush1.msra.mxu0 %v322
        %677 = vmatprep.subr.mxu0 0.0
        %678 = vmatpush1.msra.mxu0 %v321
        %679 = vmatprep.subr.mxu0 0.0
        %680 = vmatpush2.msra.mxu0 0.0
        %681 = vmatprep.subr.mxu0 0.0
        %682 = vmatpush2.msra.mxu0 0.0
        %683 = vmatprep.subr.mxu0 0.0
        %684 = vmatpush2.msra.mxu0 0.0
        %685 = vmatprep.subr.mxu0 0.0
        %686 = vmatpush2.msra.mxu0 0.0
        %687 = vmatprep.subr.mxu0 0.0
        %688 = vmatpush2.msra.mxu0 0.0
        %689 = vmatprep.subr.mxu0 0.0
        %690 = vmatpush2.msra.mxu0 0.0
        %691 = vmatprep.subr.mxu0 0.0
        %692 = vmatpush2.msra.mxu0 0.0
        %693 = vmatprep.subr.mxu0 0.0
        %694 = vmatpush2.msra.mxu0 0.0
        %695 = vmatprep.subr.mxu0 0.0
        %696 = vmatpush2.msra.mxu0 0.0
        %697 = vmatprep.subr.mxu0 0.0
        %698 = vmatpush2.msra.mxu0 0.0
        %699 = vmatprep.subr.mxu0 0.0
        %700 = vmatpush2.msra.mxu0 0.0
        %701 = vmatprep.subr.mxu0 0.0
        %702 = vmatpush2.msra.mxu0 0.0
        %703 = vmatprep.subr.mxu0 0.0
        %704 = vmatpush2.msra.mxu0 0.0
        %705 = vmatprep.subr.mxu0 0.0
        %706 = vmatpush2.msra.mxu0 0.0
        %707 = vmatprep.subr.mxu0 0.0
        %708 = vmatpush2.msra.mxu0 0.0
        %709 = vmatprep.subr.mxu0 0.0
        %710 = vmatpush2.msra.mxu0 0.0
        %711 = vmatprep.mubr.f32.mxu0 0.0
        %712 = vmatmul.mubr.f32.gmra.mxu0 %v645
        %v713 = vpop.f32.mrf.mxu0
        %v714 = vadd.f32 %v361, %v713
        %v715 = vpop.f32.mrf.mxu0
        %716 = vdwg.mxu0
        %v717 = vmax.f32 %v714, 0.0
        %v719 = vsel %vm381, %v717, 0
        %721 = vmatprep.subr.mxu0 0.0
        %722 = vmatpush1.msra.mxu0 0.0
        %723 = vmatprep.subr.mxu0 0.0
        %724 = vmatpush1.msra.mxu0 0.0
        %725 = vmatprep.subr.mxu0 0.0
        %726 = vmatpush1.msra.mxu0 0.0
        %727 = vmatprep.subr.mxu0 0.0
        %728 = vmatpush1.msra.mxu0 0.0
        %729 = vmatprep.subr.mxu0 0.0
        %730 = vmatpush1.msra.mxu0 0.0
        %731 = vmatprep.subr.mxu0 0.0
        %732 = vmatpush1.msra.mxu0 0.0
        %733 = vmatprep.subr.mxu0 0.0
        %734 = vmatpush1.msra.mxu0 0.0
        %735 = vmatprep.subr.mxu0 0.0
        %736 = vmatpush1.msra.mxu0 0.0
        %737 = vmatprep.subr.mxu0 0.0
        %738 = vmatpush1.msra.mxu0 %v336
        %739 = vmatprep.subr.mxu0 0.0
        %740 = vmatpush1.msra.mxu0 %v335
        %741 = vmatprep.subr.mxu0 0.0
        %742 = vmatpush1.msra.mxu0 %v334
        %743 = vmatprep.subr.mxu0 0.0
        %744 = vmatpush1.msra.mxu0 %v333
        %745 = vmatprep.subr.mxu0 0.0
        %746 = vmatpush1.msra.mxu0 %v332
        %747 = vmatprep.subr.mxu0 0.0
        %748 = vmatpush1.msra.mxu0 %v331
        %749 = vmatprep.subr.mxu0 0.0
        %750 = vmatpush1.msra.mxu0 %v330
        %751 = vmatprep.subr.mxu0 0.0
        %752 = vmatpush1.msra.mxu0 %v329
        %753 = vmatprep.subr.mxu0 0.0
        %754 = vmatpush2.msra.mxu0 0.0
        %755 = vmatprep.subr.mxu0 0.0
        %756 = vmatpush2.msra.mxu0 0.0
        %757 = vmatprep.subr.mxu0 0.0
        %758 = vmatpush2.msra.mxu0 0.0
        %759 = vmatprep.subr.mxu0 0.0
        %760 = vmatpush2.msra.mxu0 0.0
        %761 = vmatprep.subr.mxu0 0.0
        %762 = vmatpush2.msra.mxu0 0.0
        %763 = vmatprep.subr.mxu0 0.0
        %764 = vmatpush2.msra.mxu0 0.0
        %765 = vmatprep.subr.mxu0 0.0
        %766 = vmatpush2.msra.mxu0 0.0
        %767 = vmatprep.subr.mxu0 0.0
        %768 = vmatpush2.msra.mxu0 0.0
        %769 = vmatprep.subr.mxu0 0.0
        %770 = vmatpush2.msra.mxu0 0.0
        %771 = vmatprep.subr.mxu0 0.0
        %772 = vmatpush2.msra.mxu0 0.0
        %773 = vmatprep.subr.mxu0 0.0
        %774 = vmatpush2.msra.mxu0 0.0
        %775 = vmatprep.subr.mxu0 0.0
        %776 = vmatpush2.msra.mxu0 0.0
        %777 = vmatprep.subr.mxu0 0.0
        %778 = vmatpush2.msra.mxu0 0.0
        %779 = vmatprep.subr.mxu0 0.0
        %780 = vmatpush2.msra.mxu0 0.0
        %781 = vmatprep.subr.mxu0 0.0
        %782 = vmatpush2.msra.mxu0 0.0
        %783 = vmatprep.subr.mxu0 0.0
        %784 = vmatpush2.msra.mxu0 0.0
        %785 = vmatprep.mubr.f32.mxu0 0.0
        %786 = vmatmul.mubr.f32.gmra.mxu0 %v719
        %v787 = vpop.f32.mrf.mxu0
        %v788 = vadd.f32 %v362, %v787
        %v789 = vpop.f32.mrf.mxu0
        %790 = vdwg.mxu0
        %v791 = vmax.f32 %v788, 0.0
        %vm792 = vcmp.ne.f32.partialorder %v788, %v788
        %v793 = vadd.f32 %v788, 0.0
        %v794 = vand.u32 2147483647, %v788
        %v795 = vsub.f32 0.0, %v794
        %v796 = vmul.f32 %v795, 1.442695
        %v797 = vpow.pop %v796
        %v798 = vadd.f32 %v797, 1.0
        %v799 = vlog2.pop %v798
        %v800 = vmul.f32 %v799, 0.6931472
        %v801 = vmul.f32 -0.5, %v797
        %v802 = vadd.f32 %v801, 1.0
        %v803 = vmul.f32 %v802, %v797
        %v804 = vand.u32 2147483647, %v797
        %vm805 = vcmp.lt.f32.partialorder %v804, 0.0004427343
        %v806 = vsel %vm805, %v803, %v800
        %v807 = vadd.f32 %v791, %v806
        %v808 = vsel %vm792, %v793, %v807
        %v809 = vsel %vm377, %v808, %v788
        %811 = vrot.lane.b32.xlu0 %v380, 48
        %v812 = vpop.permute.xlu0 %811
        %v814 = vmul.f32 %v809, %v812
        %816 = vrot.lane.b32.xlu0 %v814, 112
        %v817 = vpop.permute.xlu0 %816
        %v819 = vadd.f32 %v809, %v817
        %821 = vrot.lane.b32.xlu0 %v819, 96
        %v822 = vpop.permute.xlu0 %821
        %v823 = vsel %vm456, %v822, 0
        %825 = vmatprep.subr.mxu0 0.0
        %826 = vmatpush1.msra.mxu0 0.0
        %827 = vmatprep.subr.mxu0 0.0
        %828 = vmatpush1.msra.mxu0 0.0
        %829 = vmatprep.subr.mxu0 0.0
        %830 = vmatpush1.msra.mxu0 0.0
        %831 = vmatprep.subr.mxu0 0.0
        %832 = vmatpush1.msra.mxu0 0.0
        %833 = vmatprep.subr.mxu0 0.0
        %834 = vmatpush1.msra.mxu0 0.0
        %835 = vmatprep.subr.mxu0 0.0
        %836 = vmatpush1.msra.mxu0 0.0
        %837 = vmatprep.subr.mxu0 0.0
        %838 = vmatpush1.msra.mxu0 0.0
        %839 = vmatprep.subr.mxu0 0.0
        %840 = vmatpush1.msra.mxu0 0.0
        %841 = vmatprep.subr.mxu0 0.0
        %842 = vmatpush1.msra.mxu0 0.0
        %843 = vmatprep.subr.mxu0 0.0
        %844 = vmatpush1.msra.mxu0 0.0
        %845 = vmatprep.subr.mxu0 0.0
        %846 = vmatpush1.msra.mxu0 0.0
        %847 = vmatprep.subr.mxu0 0.0
        %848 = vmatpush1.msra.mxu0 0.0
        %849 = vmatprep.subr.mxu0 0.0
        %850 = vmatpush1.msra.mxu0 0.0
        %851 = vmatprep.subr.mxu0 0.0
        %852 = vmatpush1.msra.mxu0 0.0
        %853 = vmatprep.subr.mxu0 0.0
        %854 = vmatpush1.msra.mxu0 %v338
        %855 = vmatprep.subr.mxu0 0.0
        %856 = vmatpush1.msra.mxu0 %v337
        %857 = vmatprep.subr.mxu0 0.0
        %858 = vmatpush2.msra.mxu0 0.0
        %859 = vmatprep.subr.mxu0 0.0
        %860 = vmatpush2.msra.mxu0 0.0
        %861 = vmatprep.subr.mxu0 0.0
        %862 = vmatpush2.msra.mxu0 0.0
        %863 = vmatprep.subr.mxu0 0.0
        %864 = vmatpush2.msra.mxu0 0.0
        %865 = vmatprep.subr.mxu0 0.0
        %866 = vmatpush2.msra.mxu0 0.0
        %867 = vmatprep.subr.mxu0 0.0
        %868 = vmatpush2.msra.mxu0 0.0
        %869 = vmatprep.subr.mxu0 0.0
        %870 = vmatpush2.msra.mxu0 0.0
        %871 = vmatprep.subr.mxu0 0.0
        %872 = vmatpush2.msra.mxu0 0.0
        %873 = vmatprep.subr.mxu0 0.0
        %874 = vmatpush2.msra.mxu0 0.0
        %875 = vmatprep.subr.mxu0 0.0
        %876 = vmatpush2.msra.mxu0 0.0
        %877 = vmatprep.subr.mxu0 0.0
        %878 = vmatpush2.msra.mxu0 0.0
        %879 = vmatprep.subr.mxu0 0.0
        %880 = vmatpush2.msra.mxu0 0.0
        %881 = vmatprep.subr.mxu0 0.0
        %882 = vmatpush2.msra.mxu0 0.0
        %883 = vmatprep.subr.mxu0 0.0
        %884 = vmatpush2.msra.mxu0 0.0
        %885 = vmatprep.subr.mxu0 0.0
        %886 = vmatpush2.msra.mxu0 0.0
        %887 = vmatprep.subr.mxu0 0.0
        %888 = vmatpush2.msra.mxu0 0.0
        %889 = vmatprep.mubr.f32.mxu0 0.0
        %890 = vmatmul.mubr.f32.gmra.mxu0 %v823
        %v891 = vpop.f32.mrf.mxu0
        %v892 = vadd.f32 %v363, %v891
        %v893 = vpop.f32.mrf.mxu0
        %894 = vdwg.mxu0
        %v895 = vmax.f32 %v892, 0.0
        %vm896 = vcmask 261120
        %v898 = vsel %vm896, %v895, 0
        %900 = vmatprep.subr.mxu0 0.0
        %901 = vmatpush1.msra.mxu0 0.0
        %902 = vmatprep.subr.mxu0 0.0
        %903 = vmatpush1.msra.mxu0 0.0
        %904 = vmatprep.subr.mxu0 0.0
        %905 = vmatpush1.msra.mxu0 0.0
        %906 = vmatprep.subr.mxu0 0.0
        %907 = vmatpush1.msra.mxu0 0.0
        %908 = vmatprep.subr.mxu0 0.0
        %909 = vmatpush1.msra.mxu0 0.0
        %910 = vmatprep.subr.mxu0 0.0
        %911 = vmatpush1.msra.mxu0 0.0
        %912 = vmatprep.subr.mxu0 0.0
        %913 = vmatpush1.msra.mxu0 0.0
        %914 = vmatprep.subr.mxu0 0.0
        %915 = vmatpush1.msra.mxu0 0.0
        %916 = vmatprep.subr.mxu0 0.0
        %917 = vmatpush1.msra.mxu0 0.0
        %918 = vmatprep.subr.mxu0 0.0
        %919 = vmatpush1.msra.mxu0 0.0
        %920 = vmatprep.subr.mxu0 0.0
        %921 = vmatpush1.msra.mxu0 0.0
        %922 = vmatprep.subr.mxu0 0.0
        %923 = vmatpush1.msra.mxu0 0.0
        %924 = vmatprep.subr.mxu0 0.0
        %925 = vmatpush1.msra.mxu0 %v342
        %926 = vmatprep.subr.mxu0 0.0
        %927 = vmatpush1.msra.mxu0 %v341
        %928 = vmatprep.subr.mxu0 0.0
        %929 = vmatpush1.msra.mxu0 %v340
        %930 = vmatprep.subr.mxu0 0.0
        %931 = vmatpush1.msra.mxu0 %v339
        %932 = vmatprep.subr.mxu0 0.0
        %933 = vmatpush2.msra.mxu0 0.0
        %934 = vmatprep.subr.mxu0 0.0
        %935 = vmatpush2.msra.mxu0 0.0
        %936 = vmatprep.subr.mxu0 0.0
        %937 = vmatpush2.msra.mxu0 0.0
        %938 = vmatprep.subr.mxu0 0.0
        %939 = vmatpush2.msra.mxu0 0.0
        %940 = vmatprep.subr.mxu0 0.0
        %941 = vmatpush2.msra.mxu0 0.0
        %942 = vmatprep.subr.mxu0 0.0
        %943 = vmatpush2.msra.mxu0 0.0
        %944 = vmatprep.subr.mxu0 0.0
        %945 = vmatpush2.msra.mxu0 0.0
        %946 = vmatprep.subr.mxu0 0.0
        %947 = vmatpush2.msra.mxu0 0.0
        %948 = vmatprep.subr.mxu0 0.0
        %949 = vmatpush2.msra.mxu0 0.0
        %950 = vmatprep.subr.mxu0 0.0
        %951 = vmatpush2.msra.mxu0 0.0
        %952 = vmatprep.subr.mxu0 0.0
        %953 = vmatpush2.msra.mxu0 0.0
        %954 = vmatprep.subr.mxu0 0.0
        %955 = vmatpush2.msra.mxu0 0.0
        %956 = vmatprep.subr.mxu0 0.0
        %957 = vmatpush2.msra.mxu0 0.0
        %958 = vmatprep.subr.mxu0 0.0
        %959 = vmatpush2.msra.mxu0 0.0
        %960 = vmatprep.subr.mxu0 0.0
        %961 = vmatpush2.msra.mxu0 0.0
        %962 = vmatprep.subr.mxu0 0.0
        %963 = vmatpush2.msra.mxu0 0.0
        %964 = vmatprep.mubr.f32.mxu0 0.0
        %965 = vmatmul.mubr.f32.gmra.mxu0 %v898
        %v966 = vpop.f32.mrf.mxu0
        %v967 = vadd.f32 %v364, %v966
        %v968 = vpop.f32.mrf.mxu0
        %969 = vdwg.mxu0
        %v970 = vmax.f32 %v967, 0.0
        %v972 = vsel %vm896, %v970, 0
        %974 = vmatprep.subr.mxu0 0.0
        %975 = vmatpush1.msra.mxu0 0.0
        %976 = vmatprep.subr.mxu0 0.0
        %977 = vmatpush1.msra.mxu0 0.0
        %978 = vmatprep.subr.mxu0 0.0
        %979 = vmatpush1.msra.mxu0 0.0
        %980 = vmatprep.subr.mxu0 0.0
        %981 = vmatpush1.msra.mxu0 0.0
        %982 = vmatprep.subr.mxu0 0.0
        %983 = vmatpush1.msra.mxu0 0.0
        %984 = vmatprep.subr.mxu0 0.0
        %985 = vmatpush1.msra.mxu0 0.0
        %986 = vmatprep.subr.mxu0 0.0
        %987 = vmatpush1.msra.mxu0 0.0
        %988 = vmatprep.subr.mxu0 0.0
        %989 = vmatpush1.msra.mxu0 0.0
        %990 = vmatprep.subr.mxu0 0.0
        %991 = vmatpush1.msra.mxu0 0.0
        %992 = vmatprep.subr.mxu0 0.0
        %993 = vmatpush1.msra.mxu0 0.0
        %994 = vmatprep.subr.mxu0 0.0
        %995 = vmatpush1.msra.mxu0 0.0
        %996 = vmatprep.subr.mxu0 0.0
        %997 = vmatpush1.msra.mxu0 0.0
        %998 = vmatprep.subr.mxu0 0.0
        %999 = vmatpush1.msra.mxu0 %v346
        %1000 = vmatprep.subr.mxu0 0.0
        %1001 = vmatpush1.msra.mxu0 %v345
        %1002 = vmatprep.subr.mxu0 0.0
        %1003 = vmatpush1.msra.mxu0 %v344
        %1004 = vmatprep.subr.mxu0 0.0
        %1005 = vmatpush1.msra.mxu0 %v343
        %1006 = vmatprep.subr.mxu0 0.0
        %1007 = vmatpush2.msra.mxu0 0.0
        %1008 = vmatprep.subr.mxu0 0.0
        %1009 = vmatpush2.msra.mxu0 0.0
        %1010 = vmatprep.subr.mxu0 0.0
        %1011 = vmatpush2.msra.mxu0 0.0
        %1012 = vmatprep.subr.mxu0 0.0
        %1013 = vmatpush2.msra.mxu0 0.0
        %1014 = vmatprep.subr.mxu0 0.0
        %1015 = vmatpush2.msra.mxu0 0.0
        %1016 = vmatprep.subr.mxu0 0.0
        %1017 = vmatpush2.msra.mxu0 0.0
        %1018 = vmatprep.subr.mxu0 0.0
        %1019 = vmatpush2.msra.mxu0 0.0
        %1020 = vmatprep.subr.mxu0 0.0
        %1021 = vmatpush2.msra.mxu0 0.0
        %1022 = vmatprep.subr.mxu0 0.0
        %1023 = vmatpush2.msra.mxu0 0.0
        %1024 = vmatprep.subr.mxu0 0.0
        %1025 = vmatpush2.msra.mxu0 0.0
        %1026 = vmatprep.subr.mxu0 0.0
        %1027 = vmatpush2.msra.mxu0 0.0
        %1028 = vmatprep.subr.mxu0 0.0
        %1029 = vmatpush2.msra.mxu0 0.0
        %1030 = vmatprep.subr.mxu0 0.0
        %1031 = vmatpush2.msra.mxu0 0.0
        %1032 = vmatprep.subr.mxu0 0.0
        %1033 = vmatpush2.msra.mxu0 0.0
        %1034 = vmatprep.subr.mxu0 0.0
        %1035 = vmatpush2.msra.mxu0 0.0
        %1036 = vmatprep.subr.mxu0 0.0
        %1037 = vmatpush2.msra.mxu0 0.0
        %1038 = vmatprep.mubr.f32.mxu0 0.0
        %1039 = vmatmul.mubr.f32.gmra.mxu0 %v972
        %v1040 = vpop.f32.mrf.mxu0
        %v1041 = vadd.f32 %v365, %v1040
        %v1042 = vpop.f32.mrf.mxu0
        %1043 = vdwg.mxu0
        %v1044 = vmax.f32 %v1041, 0.0
        %v1046 = vsel %vm896, %v1044, 0
        %1048 = vmatprep.subr.mxu0 0.0
        %1049 = vmatpush1.msra.mxu0 0.0
        %1050 = vmatprep.subr.mxu0 0.0
        %1051 = vmatpush1.msra.mxu0 0.0
        %1052 = vmatprep.subr.mxu0 0.0
        %1053 = vmatpush1.msra.mxu0 0.0
        %1054 = vmatprep.subr.mxu0 0.0
        %1055 = vmatpush1.msra.mxu0 0.0
        %1056 = vmatprep.subr.mxu0 0.0
        %1057 = vmatpush1.msra.mxu0 0.0
        %1058 = vmatprep.subr.mxu0 0.0
        %1059 = vmatpush1.msra.mxu0 0.0
        %1060 = vmatprep.subr.mxu0 0.0
        %1061 = vmatpush1.msra.mxu0 0.0
        %1062 = vmatprep.subr.mxu0 0.0
        %1063 = vmatpush1.msra.mxu0 0.0
        %1064 = vmatprep.subr.mxu0 0.0
        %1065 = vmatpush1.msra.mxu0 0.0
        %1066 = vmatprep.subr.mxu0 0.0
        %1067 = vmatpush1.msra.mxu0 0.0
        %1068 = vmatprep.subr.mxu0 0.0
        %1069 = vmatpush1.msra.mxu0 0.0
        %1070 = vmatprep.subr.mxu0 0.0
        %1071 = vmatpush1.msra.mxu0 0.0
        %1072 = vmatprep.subr.mxu0 0.0
        %1073 = vmatpush1.msra.mxu0 %v350
        %1074 = vmatprep.subr.mxu0 0.0
        %1075 = vmatpush1.msra.mxu0 %v349
        %1076 = vmatprep.subr.mxu0 0.0
        %1077 = vmatpush1.msra.mxu0 %v348
        %1078 = vmatprep.subr.mxu0 0.0
        %1079 = vmatpush1.msra.mxu0 %v347
        %1080 = vmatprep.subr.mxu0 0.0
        %1081 = vmatpush2.msra.mxu0 0.0
        %1082 = vmatprep.subr.mxu0 0.0
        %1083 = vmatpush2.msra.mxu0 0.0
        %1084 = vmatprep.subr.mxu0 0.0
        %1085 = vmatpush2.msra.mxu0 0.0
        %1086 = vmatprep.subr.mxu0 0.0
        %1087 = vmatpush2.msra.mxu0 0.0
        %1088 = vmatprep.subr.mxu0 0.0
        %1089 = vmatpush2.msra.mxu0 0.0
        %1090 = vmatprep.subr.mxu0 0.0
        %1091 = vmatpush2.msra.mxu0 0.0
        %1092 = vmatprep.subr.mxu0 0.0
        %1093 = vmatpush2.msra.mxu0 0.0
        %1094 = vmatprep.subr.mxu0 0.0
        %1095 = vmatpush2.msra.mxu0 0.0
        %1096 = vmatprep.subr.mxu0 0.0
        %1097 = vmatpush2.msra.mxu0 0.0
        %1098 = vmatprep.subr.mxu0 0.0
        %1099 = vmatpush2.msra.mxu0 0.0
        %1100 = vmatprep.subr.mxu0 0.0
        %1101 = vmatpush2.msra.mxu0 0.0
        %1102 = vmatprep.subr.mxu0 0.0
        %1103 = vmatpush2.msra.mxu0 0.0
        %1104 = vmatprep.subr.mxu0 0.0
        %1105 = vmatpush2.msra.mxu0 0.0
        %1106 = vmatprep.subr.mxu0 0.0
        %1107 = vmatpush2.msra.mxu0 0.0
        %1108 = vmatprep.subr.mxu0 0.0
        %1109 = vmatpush2.msra.mxu0 0.0
        %1110 = vmatprep.subr.mxu0 0.0
        %1111 = vmatpush2.msra.mxu0 0.0
        %1112 = vmatprep.mubr.f32.mxu0 0.0
        %1113 = vmatmul.mubr.f32.gmra.mxu0 %v1046
        %v1114 = vpop.f32.mrf.mxu0
        %v1115 = vadd.f32 %v366, %v1114
        %v1116 = vpop.f32.mrf.mxu0
        %1117 = vdwg.mxu0
        %v1118 = vmax.f32 %v1115, 0.0
        %v1120 = vsel %vm896, %v1118, 0
        %1122 = vmatprep.subr.mxu0 0.0
        %1123 = vmatpush1.msra.mxu0 0.0
        %1124 = vmatprep.subr.mxu0 0.0
        %1125 = vmatpush1.msra.mxu0 0.0
        %1126 = vmatprep.subr.mxu0 0.0
        %1127 = vmatpush1.msra.mxu0 0.0
        %1128 = vmatprep.subr.mxu0 0.0
        %1129 = vmatpush1.msra.mxu0 0.0
        %1130 = vmatprep.subr.mxu0 0.0
        %1131 = vmatpush1.msra.mxu0 0.0
        %1132 = vmatprep.subr.mxu0 0.0
        %1133 = vmatpush1.msra.mxu0 0.0
        %1134 = vmatprep.subr.mxu0 0.0
        %1135 = vmatpush1.msra.mxu0 0.0
        %1136 = vmatprep.subr.mxu0 0.0
        %1137 = vmatpush1.msra.mxu0 0.0
        %1138 = vmatprep.subr.mxu0 0.0
        %1139 = vmatpush1.msra.mxu0 0.0
        %1140 = vmatprep.subr.mxu0 0.0
        %1141 = vmatpush1.msra.mxu0 0.0
        %1142 = vmatprep.subr.mxu0 0.0
        %1143 = vmatpush1.msra.mxu0 0.0
        %1144 = vmatprep.subr.mxu0 0.0
        %1145 = vmatpush1.msra.mxu0 0.0
        %1146 = vmatprep.subr.mxu0 %v358
        %1147 = vmatpush1.msra.mxu0 %v357
        %1148 = vmatprep.subr.mxu0 %v356
        %1149 = vmatpush1.msra.mxu0 %v355
        %1150 = vmatprep.subr.mxu0 %v354
        %1151 = vmatpush1.msra.mxu0 %v353
        %1152 = vmatprep.subr.mxu0 %v352
        %1153 = vmatpush1.msra.mxu0 %v351
        %1154 = vmatprep.subr.mxu0 0.0
        %1155 = vmatpush2.msra.mxu0 0.0
        %1156 = vmatprep.subr.mxu0 0.0
        %1157 = vmatpush2.msra.mxu0 0.0
        %1158 = vmatprep.subr.mxu0 0.0
        %1159 = vmatpush2.msra.mxu0 0.0
        %1160 = vmatprep.subr.mxu0 0.0
        %1161 = vmatpush2.msra.mxu0 0.0
        %1162 = vmatprep.subr.mxu0 0.0
        %1163 = vmatpush2.msra.mxu0 0.0
        %1164 = vmatprep.subr.mxu0 0.0
        %1165 = vmatpush2.msra.mxu0 0.0
        %1166 = vmatprep.subr.mxu0 0.0
        %1167 = vmatpush2.msra.mxu0 0.0
        %1168 = vmatprep.subr.mxu0 0.0
        %1169 = vmatpush2.msra.mxu0 0.0
        %1170 = vmatprep.subr.mxu0 0.0
        %1171 = vmatpush2.msra.mxu0 0.0
        %1172 = vmatprep.subr.mxu0 0.0
        %1173 = vmatpush2.msra.mxu0 0.0
        %1174 = vmatprep.subr.mxu0 0.0
        %1175 = vmatpush2.msra.mxu0 0.0
        %1176 = vmatprep.subr.mxu0 0.0
        %1177 = vmatpush2.msra.mxu0 0.0
        %1178 = vmatprep.subr.mxu0 0.0
        %1179 = vmatpush2.msra.mxu0 0.0
        %1180 = vmatprep.subr.mxu0 0.0
        %1181 = vmatpush2.msra.mxu0 0.0
        %1182 = vmatprep.subr.mxu0 0.0
        %1183 = vmatpush2.msra.mxu0 0.0
        %1184 = vmatprep.subr.mxu0 0.0
        %1185 = vmatpush2.msra.mxu0 0.0
        %1186 = vmatprep.mubr.f32.mxu0 0.0
        %1187 = vmatmul.mubr.f32.gmra.mxu0 %v1120
        %v1188 = vpop.f32.mrf.mxu0
        %v1189 = vadd.f32 0.0, %v1188
        %v1190 = vpop.f32.mrf.mxu0
        %v1191 = vadd.f32 0.0, %v1190
        %1192 = vdwg.mxu0
        %1195 = vrot.lane.b32.xlu0 %v1189, 64
        %v1196 = vpop.permute.xlu0 %1195
        %1197 = vrot.lane.b32.xlu0 %v1191, 64
        %v1198 = vpop.permute.xlu0 %1197
        %v1199 = vsel %vm381, %v1196, %v1198
        %v1202 = vadd.f32 %v568, %v1196
        %v1203 = vadd.f32 %v569, %v1199
        %v1204 = vadd.f32 %v1202, %v550
        %v1205 = vadd.f32 %v1203, %v551
        %v1206 = vxor.u32 %v1204, 2147483648
        %v1207 = vxor.u32 %v1205, 2147483648
        %v1208 = vmul.f32 %v1206, 1.442695
        %v1209 = vpow.pop %v1208
        %v1210 = vmul.f32 %v1207, 1.442695
        %v1211 = vpow.pop %v1210
        %v1212 = vadd.f32 %v1209, 1.0
        %v1213 = vadd.f32 %v1211, 1.0
        %v1214 = vrcp.pop %v1212
        %v1215 = vmul.f32 1.0, %v1214
        %v1216 = vrcp.pop %v1213
        %v1217 = vmul.f32 1.0, %v1216
        %v1218 = vmul.f32 %v1215, %v551
        %v1219 = vadd.f32 %v1203, %v1218
        %v1220 = vtanh.pop %v1219
        %v1221 = vsub.f32 1.0, %v1217
        %1223 = vrot.lane.b32.xlu0 %v1220, 64
        %v1224 = vpop.permute.xlu0 %1223
        %v1226 = vmul.f32 %v1221, %v1224
        %v1227 = vmul.f32 %v1217, %v378
        %v1228 = vadd.f32 %v1226, %v1227
        %1229 = vst.msk [vmem:[%s282] sm:$0xff] %vm381, %v809
        %1231 = vrot.lane.b32.xlu0 %v1228, 64
        %v1232 = vpop.permute.xlu0 %1231
        %vm1234 = vcmask 1048064
        %1235 = vst.msk [vmem:[%s282] sm:$0xff] %vm1234, %v1232
        %1236 = vst.msk [vmem:[%s282 + $0x8] sm:$0xff] %vm896, %v1118
        %vm1237 = vcmask 392448
        %1238 = vst.msk [vmem:[%s282 + $0x8] sm:$0xff] %vm1237, %v819
        %s1239 = scalar_lea.vmem %s236, 8 [#allocation3]
        %v1240 = vld [vmem:[%s1239] sm:$0xff]
        %s1241 = scalar_lea.vmem %s245, 8 [#allocation6]
        %v1242 = vld [vmem:[%s1241] sm:$0xff]
        %v1243 = vsel %vm381, %v1228, 0
        %1245 = vmatprep.subr.mxu0 0.0
        %1246 = vmatpush1.msra.mxu0 0.0
        %1247 = vmatprep.subr.mxu0 0.0
        %1248 = vmatpush1.msra.mxu0 0.0
        %1249 = vmatprep.subr.mxu0 0.0
        %1250 = vmatpush1.msra.mxu0 0.0
        %1251 = vmatprep.subr.mxu0 0.0
        %1252 = vmatpush1.msra.mxu0 0.0
        %1253 = vmatprep.subr.mxu0 0.0
        %1254 = vmatpush1.msra.mxu0 0.0
        %1255 = vmatprep.subr.mxu0 0.0
        %1256 = vmatpush1.msra.mxu0 0.0
        %1257 = vmatprep.subr.mxu0 0.0
        %1258 = vmatpush1.msra.mxu0 0.0
        %1259 = vmatprep.subr.mxu0 0.0
        %1260 = vmatpush1.msra.mxu0 0.0
        %1261 = vmatprep.subr.mxu0 %v308
        %1262 = vmatpush1.msra.mxu0 %v307
        %1263 = vmatprep.subr.mxu0 %v306
        %1264 = vmatpush1.msra.mxu0 %v305
        %1265 = vmatprep.subr.mxu0 %v304
        %1266 = vmatpush1.msra.mxu0 %v303
        %1267 = vmatprep.subr.mxu0 %v302
        %1268 = vmatpush1.msra.mxu0 %v301
        %1269 = vmatprep.subr.mxu0 %v300
        %1270 = vmatpush1.msra.mxu0 %v299
        %1271 = vmatprep.subr.mxu0 %v298
        %1272 = vmatpush1.msra.mxu0 %v297
        %1273 = vmatprep.subr.mxu0 %v296
        %1274 = vmatpush1.msra.mxu0 %v295
        %1275 = vmatprep.subr.mxu0 %v294
        %1276 = vmatpush1.msra.mxu0 %v293
        %1277 = vmatprep.subr.mxu0 0.0
        %1278 = vmatpush2.msra.mxu0 0.0
        %1279 = vmatprep.subr.mxu0 0.0
        %1280 = vmatpush2.msra.mxu0 0.0
        %1281 = vmatprep.subr.mxu0 0.0
        %1282 = vmatpush2.msra.mxu0 0.0
        %1283 = vmatprep.subr.mxu0 0.0
        %1284 = vmatpush2.msra.mxu0 0.0
        %1285 = vmatprep.subr.mxu0 0.0
        %1286 = vmatpush2.msra.mxu0 0.0
        %1287 = vmatprep.subr.mxu0 0.0
        %1288 = vmatpush2.msra.mxu0 0.0
        %1289 = vmatprep.subr.mxu0 0.0
        %1290 = vmatpush2.msra.mxu0 0.0
        %1291 = vmatprep.subr.mxu0 0.0
        %1292 = vmatpush2.msra.mxu0 0.0
        %1293 = vmatprep.subr.mxu0 0.0
        %1294 = vmatpush2.msra.mxu0 0.0
        %1295 = vmatprep.subr.mxu0 0.0
        %1296 = vmatpush2.msra.mxu0 0.0
        %1297 = vmatprep.subr.mxu0 0.0
        %1298 = vmatpush2.msra.mxu0 0.0
        %1299 = vmatprep.subr.mxu0 0.0
        %1300 = vmatpush2.msra.mxu0 0.0
        %1301 = vmatprep.subr.mxu0 0.0
        %1302 = vmatpush2.msra.mxu0 0.0
        %1303 = vmatprep.subr.mxu0 0.0
        %1304 = vmatpush2.msra.mxu0 0.0
        %1305 = vmatprep.subr.mxu0 0.0
        %1306 = vmatpush2.msra.mxu0 0.0
        %1307 = vmatprep.subr.mxu0 0.0
        %1308 = vmatpush2.msra.mxu0 0.0
        %1309 = vmatprep.mubr.f32.mxu0 0.0
        %1310 = vmatmul.mubr.f32.gmra.mxu0 %v1243
        %v1311 = vpop.f32.mrf.mxu0
        %v1312 = vadd.f32 0.0, %v1311
        %v1313 = vpop.f32.mrf.mxu0
        %v1314 = vadd.f32 0.0, %v1313
        %1315 = vdwg.mxu0
        %v1317 = vsel %vm456, %v1240, 0
        %1319 = vmatprep.subr.mxu0 0.0
        %1320 = vmatpush1.msra.mxu0 0.0
        %1321 = vmatprep.subr.mxu0 0.0
        %1322 = vmatpush1.msra.mxu0 0.0
        %1323 = vmatprep.subr.mxu0 0.0
        %1324 = vmatpush1.msra.mxu0 0.0
        %1325 = vmatprep.subr.mxu0 0.0
        %1326 = vmatpush1.msra.mxu0 0.0
        %1327 = vmatprep.subr.mxu0 0.0
        %1328 = vmatpush1.msra.mxu0 0.0
        %1329 = vmatprep.subr.mxu0 0.0
        %1330 = vmatpush1.msra.mxu0 0.0
        %1331 = vmatprep.subr.mxu0 0.0
        %1332 = vmatpush1.msra.mxu0 0.0
        %1333 = vmatprep.subr.mxu0 0.0
        %1334 = vmatpush1.msra.mxu0 0.0
        %1335 = vmatprep.subr.mxu0 0.0
        %1336 = vmatpush1.msra.mxu0 0.0
        %1337 = vmatprep.subr.mxu0 0.0
        %1338 = vmatpush1.msra.mxu0 0.0
        %1339 = vmatprep.subr.mxu0 0.0
        %1340 = vmatpush1.msra.mxu0 0.0
        %1341 = vmatprep.subr.mxu0 0.0
        %1342 = vmatpush1.msra.mxu0 0.0
        %1343 = vmatprep.subr.mxu0 0.0
        %1344 = vmatpush1.msra.mxu0 0.0
        %1345 = vmatprep.subr.mxu0 0.0
        %1346 = vmatpush1.msra.mxu0 0.0
        %1347 = vmatprep.subr.mxu0 %v312
        %1348 = vmatpush1.msra.mxu0 %v311
        %1349 = vmatprep.subr.mxu0 %v310
        %1350 = vmatpush1.msra.mxu0 %v309
        %1351 = vmatprep.subr.mxu0 0.0
        %1352 = vmatpush2.msra.mxu0 0.0
        %1353 = vmatprep.subr.mxu0 0.0
        %1354 = vmatpush2.msra.mxu0 0.0
        %1355 = vmatprep.subr.mxu0 0.0
        %1356 = vmatpush2.msra.mxu0 0.0
        %1357 = vmatprep.subr.mxu0 0.0
        %1358 = vmatpush2.msra.mxu0 0.0
        %1359 = vmatprep.subr.mxu0 0.0
        %1360 = vmatpush2.msra.mxu0 0.0
        %1361 = vmatprep.subr.mxu0 0.0
        %1362 = vmatpush2.msra.mxu0 0.0
        %1363 = vmatprep.subr.mxu0 0.0
        %1364 = vmatpush2.msra.mxu0 0.0
        %1365 = vmatprep.subr.mxu0 0.0
        %1366 = vmatpush2.msra.mxu0 0.0
        %1367 = vmatprep.subr.mxu0 0.0
        %1368 = vmatpush2.msra.mxu0 0.0
        %1369 = vmatprep.subr.mxu0 0.0
        %1370 = vmatpush2.msra.mxu0 0.0
        %1371 = vmatprep.subr.mxu0 0.0
        %1372 = vmatpush2.msra.mxu0 0.0
        %1373 = vmatprep.subr.mxu0 0.0
        %1374 = vmatpush2.msra.mxu0 0.0
        %1375 = vmatprep.subr.mxu0 0.0
        %1376 = vmatpush2.msra.mxu0 0.0
        %1377 = vmatprep.subr.mxu0 0.0
        %1378 = vmatpush2.msra.mxu0 0.0
        %1379 = vmatprep.subr.mxu0 0.0
        %1380 = vmatpush2.msra.mxu0 0.0
        %1381 = vmatprep.subr.mxu0 0.0
        %1382 = vmatpush2.msra.mxu0 0.0
        %1383 = vmatprep.mubr.f32.mxu0 0.0
        %1384 = vmatmul.mubr.f32.gmra.mxu0 %v1317
        %v1385 = vpop.f32.mrf.mxu0
        %v1386 = vadd.f32 0.0, %v1385
        %v1387 = vpop.f32.mrf.mxu0
        %v1388 = vadd.f32 0.0, %v1387
        %1389 = vdwg.mxu0
        %v1390 = vadd.f32 %v1312, %v1386
        %v1391 = vadd.f32 %v1390, %v359
        %v1392 = vmax.f32 %v1391, 0.0
        %v1393 = vadd.f32 %v1312, %v544
        %v1394 = vadd.f32 %v1314, %v547
        %v1395 = vadd.f32 %v1386, %v562
        %v1396 = vadd.f32 %v1388, %v565
        %v1398 = vsel %vm381, %v1392, 0
        %1400 = vmatprep.subr.mxu0 0.0
        %1401 = vmatpush1.msra.mxu0 0.0
        %1402 = vmatprep.subr.mxu0 0.0
        %1403 = vmatpush1.msra.mxu0 0.0
        %1404 = vmatprep.subr.mxu0 0.0
        %1405 = vmatpush1.msra.mxu0 0.0
        %1406 = vmatprep.subr.mxu0 0.0
        %1407 = vmatpush1.msra.mxu0 0.0
        %1408 = vmatprep.subr.mxu0 0.0
        %1409 = vmatpush1.msra.mxu0 0.0
        %1410 = vmatprep.subr.mxu0 0.0
        %1411 = vmatpush1.msra.mxu0 0.0
        %1412 = vmatprep.subr.mxu0 0.0
        %1413 = vmatpush1.msra.mxu0 0.0
        %1414 = vmatprep.subr.mxu0 0.0
        %1415 = vmatpush1.msra.mxu0 0.0
        %1416 = vmatprep.subr.mxu0 0.0
        %1417 = vmatpush1.msra.mxu0 %v320
        %1418 = vmatprep.subr.mxu0 0.0
        %1419 = vmatpush1.msra.mxu0 %v319
        %1420 = vmatprep.subr.mxu0 0.0
        %1421 = vmatpush1.msra.mxu0 %v318
        %1422 = vmatprep.subr.mxu0 0.0
        %1423 = vmatpush1.msra.mxu0 %v317
        %1424 = vmatprep.subr.mxu0 0.0
        %1425 = vmatpush1.msra.mxu0 %v316
        %1426 = vmatprep.subr.mxu0 0.0
        %1427 = vmatpush1.msra.mxu0 %v315
        %1428 = vmatprep.subr.mxu0 0.0
        %1429 = vmatpush1.msra.mxu0 %v314
        %1430 = vmatprep.subr.mxu0 0.0
        %1431 = vmatpush1.msra.mxu0 %v313
        %1432 = vmatprep.subr.mxu0 0.0
        %1433 = vmatpush2.msra.mxu0 0.0
        %1434 = vmatprep.subr.mxu0 0.0
        %1435 = vmatpush2.msra.mxu0 0.0
        %1436 = vmatprep.subr.mxu0 0.0
        %1437 = vmatpush2.msra.mxu0 0.0
        %1438 = vmatprep.subr.mxu0 0.0
        %1439 = vmatpush2.msra.mxu0 0.0
        %1440 = vmatprep.subr.mxu0 0.0
        %1441 = vmatpush2.msra.mxu0 0.0
        %1442 = vmatprep.subr.mxu0 0.0
        %1443 = vmatpush2.msra.mxu0 0.0
        %1444 = vmatprep.subr.mxu0 0.0
        %1445 = vmatpush2.msra.mxu0 0.0
        %1446 = vmatprep.subr.mxu0 0.0
        %1447 = vmatpush2.msra.mxu0 0.0
        %1448 = vmatprep.subr.mxu0 0.0
        %1449 = vmatpush2.msra.mxu0 0.0
        %1450 = vmatprep.subr.mxu0 0.0
        %1451 = vmatpush2.msra.mxu0 0.0
        %1452 = vmatprep.subr.mxu0 0.0
        %1453 = vmatpush2.msra.mxu0 0.0
        %1454 = vmatprep.subr.mxu0 0.0
        %1455 = vmatpush2.msra.mxu0 0.0
        %1456 = vmatprep.subr.mxu0 0.0
        %1457 = vmatpush2.msra.mxu0 0.0
        %1458 = vmatprep.subr.mxu0 0.0
        %1459 = vmatpush2.msra.mxu0 0.0
        %1460 = vmatprep.subr.mxu0 0.0
        %1461 = vmatpush2.msra.mxu0 0.0
        %1462 = vmatprep.subr.mxu0 0.0
        %1463 = vmatpush2.msra.mxu0 0.0
        %1464 = vmatprep.mubr.f32.mxu0 0.0
        %1465 = vmatmul.mubr.f32.gmra.mxu0 %v1398
        %v1466 = vpop.f32.mrf.mxu0
        %v1467 = vadd.f32 %v360, %v1466
        %v1468 = vpop.f32.mrf.mxu0
        %1469 = vdwg.mxu0
        %v1470 = vmax.f32 %v1467, 0.0
        %v1472 = vsel %vm381, %v1470, 0
        %1474 = vmatprep.subr.mxu0 0.0
        %1475 = vmatpush1.msra.mxu0 0.0
        %1476 = vmatprep.subr.mxu0 0.0
        %1477 = vmatpush1.msra.mxu0 0.0
        %1478 = vmatprep.subr.mxu0 0.0
        %1479 = vmatpush1.msra.mxu0 0.0
        %1480 = vmatprep.subr.mxu0 0.0
        %1481 = vmatpush1.msra.mxu0 0.0
        %1482 = vmatprep.subr.mxu0 0.0
        %1483 = vmatpush1.msra.mxu0 0.0
        %1484 = vmatprep.subr.mxu0 0.0
        %1485 = vmatpush1.msra.mxu0 0.0
        %1486 = vmatprep.subr.mxu0 0.0
        %1487 = vmatpush1.msra.mxu0 0.0
        %1488 = vmatprep.subr.mxu0 0.0
        %1489 = vmatpush1.msra.mxu0 0.0
        %1490 = vmatprep.subr.mxu0 0.0
        %1491 = vmatpush1.msra.mxu0 %v328
        %1492 = vmatprep.subr.mxu0 0.0
        %1493 = vmatpush1.msra.mxu0 %v327
        %1494 = vmatprep.subr.mxu0 0.0
        %1495 = vmatpush1.msra.mxu0 %v326
        %1496 = vmatprep.subr.mxu0 0.0
        %1497 = vmatpush1.msra.mxu0 %v325
        %1498 = vmatprep.subr.mxu0 0.0
        %1499 = vmatpush1.msra.mxu0 %v324
        %1500 = vmatprep.subr.mxu0 0.0
        %1501 = vmatpush1.msra.mxu0 %v323
        %1502 = vmatprep.subr.mxu0 0.0
        %1503 = vmatpush1.msra.mxu0 %v322
        %1504 = vmatprep.subr.mxu0 0.0
        %1505 = vmatpush1.msra.mxu0 %v321
        %1506 = vmatprep.subr.mxu0 0.0
        %1507 = vmatpush2.msra.mxu0 0.0
        %1508 = vmatprep.subr.mxu0 0.0
        %1509 = vmatpush2.msra.mxu0 0.0
        %1510 = vmatprep.subr.mxu0 0.0
        %1511 = vmatpush2.msra.mxu0 0.0
        %1512 = vmatprep.subr.mxu0 0.0
        %1513 = vmatpush2.msra.mxu0 0.0
        %1514 = vmatprep.subr.mxu0 0.0
        %1515 = vmatpush2.msra.mxu0 0.0
        %1516 = vmatprep.subr.mxu0 0.0
        %1517 = vmatpush2.msra.mxu0 0.0
        %1518 = vmatprep.subr.mxu0 0.0
        %1519 = vmatpush2.msra.mxu0 0.0
        %1520 = vmatprep.subr.mxu0 0.0
        %1521 = vmatpush2.msra.mxu0 0.0
        %1522 = vmatprep.subr.mxu0 0.0
        %1523 = vmatpush2.msra.mxu0 0.0
        %1524 = vmatprep.subr.mxu0 0.0
        %1525 = vmatpush2.msra.mxu0 0.0
        %1526 = vmatprep.subr.mxu0 0.0
        %1527 = vmatpush2.msra.mxu0 0.0
        %1528 = vmatprep.subr.mxu0 0.0
        %1529 = vmatpush2.msra.mxu0 0.0
        %1530 = vmatprep.subr.mxu0 0.0
        %1531 = vmatpush2.msra.mxu0 0.0
        %1532 = vmatprep.subr.mxu0 0.0
        %1533 = vmatpush2.msra.mxu0 0.0
        %1534 = vmatprep.subr.mxu0 0.0
        %1535 = vmatpush2.msra.mxu0 0.0
        %1536 = vmatprep.subr.mxu0 0.0
        %1537 = vmatpush2.msra.mxu0 0.0
        %1538 = vmatprep.mubr.f32.mxu0 0.0
        %1539 = vmatmul.mubr.f32.gmra.mxu0 %v1472
        %v1540 = vpop.f32.mrf.mxu0
        %v1541 = vadd.f32 %v361, %v1540
        %v1542 = vpop.f32.mrf.mxu0
        %1543 = vdwg.mxu0
        %v1544 = vmax.f32 %v1541, 0.0
        %v1546 = vsel %vm381, %v1544, 0
        %1548 = vmatprep.subr.mxu0 0.0
        %1549 = vmatpush1.msra.mxu0 0.0
        %1550 = vmatprep.subr.mxu0 0.0
        %1551 = vmatpush1.msra.mxu0 0.0
        %1552 = vmatprep.subr.mxu0 0.0
        %1553 = vmatpush1.msra.mxu0 0.0
        %1554 = vmatprep.subr.mxu0 0.0
        %1555 = vmatpush1.msra.mxu0 0.0
        %1556 = vmatprep.subr.mxu0 0.0
        %1557 = vmatpush1.msra.mxu0 0.0
        %1558 = vmatprep.subr.mxu0 0.0
        %1559 = vmatpush1.msra.mxu0 0.0
        %1560 = vmatprep.subr.mxu0 0.0
        %1561 = vmatpush1.msra.mxu0 0.0
        %1562 = vmatprep.subr.mxu0 0.0
        %1563 = vmatpush1.msra.mxu0 0.0
        %1564 = vmatprep.subr.mxu0 0.0
        %1565 = vmatpush1.msra.mxu0 %v336
        %1566 = vmatprep.subr.mxu0 0.0
        %1567 = vmatpush1.msra.mxu0 %v335
        %1568 = vmatprep.subr.mxu0 0.0
        %1569 = vmatpush1.msra.mxu0 %v334
        %1570 = vmatprep.subr.mxu0 0.0
        %1571 = vmatpush1.msra.mxu0 %v333
        %1572 = vmatprep.subr.mxu0 0.0
        %1573 = vmatpush1.msra.mxu0 %v332
        %1574 = vmatprep.subr.mxu0 0.0
        %1575 = vmatpush1.msra.mxu0 %v331
        %1576 = vmatprep.subr.mxu0 0.0
        %1577 = vmatpush1.msra.mxu0 %v330
        %1578 = vmatprep.subr.mxu0 0.0
        %1579 = vmatpush1.msra.mxu0 %v329
        %1580 = vmatprep.subr.mxu0 0.0
        %1581 = vmatpush2.msra.mxu0 0.0
        %1582 = vmatprep.subr.mxu0 0.0
        %1583 = vmatpush2.msra.mxu0 0.0
        %1584 = vmatprep.subr.mxu0 0.0
        %1585 = vmatpush2.msra.mxu0 0.0
        %1586 = vmatprep.subr.mxu0 0.0
        %1587 = vmatpush2.msra.mxu0 0.0
        %1588 = vmatprep.subr.mxu0 0.0
        %1589 = vmatpush2.msra.mxu0 0.0
        %1590 = vmatprep.subr.mxu0 0.0
        %1591 = vmatpush2.msra.mxu0 0.0
        %1592 = vmatprep.subr.mxu0 0.0
        %1593 = vmatpush2.msra.mxu0 0.0
        %1594 = vmatprep.subr.mxu0 0.0
        %1595 = vmatpush2.msra.mxu0 0.0
        %1596 = vmatprep.subr.mxu0 0.0
        %1597 = vmatpush2.msra.mxu0 0.0
        %1598 = vmatprep.subr.mxu0 0.0
        %1599 = vmatpush2.msra.mxu0 0.0
        %1600 = vmatprep.subr.mxu0 0.0
        %1601 = vmatpush2.msra.mxu0 0.0
        %1602 = vmatprep.subr.mxu0 0.0
        %1603 = vmatpush2.msra.mxu0 0.0
        %1604 = vmatprep.subr.mxu0 0.0
        %1605 = vmatpush2.msra.mxu0 0.0
        %1606 = vmatprep.subr.mxu0 0.0
        %1607 = vmatpush2.msra.mxu0 0.0
        %1608 = vmatprep.subr.mxu0 0.0
        %1609 = vmatpush2.msra.mxu0 0.0
        %1610 = vmatprep.subr.mxu0 0.0
        %1611 = vmatpush2.msra.mxu0 0.0
        %1612 = vmatprep.mubr.f32.mxu0 0.0
        %1613 = vmatmul.mubr.f32.gmra.mxu0 %v1546
        %v1614 = vpop.f32.mrf.mxu0
        %v1615 = vadd.f32 %v362, %v1614
        %v1616 = vpop.f32.mrf.mxu0
        %1617 = vdwg.mxu0
        %v1618 = vmax.f32 %v1615, 0.0
        %vm1619 = vcmp.ne.f32.partialorder %v1615, %v1615
        %v1620 = vadd.f32 %v1615, 0.0
        %v1621 = vand.u32 2147483647, %v1615
        %v1622 = vsub.f32 0.0, %v1621
        %v1623 = vmul.f32 %v1622, 1.442695
        %v1624 = vpow.pop %v1623
        %v1625 = vadd.f32 %v1624, 1.0
        %v1626 = vlog2.pop %v1625
        %v1627 = vmul.f32 %v1626, 0.6931472
        %v1628 = vmul.f32 -0.5, %v1624
        %v1629 = vadd.f32 %v1628, 1.0
        %v1630 = vmul.f32 %v1629, %v1624
        %v1631 = vand.u32 2147483647, %v1624
        %vm1632 = vcmp.lt.f32.partialorder %v1631, 0.0004427343
        %v1633 = vsel %vm1632, %v1630, %v1627
        %v1634 = vadd.f32 %v1618, %v1633
        %v1635 = vsel %vm1619, %v1620, %v1634
        %v1636 = vsel %vm377, %v1635, %v1615
        %1638 = vrot.lane.b32.xlu0 %v1242, 48
        %v1639 = vpop.permute.xlu0 %1638
        %v1641 = vmul.f32 %v1636, %v1639
        %1643 = vrot.lane.b32.xlu0 %v1641, 112
        %v1644 = vpop.permute.xlu0 %1643
        %v1646 = vadd.f32 %v1636, %v1644
        %1648 = vrot.lane.b32.xlu0 %v1646, 96
        %v1649 = vpop.permute.xlu0 %1648
        %v1650 = vsel %vm456, %v1649, 0
        %1652 = vmatprep.subr.mxu0 0.0
        %1653 = vmatpush1.msra.mxu0 0.0
        %1654 = vmatprep.subr.mxu0 0.0
        %1655 = vmatpush1.msra.mxu0 0.0
        %1656 = vmatprep.subr.mxu0 0.0
        %1657 = vmatpush1.msra.mxu0 0.0
        %1658 = vmatprep.subr.mxu0 0.0
        %1659 = vmatpush1.msra.mxu0 0.0
        %1660 = vmatprep.subr.mxu0 0.0
        %1661 = vmatpush1.msra.mxu0 0.0
        %1662 = vmatprep.subr.mxu0 0.0
        %1663 = vmatpush1.msra.mxu0 0.0
        %1664 = vmatprep.subr.mxu0 0.0
        %1665 = vmatpush1.msra.mxu0 0.0
        %1666 = vmatprep.subr.mxu0 0.0
        %1667 = vmatpush1.msra.mxu0 0.0
        %1668 = vmatprep.subr.mxu0 0.0
        %1669 = vmatpush1.msra.mxu0 0.0
        %1670 = vmatprep.subr.mxu0 0.0
        %1671 = vmatpush1.msra.mxu0 0.0
        %1672 = vmatprep.subr.mxu0 0.0
        %1673 = vmatpush1.msra.mxu0 0.0
        %1674 = vmatprep.subr.mxu0 0.0
        %1675 = vmatpush1.msra.mxu0 0.0
        %1676 = vmatprep.subr.mxu0 0.0
        %1677 = vmatpush1.msra.mxu0 0.0
        %1678 = vmatprep.subr.mxu0 0.0
        %1679 = vmatpush1.msra.mxu0 0.0
        %1680 = vmatprep.subr.mxu0 0.0
        %1681 = vmatpush1.msra.mxu0 %v338
        %1682 = vmatprep.subr.mxu0 0.0
        %1683 = vmatpush1.msra.mxu0 %v337
        %1684 = vmatprep.subr.mxu0 0.0
        %1685 = vmatpush2.msra.mxu0 0.0
        %1686 = vmatprep.subr.mxu0 0.0
        %1687 = vmatpush2.msra.mxu0 0.0
        %1688 = vmatprep.subr.mxu0 0.0
        %1689 = vmatpush2.msra.mxu0 0.0
        %1690 = vmatprep.subr.mxu0 0.0
        %1691 = vmatpush2.msra.mxu0 0.0
        %1692 = vmatprep.subr.mxu0 0.0
        %1693 = vmatpush2.msra.mxu0 0.0
        %1694 = vmatprep.subr.mxu0 0.0
        %1695 = vmatpush2.msra.mxu0 0.0
        %1696 = vmatprep.subr.mxu0 0.0
        %1697 = vmatpush2.msra.mxu0 0.0
        %1698 = vmatprep.subr.mxu0 0.0
        %1699 = vmatpush2.msra.mxu0 0.0
        %1700 = vmatprep.subr.mxu0 0.0
        %1701 = vmatpush2.msra.mxu0 0.0
        %1702 = vmatprep.subr.mxu0 0.0
        %1703 = vmatpush2.msra.mxu0 0.0
        %1704 = vmatprep.subr.mxu0 0.0
        %1705 = vmatpush2.msra.mxu0 0.0
        %1706 = vmatprep.subr.mxu0 0.0
        %1707 = vmatpush2.msra.mxu0 0.0
        %1708 = vmatprep.subr.mxu0 0.0
        %1709 = vmatpush2.msra.mxu0 0.0
        %1710 = vmatprep.subr.mxu0 0.0
        %1711 = vmatpush2.msra.mxu0 0.0
        %1712 = vmatprep.subr.mxu0 0.0
        %1713 = vmatpush2.msra.mxu0 0.0
        %1714 = vmatprep.subr.mxu0 0.0
        %1715 = vmatpush2.msra.mxu0 0.0
        %1716 = vmatprep.mubr.f32.mxu0 0.0
        %1717 = vmatmul.mubr.f32.gmra.mxu0 %v1650
        %v1718 = vpop.f32.mrf.mxu0
        %v1719 = vadd.f32 %v363, %v1718
        %v1720 = vpop.f32.mrf.mxu0
        %1721 = vdwg.mxu0
        %v1722 = vmax.f32 %v1719, 0.0
        %v1724 = vsel %vm896, %v1722, 0
        %1726 = vmatprep.subr.mxu0 0.0
        %1727 = vmatpush1.msra.mxu0 0.0
        %1728 = vmatprep.subr.mxu0 0.0
        %1729 = vmatpush1.msra.mxu0 0.0
        %1730 = vmatprep.subr.mxu0 0.0
        %1731 = vmatpush1.msra.mxu0 0.0
        %1732 = vmatprep.subr.mxu0 0.0
        %1733 = vmatpush1.msra.mxu0 0.0
        %1734 = vmatprep.subr.mxu0 0.0
        %1735 = vmatpush1.msra.mxu0 0.0
        %1736 = vmatprep.subr.mxu0 0.0
        %1737 = vmatpush1.msra.mxu0 0.0
        %1738 = vmatprep.subr.mxu0 0.0
        %1739 = vmatpush1.msra.mxu0 0.0
        %1740 = vmatprep.subr.mxu0 0.0
        %1741 = vmatpush1.msra.mxu0 0.0
        %1742 = vmatprep.subr.mxu0 0.0
        %1743 = vmatpush1.msra.mxu0 0.0
        %1744 = vmatprep.subr.mxu0 0.0
        %1745 = vmatpush1.msra.mxu0 0.0
        %1746 = vmatprep.subr.mxu0 0.0
        %1747 = vmatpush1.msra.mxu0 0.0
        %1748 = vmatprep.subr.mxu0 0.0
        %1749 = vmatpush1.msra.mxu0 0.0
        %1750 = vmatprep.subr.mxu0 0.0
        %1751 = vmatpush1.msra.mxu0 %v342
        %1752 = vmatprep.subr.mxu0 0.0
        %1753 = vmatpush1.msra.mxu0 %v341
        %1754 = vmatprep.subr.mxu0 0.0
        %1755 = vmatpush1.msra.mxu0 %v340
        %1756 = vmatprep.subr.mxu0 0.0
        %1757 = vmatpush1.msra.mxu0 %v339
        %1758 = vmatprep.subr.mxu0 0.0
        %1759 = vmatpush2.msra.mxu0 0.0
        %1760 = vmatprep.subr.mxu0 0.0
        %1761 = vmatpush2.msra.mxu0 0.0
        %1762 = vmatprep.subr.mxu0 0.0
        %1763 = vmatpush2.msra.mxu0 0.0
        %1764 = vmatprep.subr.mxu0 0.0
        %1765 = vmatpush2.msra.mxu0 0.0
        %1766 = vmatprep.subr.mxu0 0.0
        %1767 = vmatpush2.msra.mxu0 0.0
        %1768 = vmatprep.subr.mxu0 0.0
        %1769 = vmatpush2.msra.mxu0 0.0
        %1770 = vmatprep.subr.mxu0 0.0
        %1771 = vmatpush2.msra.mxu0 0.0
        %1772 = vmatprep.subr.mxu0 0.0
        %1773 = vmatpush2.msra.mxu0 0.0
        %1774 = vmatprep.subr.mxu0 0.0
        %1775 = vmatpush2.msra.mxu0 0.0
        %1776 = vmatprep.subr.mxu0 0.0
        %1777 = vmatpush2.msra.mxu0 0.0
        %1778 = vmatprep.subr.mxu0 0.0
        %1779 = vmatpush2.msra.mxu0 0.0
        %1780 = vmatprep.subr.mxu0 0.0
        %1781 = vmatpush2.msra.mxu0 0.0
        %1782 = vmatprep.subr.mxu0 0.0
        %1783 = vmatpush2.msra.mxu0 0.0
        %1784 = vmatprep.subr.mxu0 0.0
        %1785 = vmatpush2.msra.mxu0 0.0
        %1786 = vmatprep.subr.mxu0 0.0
        %1787 = vmatpush2.msra.mxu0 0.0
        %1788 = vmatprep.subr.mxu0 0.0
        %1789 = vmatpush2.msra.mxu0 0.0
        %1790 = vmatprep.mubr.f32.mxu0 0.0
        %1791 = vmatmul.mubr.f32.gmra.mxu0 %v1724
        %v1792 = vpop.f32.mrf.mxu0
        %v1793 = vadd.f32 %v364, %v1792
        %v1794 = vpop.f32.mrf.mxu0
        %1795 = vdwg.mxu0
        %v1796 = vmax.f32 %v1793, 0.0
        %v1798 = vsel %vm896, %v1796, 0
        %1800 = vmatprep.subr.mxu0 0.0
        %1801 = vmatpush1.msra.mxu0 0.0
        %1802 = vmatprep.subr.mxu0 0.0
        %1803 = vmatpush1.msra.mxu0 0.0
        %1804 = vmatprep.subr.mxu0 0.0
        %1805 = vmatpush1.msra.mxu0 0.0
        %1806 = vmatprep.subr.mxu0 0.0
        %1807 = vmatpush1.msra.mxu0 0.0
        %1808 = vmatprep.subr.mxu0 0.0
        %1809 = vmatpush1.msra.mxu0 0.0
        %1810 = vmatprep.subr.mxu0 0.0
        %1811 = vmatpush1.msra.mxu0 0.0
        %1812 = vmatprep.subr.mxu0 0.0
        %1813 = vmatpush1.msra.mxu0 0.0
        %1814 = vmatprep.subr.mxu0 0.0
        %1815 = vmatpush1.msra.mxu0 0.0
        %1816 = vmatprep.subr.mxu0 0.0
        %1817 = vmatpush1.msra.mxu0 0.0
        %1818 = vmatprep.subr.mxu0 0.0
        %1819 = vmatpush1.msra.mxu0 0.0
        %1820 = vmatprep.subr.mxu0 0.0
        %1821 = vmatpush1.msra.mxu0 0.0
        %1822 = vmatprep.subr.mxu0 0.0
        %1823 = vmatpush1.msra.mxu0 0.0
        %1824 = vmatprep.subr.mxu0 0.0
        %1825 = vmatpush1.msra.mxu0 %v346
        %1826 = vmatprep.subr.mxu0 0.0
        %1827 = vmatpush1.msra.mxu0 %v345
        %1828 = vmatprep.subr.mxu0 0.0
        %1829 = vmatpush1.msra.mxu0 %v344
        %1830 = vmatprep.subr.mxu0 0.0
        %1831 = vmatpush1.msra.mxu0 %v343
        %1832 = vmatprep.subr.mxu0 0.0
        %1833 = vmatpush2.msra.mxu0 0.0
        %1834 = vmatprep.subr.mxu0 0.0
        %1835 = vmatpush2.msra.mxu0 0.0
        %1836 = vmatprep.subr.mxu0 0.0
        %1837 = vmatpush2.msra.mxu0 0.0
        %1838 = vmatprep.subr.mxu0 0.0
        %1839 = vmatpush2.msra.mxu0 0.0
        %1840 = vmatprep.subr.mxu0 0.0
        %1841 = vmatpush2.msra.mxu0 0.0
        %1842 = vmatprep.subr.mxu0 0.0
        %1843 = vmatpush2.msra.mxu0 0.0
        %1844 = vmatprep.subr.mxu0 0.0
        %1845 = vmatpush2.msra.mxu0 0.0
        %1846 = vmatprep.subr.mxu0 0.0
        %1847 = vmatpush2.msra.mxu0 0.0
        %1848 = vmatprep.subr.mxu0 0.0
        %1849 = vmatpush2.msra.mxu0 0.0
        %1850 = vmatprep.subr.mxu0 0.0
        %1851 = vmatpush2.msra.mxu0 0.0
        %1852 = vmatprep.subr.mxu0 0.0
        %1853 = vmatpush2.msra.mxu0 0.0
        %1854 = vmatprep.subr.mxu0 0.0
        %1855 = vmatpush2.msra.mxu0 0.0
        %1856 = vmatprep.subr.mxu0 0.0
        %1857 = vmatpush2.msra.mxu0 0.0
        %1858 = vmatprep.subr.mxu0 0.0
        %1859 = vmatpush2.msra.mxu0 0.0
        %1860 = vmatprep.subr.mxu0 0.0
        %1861 = vmatpush2.msra.mxu0 0.0
        %1862 = vmatprep.subr.mxu0 0.0
        %1863 = vmatpush2.msra.mxu0 0.0
        %1864 = vmatprep.mubr.f32.mxu0 0.0
        %1865 = vmatmul.mubr.f32.gmra.mxu0 %v1798
        %v1866 = vpop.f32.mrf.mxu0
        %v1867 = vadd.f32 %v365, %v1866
        %v1868 = vpop.f32.mrf.mxu0
        %1869 = vdwg.mxu0
        %v1870 = vmax.f32 %v1867, 0.0
        %v1872 = vsel %vm896, %v1870, 0
        %1874 = vmatprep.subr.mxu0 0.0
        %1875 = vmatpush1.msra.mxu0 0.0
        %1876 = vmatprep.subr.mxu0 0.0
        %1877 = vmatpush1.msra.mxu0 0.0
        %1878 = vmatprep.subr.mxu0 0.0
        %1879 = vmatpush1.msra.mxu0 0.0
        %1880 = vmatprep.subr.mxu0 0.0
        %1881 = vmatpush1.msra.mxu0 0.0
        %1882 = vmatprep.subr.mxu0 0.0
        %1883 = vmatpush1.msra.mxu0 0.0
        %1884 = vmatprep.subr.mxu0 0.0
        %1885 = vmatpush1.msra.mxu0 0.0
        %1886 = vmatprep.subr.mxu0 0.0
        %1887 = vmatpush1.msra.mxu0 0.0
        %1888 = vmatprep.subr.mxu0 0.0
        %1889 = vmatpush1.msra.mxu0 0.0
        %1890 = vmatprep.subr.mxu0 0.0
        %1891 = vmatpush1.msra.mxu0 0.0
        %1892 = vmatprep.subr.mxu0 0.0
        %1893 = vmatpush1.msra.mxu0 0.0
        %1894 = vmatprep.subr.mxu0 0.0
        %1895 = vmatpush1.msra.mxu0 0.0
        %1896 = vmatprep.subr.mxu0 0.0
        %1897 = vmatpush1.msra.mxu0 0.0
        %1898 = vmatprep.subr.mxu0 0.0
        %1899 = vmatpush1.msra.mxu0 %v350
        %1900 = vmatprep.subr.mxu0 0.0
        %1901 = vmatpush1.msra.mxu0 %v349
        %1902 = vmatprep.subr.mxu0 0.0
        %1903 = vmatpush1.msra.mxu0 %v348
        %1904 = vmatprep.subr.mxu0 0.0
        %1905 = vmatpush1.msra.mxu0 %v347
        %1906 = vmatprep.subr.mxu0 0.0
        %1907 = vmatpush2.msra.mxu0 0.0
        %1908 = vmatprep.subr.mxu0 0.0
        %1909 = vmatpush2.msra.mxu0 0.0
        %1910 = vmatprep.subr.mxu0 0.0
        %1911 = vmatpush2.msra.mxu0 0.0
        %1912 = vmatprep.subr.mxu0 0.0
        %1913 = vmatpush2.msra.mxu0 0.0
        %1914 = vmatprep.subr.mxu0 0.0
        %1915 = vmatpush2.msra.mxu0 0.0
        %1916 = vmatprep.subr.mxu0 0.0
        %1917 = vmatpush2.msra.mxu0 0.0
        %1918 = vmatprep.subr.mxu0 0.0
        %1919 = vmatpush2.msra.mxu0 0.0
        %1920 = vmatprep.subr.mxu0 0.0
        %1921 = vmatpush2.msra.mxu0 0.0
        %1922 = vmatprep.subr.mxu0 0.0
        %1923 = vmatpush2.msra.mxu0 0.0
        %1924 = vmatprep.subr.mxu0 0.0
        %1925 = vmatpush2.msra.mxu0 0.0
        %1926 = vmatprep.subr.mxu0 0.0
        %1927 = vmatpush2.msra.mxu0 0.0
        %1928 = vmatprep.subr.mxu0 0.0
        %1929 = vmatpush2.msra.mxu0 0.0
        %1930 = vmatprep.subr.mxu0 0.0
        %1931 = vmatpush2.msra.mxu0 0.0
        %1932 = vmatprep.subr.mxu0 0.0
        %1933 = vmatpush2.msra.mxu0 0.0
        %1934 = vmatprep.subr.mxu0 0.0
        %1935 = vmatpush2.msra.mxu0 0.0
        %1936 = vmatprep.subr.mxu0 0.0
        %1937 = vmatpush2.msra.mxu0 0.0
        %1938 = vmatprep.mubr.f32.mxu0 0.0
        %1939 = vmatmul.mubr.f32.gmra.mxu0 %v1872
        %v1940 = vpop.f32.mrf.mxu0
        %v1941 = vadd.f32 %v366, %v1940
        %v1942 = vpop.f32.mrf.mxu0
        %1943 = vdwg.mxu0
        %v1944 = vmax.f32 %v1941, 0.0
        %v1946 = vsel %vm896, %v1944, 0
        %1948 = vmatprep.subr.mxu0 0.0
        %1949 = vmatpush1.msra.mxu0 0.0
        %1950 = vmatprep.subr.mxu0 0.0
        %1951 = vmatpush1.msra.mxu0 0.0
        %1952 = vmatprep.subr.mxu0 0.0
        %1953 = vmatpush1.msra.mxu0 0.0
        %1954 = vmatprep.subr.mxu0 0.0
        %1955 = vmatpush1.msra.mxu0 0.0
        %1956 = vmatprep.subr.mxu0 0.0
        %1957 = vmatpush1.msra.mxu0 0.0
        %1958 = vmatprep.subr.mxu0 0.0
        %1959 = vmatpush1.msra.mxu0 0.0
        %1960 = vmatprep.subr.mxu0 0.0
        %1961 = vmatpush1.msra.mxu0 0.0
        %1962 = vmatprep.subr.mxu0 0.0
        %1963 = vmatpush1.msra.mxu0 0.0
        %1964 = vmatprep.subr.mxu0 0.0
        %1965 = vmatpush1.msra.mxu0 0.0
        %1966 = vmatprep.subr.mxu0 0.0
        %1967 = vmatpush1.msra.mxu0 0.0
        %1968 = vmatprep.subr.mxu0 0.0
        %1969 = vmatpush1.msra.mxu0 0.0
        %1970 = vmatprep.subr.mxu0 0.0
        %1971 = vmatpush1.msra.mxu0 0.0
        %1972 = vmatprep.subr.mxu0 %v358
        %1973 = vmatpush1.msra.mxu0 %v357
        %1974 = vmatprep.subr.mxu0 %v356
        %1975 = vmatpush1.msra.mxu0 %v355
        %1976 = vmatprep.subr.mxu0 %v354
        %1977 = vmatpush1.msra.mxu0 %v353
        %1978 = vmatprep.subr.mxu0 %v352
        %1979 = vmatpush1.msra.mxu0 %v351
        %1980 = vmatprep.subr.mxu0 0.0
        %1981 = vmatpush2.msra.mxu0 0.0
        %1982 = vmatprep.subr.mxu0 0.0
        %1983 = vmatpush2.msra.mxu0 0.0
        %1984 = vmatprep.subr.mxu0 0.0
        %1985 = vmatpush2.msra.mxu0 0.0
        %1986 = vmatprep.subr.mxu0 0.0
        %1987 = vmatpush2.msra.mxu0 0.0
        %1988 = vmatprep.subr.mxu0 0.0
        %1989 = vmatpush2.msra.mxu0 0.0
        %1990 = vmatprep.subr.mxu0 0.0
        %1991 = vmatpush2.msra.mxu0 0.0
        %1992 = vmatprep.subr.mxu0 0.0
        %1993 = vmatpush2.msra.mxu0 0.0
        %1994 = vmatprep.subr.mxu0 0.0
        %1995 = vmatpush2.msra.mxu0 0.0
        %1996 = vmatprep.subr.mxu0 0.0
        %1997 = vmatpush2.msra.mxu0 0.0
        %1998 = vmatprep.subr.mxu0 0.0
        %1999 = vmatpush2.msra.mxu0 0.0
        %2000 = vmatprep.subr.mxu0 0.0
        %2001 = vmatpush2.msra.mxu0 0.0
        %2002 = vmatprep.subr.mxu0 0.0
        %2003 = vmatpush2.msra.mxu0 0.0
        %2004 = vmatprep.subr.mxu0 0.0
        %2005 = vmatpush2.msra.mxu0 0.0
        %2006 = vmatprep.subr.mxu0 0.0
        %2007 = vmatpush2.msra.mxu0 0.0
        %2008 = vmatprep.subr.mxu0 0.0
        %2009 = vmatpush2.msra.mxu0 0.0
        %2010 = vmatprep.subr.mxu0 0.0
        %2011 = vmatpush2.msra.mxu0 0.0
        %2012 = vmatprep.mubr.f32.mxu0 0.0
        %2013 = vmatmul.mubr.f32.gmra.mxu0 %v1946
        %v2014 = vpop.f32.mrf.mxu0
        %v2015 = vadd.f32 0.0, %v2014
        %v2016 = vpop.f32.mrf.mxu0
        %v2017 = vadd.f32 0.0, %v2016
        %2018 = vdwg.mxu0
        %2021 = vrot.lane.b32.xlu0 %v2015, 64
        %v2022 = vpop.permute.xlu0 %2021
        %2023 = vrot.lane.b32.xlu0 %v2017, 64
        %v2024 = vpop.permute.xlu0 %2023
        %v2025 = vsel %vm381, %v2022, %v2024
        %v2028 = vadd.f32 %v1395, %v2022
        %v2029 = vadd.f32 %v1396, %v2025
        %v2030 = vadd.f32 %v2028, %v1393
        %v2031 = vadd.f32 %v2029, %v1394
        %v2032 = vxor.u32 %v2030, 2147483648
        %v2033 = vxor.u32 %v2031, 2147483648
        %v2034 = vmul.f32 %v2032, 1.442695
        %v2035 = vpow.pop %v2034
        %v2036 = vmul.f32 %v2033, 1.442695
        %v2037 = vpow.pop %v2036
        %v2038 = vadd.f32 %v2035, 1.0
        %v2039 = vadd.f32 %v2037, 1.0
        %v2040 = vrcp.pop %v2038
        %v2041 = vmul.f32 1.0, %v2040
        %v2042 = vrcp.pop %v2039
        %v2043 = vmul.f32 1.0, %v2042
        %v2044 = vmul.f32 %v2041, %v1394
        %v2045 = vadd.f32 %v2029, %v2044
        %v2046 = vtanh.pop %v2045
        %v2047 = vsub.f32 1.0, %v2043
        %2049 = vrot.lane.b32.xlu0 %v2046, 64
        %v2050 = vpop.permute.xlu0 %2049
        %v2052 = vmul.f32 %v2047, %v2050
        %v2053 = vmul.f32 %v2043, %v1228
        %v2054 = vadd.f32 %v2052, %v2053
        %s2055 = scalar_lea.vmem %s282, 16 [#allocation11]
        %2056 = vst.msk [vmem:[%s2055] sm:$0xff] %vm381, %v1636
        %2058 = vrot.lane.b32.xlu0 %v2054, 64
        %v2059 = vpop.permute.xlu0 %2058
        %2061 = vst.msk [vmem:[%s2055] sm:$0xff] %vm1234, %v2059
        %2062 = vst.msk [vmem:[%s2055 + $0x8] sm:$0xff] %vm896, %v1944
        %2063 = vst.msk [vmem:[%s2055 + $0x8] sm:$0xff] %vm1237, %v1646
        %s2064 = scalar_lea.vmem %s236, 16 [#allocation3]
        %v2065 = vld [vmem:[%s2064] sm:$0xff]
        %s2066 = scalar_lea.vmem %s245, 16 [#allocation6]
        %v2067 = vld [vmem:[%s2066] sm:$0xff]
        %v2068 = vsel %vm381, %v2054, 0
        %2070 = vmatprep.subr.mxu0 0.0
        %2071 = vmatpush1.msra.mxu0 0.0
        %2072 = vmatprep.subr.mxu0 0.0
        %2073 = vmatpush1.msra.mxu0 0.0
        %2074 = vmatprep.subr.mxu0 0.0
        %2075 = vmatpush1.msra.mxu0 0.0
        %2076 = vmatprep.subr.mxu0 0.0
        %2077 = vmatpush1.msra.mxu0 0.0
        %2078 = vmatprep.subr.mxu0 0.0
        %2079 = vmatpush1.msra.mxu0 0.0
        %2080 = vmatprep.subr.mxu0 0.0
        %2081 = vmatpush1.msra.mxu0 0.0
        %2082 = vmatprep.subr.mxu0 0.0
        %2083 = vmatpush1.msra.mxu0 0.0
        %2084 = vmatprep.subr.mxu0 0.0
        %2085 = vmatpush1.msra.mxu0 0.0
        %2086 = vmatprep.subr.mxu0 %v308
        %2087 = vmatpush1.msra.mxu0 %v307
        %2088 = vmatprep.subr.mxu0 %v306
        %2089 = vmatpush1.msra.mxu0 %v305
        %2090 = vmatprep.subr.mxu0 %v304
        %2091 = vmatpush1.msra.mxu0 %v303
        %2092 = vmatprep.subr.mxu0 %v302
        %2093 = vmatpush1.msra.mxu0 %v301
        %2094 = vmatprep.subr.mxu0 %v300
        %2095 = vmatpush1.msra.mxu0 %v299
        %2096 = vmatprep.subr.mxu0 %v298
        %2097 = vmatpush1.msra.mxu0 %v297
        %2098 = vmatprep.subr.mxu0 %v296
        %2099 = vmatpush1.msra.mxu0 %v295
        %2100 = vmatprep.subr.mxu0 %v294
        %2101 = vmatpush1.msra.mxu0 %v293
        %2102 = vmatprep.subr.mxu0 0.0
        %2103 = vmatpush2.msra.mxu0 0.0
        %2104 = vmatprep.subr.mxu0 0.0
        %2105 = vmatpush2.msra.mxu0 0.0
        %2106 = vmatprep.subr.mxu0 0.0
        %2107 = vmatpush2.msra.mxu0 0.0
        %2108 = vmatprep.subr.mxu0 0.0
        %2109 = vmatpush2.msra.mxu0 0.0
        %2110 = vmatprep.subr.mxu0 0.0
        %2111 = vmatpush2.msra.mxu0 0.0
        %2112 = vmatprep.subr.mxu0 0.0
        %2113 = vmatpush2.msra.mxu0 0.0
        %2114 = vmatprep.subr.mxu0 0.0
        %2115 = vmatpush2.msra.mxu0 0.0
        %2116 = vmatprep.subr.mxu0 0.0
        %2117 = vmatpush2.msra.mxu0 0.0
        %2118 = vmatprep.subr.mxu0 0.0
        %2119 = vmatpush2.msra.mxu0 0.0
        %2120 = vmatprep.subr.mxu0 0.0
        %2121 = vmatpush2.msra.mxu0 0.0
        %2122 = vmatprep.subr.mxu0 0.0
        %2123 = vmatpush2.msra.mxu0 0.0
        %2124 = vmatprep.subr.mxu0 0.0
        %2125 = vmatpush2.msra.mxu0 0.0
        %2126 = vmatprep.subr.mxu0 0.0
        %2127 = vmatpush2.msra.mxu0 0.0
        %2128 = vmatprep.subr.mxu0 0.0
        %2129 = vmatpush2.msra.mxu0 0.0
        %2130 = vmatprep.subr.mxu0 0.0
        %2131 = vmatpush2.msra.mxu0 0.0
        %2132 = vmatprep.subr.mxu0 0.0
        %2133 = vmatpush2.msra.mxu0 0.0
        %2134 = vmatprep.mubr.f32.mxu0 0.0
        %2135 = vmatmul.mubr.f32.gmra.mxu0 %v2068
        %v2136 = vpop.f32.mrf.mxu0
        %v2137 = vadd.f32 0.0, %v2136
        %v2138 = vpop.f32.mrf.mxu0
        %v2139 = vadd.f32 0.0, %v2138
        %2140 = vdwg.mxu0
        %v2142 = vsel %vm456, %v2065, 0
        %2144 = vmatprep.subr.mxu0 0.0
        %2145 = vmatpush1.msra.mxu0 0.0
        %2146 = vmatprep.subr.mxu0 0.0
        %2147 = vmatpush1.msra.mxu0 0.0
        %2148 = vmatprep.subr.mxu0 0.0
        %2149 = vmatpush1.msra.mxu0 0.0
        %2150 = vmatprep.subr.mxu0 0.0
        %2151 = vmatpush1.msra.mxu0 0.0
        %2152 = vmatprep.subr.mxu0 0.0
        %2153 = vmatpush1.msra.mxu0 0.0
        %2154 = vmatprep.subr.mxu0 0.0
        %2155 = vmatpush1.msra.mxu0 0.0
        %2156 = vmatprep.subr.mxu0 0.0
        %2157 = vmatpush1.msra.mxu0 0.0
        %2158 = vmatprep.subr.mxu0 0.0
        %2159 = vmatpush1.msra.mxu0 0.0
        %2160 = vmatprep.subr.mxu0 0.0
        %2161 = vmatpush1.msra.mxu0 0.0
        %2162 = vmatprep.subr.mxu0 0.0
        %2163 = vmatpush1.msra.mxu0 0.0
        %2164 = vmatprep.subr.mxu0 0.0
        %2165 = vmatpush1.msra.mxu0 0.0
        %2166 = vmatprep.subr.mxu0 0.0
        %2167 = vmatpush1.msra.mxu0 0.0
        %2168 = vmatprep.subr.mxu0 0.0
        %2169 = vmatpush1.msra.mxu0 0.0
        %2170 = vmatprep.subr.mxu0 0.0
        %2171 = vmatpush1.msra.mxu0 0.0
        %2172 = vmatprep.subr.mxu0 %v312
        %2173 = vmatpush1.msra.mxu0 %v311
        %2174 = vmatprep.subr.mxu0 %v310
        %2175 = vmatpush1.msra.mxu0 %v309
        %2176 = vmatprep.subr.mxu0 0.0
        %2177 = vmatpush2.msra.mxu0 0.0
        %2178 = vmatprep.subr.mxu0 0.0
        %2179 = vmatpush2.msra.mxu0 0.0
        %2180 = vmatprep.subr.mxu0 0.0
        %2181 = vmatpush2.msra.mxu0 0.0
        %2182 = vmatprep.subr.mxu0 0.0
        %2183 = vmatpush2.msra.mxu0 0.0
        %2184 = vmatprep.subr.mxu0 0.0
        %2185 = vmatpush2.msra.mxu0 0.0
        %2186 = vmatprep.subr.mxu0 0.0
        %2187 = vmatpush2.msra.mxu0 0.0
        %2188 = vmatprep.subr.mxu0 0.0
        %2189 = vmatpush2.msra.mxu0 0.0
        %2190 = vmatprep.subr.mxu0 0.0
        %2191 = vmatpush2.msra.mxu0 0.0
        %2192 = vmatprep.subr.mxu0 0.0
        %2193 = vmatpush2.msra.mxu0 0.0
        %2194 = vmatprep.subr.mxu0 0.0
        %2195 = vmatpush2.msra.mxu0 0.0
        %2196 = vmatprep.subr.mxu0 0.0
        %2197 = vmatpush2.msra.mxu0 0.0
        %2198 = vmatprep.subr.mxu0 0.0
        %2199 = vmatpush2.msra.mxu0 0.0
        %2200 = vmatprep.subr.mxu0 0.0
        %2201 = vmatpush2.msra.mxu0 0.0
        %2202 = vmatprep.subr.mxu0 0.0
        %2203 = vmatpush2.msra.mxu0 0.0
        %2204 = vmatprep.subr.mxu0 0.0
        %2205 = vmatpush2.msra.mxu0 0.0
        %2206 = vmatprep.subr.mxu0 0.0
        %2207 = vmatpush2.msra.mxu0 0.0
        %2208 = vmatprep.mubr.f32.mxu0 0.0
        %2209 = vmatmul.mubr.f32.gmra.mxu0 %v2142
        %v2210 = vpop.f32.mrf.mxu0
        %v2211 = vadd.f32 0.0, %v2210
        %v2212 = vpop.f32.mrf.mxu0
        %v2213 = vadd.f32 0.0, %v2212
        %2214 = vdwg.mxu0
        %v2215 = vadd.f32 %v2137, %v2211
        %v2216 = vadd.f32 %v2215, %v359
        %v2217 = vmax.f32 %v2216, 0.0
        %v2218 = vadd.f32 %v2137, %v544
        %v2219 = vadd.f32 %v2139, %v547
        %v2220 = vadd.f32 %v2211, %v562
        %v2221 = vadd.f32 %v2213, %v565
        %v2223 = vsel %vm381, %v2217, 0
        %2225 = vmatprep.subr.mxu0 0.0
        %2226 = vmatpush1.msra.mxu0 0.0
        %2227 = vmatprep.subr.mxu0 0.0
        %2228 = vmatpush1.msra.mxu0 0.0
        %2229 = vmatprep.subr.mxu0 0.0
        %2230 = vmatpush1.msra.mxu0 0.0
        %2231 = vmatprep.subr.mxu0 0.0
        %2232 = vmatpush1.msra.mxu0 0.0
        %2233 = vmatprep.subr.mxu0 0.0
        %2234 = vmatpush1.msra.mxu0 0.0
        %2235 = vmatprep.subr.mxu0 0.0
        %2236 = vmatpush1.msra.mxu0 0.0
        %2237 = vmatprep.subr.mxu0 0.0
        %2238 = vmatpush1.msra.mxu0 0.0
        %2239 = vmatprep.subr.mxu0 0.0
        %2240 = vmatpush1.msra.mxu0 0.0
        %2241 = vmatprep.subr.mxu0 0.0
        %2242 = vmatpush1.msra.mxu0 %v320
        %2243 = vmatprep.subr.mxu0 0.0
        %2244 = vmatpush1.msra.mxu0 %v319
        %2245 = vmatprep.subr.mxu0 0.0
        %2246 = vmatpush1.msra.mxu0 %v318
        %2247 = vmatprep.subr.mxu0 0.0
        %2248 = vmatpush1.msra.mxu0 %v317
        %2249 = vmatprep.subr.mxu0 0.0
        %2250 = vmatpush1.msra.mxu0 %v316
        %2251 = vmatprep.subr.mxu0 0.0
        %2252 = vmatpush1.msra.mxu0 %v315
        %2253 = vmatprep.subr.mxu0 0.0
        %2254 = vmatpush1.msra.mxu0 %v314
        %2255 = vmatprep.subr.mxu0 0.0
        %2256 = vmatpush1.msra.mxu0 %v313
        %2257 = vmatprep.subr.mxu0 0.0
        %2258 = vmatpush2.msra.mxu0 0.0
        %2259 = vmatprep.subr.mxu0 0.0
        %2260 = vmatpush2.msra.mxu0 0.0
        %2261 = vmatprep.subr.mxu0 0.0
        %2262 = vmatpush2.msra.mxu0 0.0
        %2263 = vmatprep.subr.mxu0 0.0
        %2264 = vmatpush2.msra.mxu0 0.0
        %2265 = vmatprep.subr.mxu0 0.0
        %2266 = vmatpush2.msra.mxu0 0.0
        %2267 = vmatprep.subr.mxu0 0.0
        %2268 = vmatpush2.msra.mxu0 0.0
        %2269 = vmatprep.subr.mxu0 0.0
        %2270 = vmatpush2.msra.mxu0 0.0
        %2271 = vmatprep.subr.mxu0 0.0
        %2272 = vmatpush2.msra.mxu0 0.0
        %2273 = vmatprep.subr.mxu0 0.0
        %2274 = vmatpush2.msra.mxu0 0.0
        %2275 = vmatprep.subr.mxu0 0.0
        %2276 = vmatpush2.msra.mxu0 0.0
        %2277 = vmatprep.subr.mxu0 0.0
        %2278 = vmatpush2.msra.mxu0 0.0
        %2279 = vmatprep.subr.mxu0 0.0
        %2280 = vmatpush2.msra.mxu0 0.0
        %2281 = vmatprep.subr.mxu0 0.0
        %2282 = vmatpush2.msra.mxu0 0.0
        %2283 = vmatprep.subr.mxu0 0.0
        %2284 = vmatpush2.msra.mxu0 0.0
        %2285 = vmatprep.subr.mxu0 0.0
        %2286 = vmatpush2.msra.mxu0 0.0
        %2287 = vmatprep.subr.mxu0 0.0
        %2288 = vmatpush2.msra.mxu0 0.0
        %2289 = vmatprep.mubr.f32.mxu0 0.0
        %2290 = vmatmul.mubr.f32.gmra.mxu0 %v2223
        %v2291 = vpop.f32.mrf.mxu0
        %v2292 = vadd.f32 %v360, %v2291
        %v2293 = vpop.f32.mrf.mxu0
        %2294 = vdwg.mxu0
        %v2295 = vmax.f32 %v2292, 0.0
        %v2297 = vsel %vm381, %v2295, 0
        %2299 = vmatprep.subr.mxu0 0.0
        %2300 = vmatpush1.msra.mxu0 0.0
        %2301 = vmatprep.subr.mxu0 0.0
        %2302 = vmatpush1.msra.mxu0 0.0
        %2303 = vmatprep.subr.mxu0 0.0
        %2304 = vmatpush1.msra.mxu0 0.0
        %2305 = vmatprep.subr.mxu0 0.0
        %2306 = vmatpush1.msra.mxu0 0.0
        %2307 = vmatprep.subr.mxu0 0.0
        %2308 = vmatpush1.msra.mxu0 0.0
        %2309 = vmatprep.subr.mxu0 0.0
        %2310 = vmatpush1.msra.mxu0 0.0
        %2311 = vmatprep.subr.mxu0 0.0
        %2312 = vmatpush1.msra.mxu0 0.0
        %2313 = vmatprep.subr.mxu0 0.0
        %2314 = vmatpush1.msra.mxu0 0.0
        %2315 = vmatprep.subr.mxu0 0.0
        %2316 = vmatpush1.msra.mxu0 %v328
        %2317 = vmatprep.subr.mxu0 0.0
        %2318 = vmatpush1.msra.mxu0 %v327
        %2319 = vmatprep.subr.mxu0 0.0
        %2320 = vmatpush1.msra.mxu0 %v326
        %2321 = vmatprep.subr.mxu0 0.0
        %2322 = vmatpush1.msra.mxu0 %v325
        %2323 = vmatprep.subr.mxu0 0.0
        %2324 = vmatpush1.msra.mxu0 %v324
        %2325 = vmatprep.subr.mxu0 0.0
        %2326 = vmatpush1.msra.mxu0 %v323
        %2327 = vmatprep.subr.mxu0 0.0
        %2328 = vmatpush1.msra.mxu0 %v322
        %2329 = vmatprep.subr.mxu0 0.0
        %2330 = vmatpush1.msra.mxu0 %v321
        %2331 = vmatprep.subr.mxu0 0.0
        %2332 = vmatpush2.msra.mxu0 0.0
        %2333 = vmatprep.subr.mxu0 0.0
        %2334 = vmatpush2.msra.mxu0 0.0
        %2335 = vmatprep.subr.mxu0 0.0
        %2336 = vmatpush2.msra.mxu0 0.0
        %2337 = vmatprep.subr.mxu0 0.0
        %2338 = vmatpush2.msra.mxu0 0.0
        %2339 = vmatprep.subr.mxu0 0.0
        %2340 = vmatpush2.msra.mxu0 0.0
        %2341 = vmatprep.subr.mxu0 0.0
        %2342 = vmatpush2.msra.mxu0 0.0
        %2343 = vmatprep.subr.mxu0 0.0
        %2344 = vmatpush2.msra.mxu0 0.0
        %2345 = vmatprep.subr.mxu0 0.0
        %2346 = vmatpush2.msra.mxu0 0.0
        %2347 = vmatprep.subr.mxu0 0.0
        %2348 = vmatpush2.msra.mxu0 0.0
        %2349 = vmatprep.subr.mxu0 0.0
        %2350 = vmatpush2.msra.mxu0 0.0
        %2351 = vmatprep.subr.mxu0 0.0
        %2352 = vmatpush2.msra.mxu0 0.0
        %2353 = vmatprep.subr.mxu0 0.0
        %2354 = vmatpush2.msra.mxu0 0.0
        %2355 = vmatprep.subr.mxu0 0.0
        %2356 = vmatpush2.msra.mxu0 0.0
        %2357 = vmatprep.subr.mxu0 0.0
        %2358 = vmatpush2.msra.mxu0 0.0
        %2359 = vmatprep.subr.mxu0 0.0
        %2360 = vmatpush2.msra.mxu0 0.0
        %2361 = vmatprep.subr.mxu0 0.0
        %2362 = vmatpush2.msra.mxu0 0.0
        %2363 = vmatprep.mubr.f32.mxu0 0.0
        %2364 = vmatmul.mubr.f32.gmra.mxu0 %v2297
        %v2365 = vpop.f32.mrf.mxu0
        %v2366 = vadd.f32 %v361, %v2365
        %v2367 = vpop.f32.mrf.mxu0
        %2368 = vdwg.mxu0
        %v2369 = vmax.f32 %v2366, 0.0
        %v2371 = vsel %vm381, %v2369, 0
        %2373 = vmatprep.subr.mxu0 0.0
        %2374 = vmatpush1.msra.mxu0 0.0
        %2375 = vmatprep.subr.mxu0 0.0
        %2376 = vmatpush1.msra.mxu0 0.0
        %2377 = vmatprep.subr.mxu0 0.0
        %2378 = vmatpush1.msra.mxu0 0.0
        %2379 = vmatprep.subr.mxu0 0.0
        %2380 = vmatpush1.msra.mxu0 0.0
        %2381 = vmatprep.subr.mxu0 0.0
        %2382 = vmatpush1.msra.mxu0 0.0
        %2383 = vmatprep.subr.mxu0 0.0
        %2384 = vmatpush1.msra.mxu0 0.0
        %2385 = vmatprep.subr.mxu0 0.0
        %2386 = vmatpush1.msra.mxu0 0.0
        %2387 = vmatprep.subr.mxu0 0.0
        %2388 = vmatpush1.msra.mxu0 0.0
        %2389 = vmatprep.subr.mxu0 0.0
        %2390 = vmatpush1.msra.mxu0 %v336
        %2391 = vmatprep.subr.mxu0 0.0
        %2392 = vmatpush1.msra.mxu0 %v335
        %2393 = vmatprep.subr.mxu0 0.0
        %2394 = vmatpush1.msra.mxu0 %v334
        %2395 = vmatprep.subr.mxu0 0.0
        %2396 = vmatpush1.msra.mxu0 %v333
        %2397 = vmatprep.subr.mxu0 0.0
        %2398 = vmatpush1.msra.mxu0 %v332
        %2399 = vmatprep.subr.mxu0 0.0
        %2400 = vmatpush1.msra.mxu0 %v331
        %2401 = vmatprep.subr.mxu0 0.0
        %2402 = vmatpush1.msra.mxu0 %v330
        %2403 = vmatprep.subr.mxu0 0.0
        %2404 = vmatpush1.msra.mxu0 %v329
        %2405 = vmatprep.subr.mxu0 0.0
        %2406 = vmatpush2.msra.mxu0 0.0
        %2407 = vmatprep.subr.mxu0 0.0
        %2408 = vmatpush2.msra.mxu0 0.0
        %2409 = vmatprep.subr.mxu0 0.0
        %2410 = vmatpush2.msra.mxu0 0.0
        %2411 = vmatprep.subr.mxu0 0.0
        %2412 = vmatpush2.msra.mxu0 0.0
        %2413 = vmatprep.subr.mxu0 0.0
        %2414 = vmatpush2.msra.mxu0 0.0
        %2415 = vmatprep.subr.mxu0 0.0
        %2416 = vmatpush2.msra.mxu0 0.0
        %2417 = vmatprep.subr.mxu0 0.0
        %2418 = vmatpush2.msra.mxu0 0.0
        %2419 = vmatprep.subr.mxu0 0.0
        %2420 = vmatpush2.msra.mxu0 0.0
        %2421 = vmatprep.subr.mxu0 0.0
        %2422 = vmatpush2.msra.mxu0 0.0
        %2423 = vmatprep.subr.mxu0 0.0
        %2424 = vmatpush2.msra.mxu0 0.0
        %2425 = vmatprep.subr.mxu0 0.0
        %2426 = vmatpush2.msra.mxu0 0.0
        %2427 = vmatprep.subr.mxu0 0.0
        %2428 = vmatpush2.msra.mxu0 0.0
        %2429 = vmatprep.subr.mxu0 0.0
        %2430 = vmatpush2.msra.mxu0 0.0
        %2431 = vmatprep.subr.mxu0 0.0
        %2432 = vmatpush2.msra.mxu0 0.0
        %2433 = vmatprep.subr.mxu0 0.0
        %2434 = vmatpush2.msra.mxu0 0.0
        %2435 = vmatprep.subr.mxu0 0.0
        %2436 = vmatpush2.msra.mxu0 0.0
        %2437 = vmatprep.mubr.f32.mxu0 0.0
        %2438 = vmatmul.mubr.f32.gmra.mxu0 %v2371
        %v2439 = vpop.f32.mrf.mxu0
        %v2440 = vadd.f32 %v362, %v2439
        %v2441 = vpop.f32.mrf.mxu0
        %2442 = vdwg.mxu0
        %v2443 = vmax.f32 %v2440, 0.0
        %vm2444 = vcmp.ne.f32.partialorder %v2440, %v2440
        %v2445 = vadd.f32 %v2440, 0.0
        %v2446 = vand.u32 2147483647, %v2440
        %v2447 = vsub.f32 0.0, %v2446
        %v2448 = vmul.f32 %v2447, 1.442695
        %v2449 = vpow.pop %v2448
        %v2450 = vadd.f32 %v2449, 1.0
        %v2451 = vlog2.pop %v2450
        %v2452 = vmul.f32 %v2451, 0.6931472
        %v2453 = vmul.f32 -0.5, %v2449
        %v2454 = vadd.f32 %v2453, 1.0
        %v2455 = vmul.f32 %v2454, %v2449
        %v2456 = vand.u32 2147483647, %v2449
        %vm2457 = vcmp.lt.f32.partialorder %v2456, 0.0004427343
        %v2458 = vsel %vm2457, %v2455, %v2452
        %v2459 = vadd.f32 %v2443, %v2458
        %v2460 = vsel %vm2444, %v2445, %v2459
        %v2461 = vsel %vm377, %v2460, %v2440
        %2463 = vrot.lane.b32.xlu0 %v2067, 48
        %v2464 = vpop.permute.xlu0 %2463
        %v2466 = vmul.f32 %v2461, %v2464
        %2468 = vrot.lane.b32.xlu0 %v2466, 112
        %v2469 = vpop.permute.xlu0 %2468
        %v2471 = vadd.f32 %v2461, %v2469
        %2473 = vrot.lane.b32.xlu0 %v2471, 96
        %v2474 = vpop.permute.xlu0 %2473
        %v2475 = vsel %vm456, %v2474, 0
        %2477 = vmatprep.subr.mxu0 0.0
        %2478 = vmatpush1.msra.mxu0 0.0
        %2479 = vmatprep.subr.mxu0 0.0
        %2480 = vmatpush1.msra.mxu0 0.0
        %2481 = vmatprep.subr.mxu0 0.0
        %2482 = vmatpush1.msra.mxu0 0.0
        %2483 = vmatprep.subr.mxu0 0.0
        %2484 = vmatpush1.msra.mxu0 0.0
        %2485 = vmatprep.subr.mxu0 0.0
        %2486 = vmatpush1.msra.mxu0 0.0
        %2487 = vmatprep.subr.mxu0 0.0
        %2488 = vmatpush1.msra.mxu0 0.0
        %2489 = vmatprep.subr.mxu0 0.0
        %2490 = vmatpush1.msra.mxu0 0.0
        %2491 = vmatprep.subr.mxu0 0.0
        %2492 = vmatpush1.msra.mxu0 0.0
        %2493 = vmatprep.subr.mxu0 0.0
        %2494 = vmatpush1.msra.mxu0 0.0
        %2495 = vmatprep.subr.mxu0 0.0
        %2496 = vmatpush1.msra.mxu0 0.0
        %2497 = vmatprep.subr.mxu0 0.0
        %2498 = vmatpush1.msra.mxu0 0.0
        %2499 = vmatprep.subr.mxu0 0.0
        %2500 = vmatpush1.msra.mxu0 0.0
        %2501 = vmatprep.subr.mxu0 0.0
        %2502 = vmatpush1.msra.mxu0 0.0
        %2503 = vmatprep.subr.mxu0 0.0
        %2504 = vmatpush1.msra.mxu0 0.0
        %2505 = vmatprep.subr.mxu0 0.0
        %2506 = vmatpush1.msra.mxu0 %v338
        %2507 = vmatprep.subr.mxu0 0.0
        %2508 = vmatpush1.msra.mxu0 %v337
        %2509 = vmatprep.subr.mxu0 0.0
        %2510 = vmatpush2.msra.mxu0 0.0
        %2511 = vmatprep.subr.mxu0 0.0
        %2512 = vmatpush2.msra.mxu0 0.0
        %2513 = vmatprep.subr.mxu0 0.0
        %2514 = vmatpush2.msra.mxu0 0.0
        %2515 = vmatprep.subr.mxu0 0.0
        %2516 = vmatpush2.msra.mxu0 0.0
        %2517 = vmatprep.subr.mxu0 0.0
        %2518 = vmatpush2.msra.mxu0 0.0
        %2519 = vmatprep.subr.mxu0 0.0
        %2520 = vmatpush2.msra.mxu0 0.0
        %2521 = vmatprep.subr.mxu0 0.0
        %2522 = vmatpush2.msra.mxu0 0.0
        %2523 = vmatprep.subr.mxu0 0.0
        %2524 = vmatpush2.msra.mxu0 0.0
        %2525 = vmatprep.subr.mxu0 0.0
        %2526 = vmatpush2.msra.mxu0 0.0
        %2527 = vmatprep.subr.mxu0 0.0
        %2528 = vmatpush2.msra.mxu0 0.0
        %2529 = vmatprep.subr.mxu0 0.0
        %2530 = vmatpush2.msra.mxu0 0.0
        %2531 = vmatprep.subr.mxu0 0.0
        %2532 = vmatpush2.msra.mxu0 0.0
        %2533 = vmatprep.subr.mxu0 0.0
        %2534 = vmatpush2.msra.mxu0 0.0
        %2535 = vmatprep.subr.mxu0 0.0
        %2536 = vmatpush2.msra.mxu0 0.0
        %2537 = vmatprep.subr.mxu0 0.0
        %2538 = vmatpush2.msra.mxu0 0.0
        %2539 = vmatprep.subr.mxu0 0.0
        %2540 = vmatpush2.msra.mxu0 0.0
        %2541 = vmatprep.mubr.f32.mxu0 0.0
        %2542 = vmatmul.mubr.f32.gmra.mxu0 %v2475
        %v2543 = vpop.f32.mrf.mxu0
        %v2544 = vadd.f32 %v363, %v2543
        %v2545 = vpop.f32.mrf.mxu0
        %2546 = vdwg.mxu0
        %v2547 = vmax.f32 %v2544, 0.0
        %v2549 = vsel %vm896, %v2547, 0
        %2551 = vmatprep.subr.mxu0 0.0
        %2552 = vmatpush1.msra.mxu0 0.0
        %2553 = vmatprep.subr.mxu0 0.0
        %2554 = vmatpush1.msra.mxu0 0.0
        %2555 = vmatprep.subr.mxu0 0.0
        %2556 = vmatpush1.msra.mxu0 0.0
        %2557 = vmatprep.subr.mxu0 0.0
        %2558 = vmatpush1.msra.mxu0 0.0
        %2559 = vmatprep.subr.mxu0 0.0
        %2560 = vmatpush1.msra.mxu0 0.0
        %2561 = vmatprep.subr.mxu0 0.0
        %2562 = vmatpush1.msra.mxu0 0.0
        %2563 = vmatprep.subr.mxu0 0.0
        %2564 = vmatpush1.msra.mxu0 0.0
        %2565 = vmatprep.subr.mxu0 0.0
        %2566 = vmatpush1.msra.mxu0 0.0
        %2567 = vmatprep.subr.mxu0 0.0
        %2568 = vmatpush1.msra.mxu0 0.0
        %2569 = vmatprep.subr.mxu0 0.0
        %2570 = vmatpush1.msra.mxu0 0.0
        %2571 = vmatprep.subr.mxu0 0.0
        %2572 = vmatpush1.msra.mxu0 0.0
        %2573 = vmatprep.subr.mxu0 0.0
        %2574 = vmatpush1.msra.mxu0 0.0
        %2575 = vmatprep.subr.mxu0 0.0
        %2576 = vmatpush1.msra.mxu0 %v342
        %2577 = vmatprep.subr.mxu0 0.0
        %2578 = vmatpush1.msra.mxu0 %v341
        %2579 = vmatprep.subr.mxu0 0.0
        %2580 = vmatpush1.msra.mxu0 %v340
        %2581 = vmatprep.subr.mxu0 0.0
        %2582 = vmatpush1.msra.mxu0 %v339
        %2583 = vmatprep.subr.mxu0 0.0
        %2584 = vmatpush2.msra.mxu0 0.0
        %2585 = vmatprep.subr.mxu0 0.0
        %2586 = vmatpush2.msra.mxu0 0.0
        %2587 = vmatprep.subr.mxu0 0.0
        %2588 = vmatpush2.msra.mxu0 0.0
        %2589 = vmatprep.subr.mxu0 0.0
        %2590 = vmatpush2.msra.mxu0 0.0
        %2591 = vmatprep.subr.mxu0 0.0
        %2592 = vmatpush2.msra.mxu0 0.0
        %2593 = vmatprep.subr.mxu0 0.0
        %2594 = vmatpush2.msra.mxu0 0.0
        %2595 = vmatprep.subr.mxu0 0.0
        %2596 = vmatpush2.msra.mxu0 0.0
        %2597 = vmatprep.subr.mxu0 0.0
        %2598 = vmatpush2.msra.mxu0 0.0
        %2599 = vmatprep.subr.mxu0 0.0
        %2600 = vmatpush2.msra.mxu0 0.0
        %2601 = vmatprep.subr.mxu0 0.0
        %2602 = vmatpush2.msra.mxu0 0.0
        %2603 = vmatprep.subr.mxu0 0.0
        %2604 = vmatpush2.msra.mxu0 0.0
        %2605 = vmatprep.subr.mxu0 0.0
        %2606 = vmatpush2.msra.mxu0 0.0
        %2607 = vmatprep.subr.mxu0 0.0
        %2608 = vmatpush2.msra.mxu0 0.0
        %2609 = vmatprep.subr.mxu0 0.0
        %2610 = vmatpush2.msra.mxu0 0.0
        %2611 = vmatprep.subr.mxu0 0.0
        %2612 = vmatpush2.msra.mxu0 0.0
        %2613 = vmatprep.subr.mxu0 0.0
        %2614 = vmatpush2.msra.mxu0 0.0
        %2615 = vmatprep.mubr.f32.mxu0 0.0
        %2616 = vmatmul.mubr.f32.gmra.mxu0 %v2549
        %v2617 = vpop.f32.mrf.mxu0
        %v2618 = vadd.f32 %v364, %v2617
        %v2619 = vpop.f32.mrf.mxu0
        %2620 = vdwg.mxu0
        %v2621 = vmax.f32 %v2618, 0.0
        %v2623 = vsel %vm896, %v2621, 0
        %2625 = vmatprep.subr.mxu0 0.0
        %2626 = vmatpush1.msra.mxu0 0.0
        %2627 = vmatprep.subr.mxu0 0.0
        %2628 = vmatpush1.msra.mxu0 0.0
        %2629 = vmatprep.subr.mxu0 0.0
        %2630 = vmatpush1.msra.mxu0 0.0
        %2631 = vmatprep.subr.mxu0 0.0
        %2632 = vmatpush1.msra.mxu0 0.0
        %2633 = vmatprep.subr.mxu0 0.0
        %2634 = vmatpush1.msra.mxu0 0.0
        %2635 = vmatprep.subr.mxu0 0.0
        %2636 = vmatpush1.msra.mxu0 0.0
        %2637 = vmatprep.subr.mxu0 0.0
        %2638 = vmatpush1.msra.mxu0 0.0
        %2639 = vmatprep.subr.mxu0 0.0
        %2640 = vmatpush1.msra.mxu0 0.0
        %2641 = vmatprep.subr.mxu0 0.0
        %2642 = vmatpush1.msra.mxu0 0.0
        %2643 = vmatprep.subr.mxu0 0.0
        %2644 = vmatpush1.msra.mxu0 0.0
        %2645 = vmatprep.subr.mxu0 0.0
        %2646 = vmatpush1.msra.mxu0 0.0
        %2647 = vmatprep.subr.mxu0 0.0
        %2648 = vmatpush1.msra.mxu0 0.0
        %2649 = vmatprep.subr.mxu0 0.0
        %2650 = vmatpush1.msra.mxu0 %v346
        %2651 = vmatprep.subr.mxu0 0.0
        %2652 = vmatpush1.msra.mxu0 %v345
        %2653 = vmatprep.subr.mxu0 0.0
        %2654 = vmatpush1.msra.mxu0 %v344
        %2655 = vmatprep.subr.mxu0 0.0
        %2656 = vmatpush1.msra.mxu0 %v343
        %2657 = vmatprep.subr.mxu0 0.0
        %2658 = vmatpush2.msra.mxu0 0.0
        %2659 = vmatprep.subr.mxu0 0.0
        %2660 = vmatpush2.msra.mxu0 0.0
        %2661 = vmatprep.subr.mxu0 0.0
        %2662 = vmatpush2.msra.mxu0 0.0
        %2663 = vmatprep.subr.mxu0 0.0
        %2664 = vmatpush2.msra.mxu0 0.0
        %2665 = vmatprep.subr.mxu0 0.0
        %2666 = vmatpush2.msra.mxu0 0.0
        %2667 = vmatprep.subr.mxu0 0.0
        %2668 = vmatpush2.msra.mxu0 0.0
        %2669 = vmatprep.subr.mxu0 0.0
        %2670 = vmatpush2.msra.mxu0 0.0
        %2671 = vmatprep.subr.mxu0 0.0
        %2672 = vmatpush2.msra.mxu0 0.0
        %2673 = vmatprep.subr.mxu0 0.0
        %2674 = vmatpush2.msra.mxu0 0.0
        %2675 = vmatprep.subr.mxu0 0.0
        %2676 = vmatpush2.msra.mxu0 0.0
        %2677 = vmatprep.subr.mxu0 0.0
        %2678 = vmatpush2.msra.mxu0 0.0
        %2679 = vmatprep.subr.mxu0 0.0
        %2680 = vmatpush2.msra.mxu0 0.0
        %2681 = vmatprep.subr.mxu0 0.0
        %2682 = vmatpush2.msra.mxu0 0.0
        %2683 = vmatprep.subr.mxu0 0.0
        %2684 = vmatpush2.msra.mxu0 0.0
        %2685 = vmatprep.subr.mxu0 0.0
        %2686 = vmatpush2.msra.mxu0 0.0
        %2687 = vmatprep.subr.mxu0 0.0
        %2688 = vmatpush2.msra.mxu0 0.0
        %2689 = vmatprep.mubr.f32.mxu0 0.0
        %2690 = vmatmul.mubr.f32.gmra.mxu0 %v2623
        %v2691 = vpop.f32.mrf.mxu0
        %v2692 = vadd.f32 %v365, %v2691
        %v2693 = vpop.f32.mrf.mxu0
        %2694 = vdwg.mxu0
        %v2695 = vmax.f32 %v2692, 0.0
        %v2697 = vsel %vm896, %v2695, 0
        %2699 = vmatprep.subr.mxu0 0.0
        %2700 = vmatpush1.msra.mxu0 0.0
        %2701 = vmatprep.subr.mxu0 0.0
        %2702 = vmatpush1.msra.mxu0 0.0
        %2703 = vmatprep.subr.mxu0 0.0
        %2704 = vmatpush1.msra.mxu0 0.0
        %2705 = vmatprep.subr.mxu0 0.0
        %2706 = vmatpush1.msra.mxu0 0.0
        %2707 = vmatprep.subr.mxu0 0.0
        %2708 = vmatpush1.msra.mxu0 0.0
        %2709 = vmatprep.subr.mxu0 0.0
        %2710 = vmatpush1.msra.mxu0 0.0
        %2711 = vmatprep.subr.mxu0 0.0
        %2712 = vmatpush1.msra.mxu0 0.0
        %2713 = vmatprep.subr.mxu0 0.0
        %2714 = vmatpush1.msra.mxu0 0.0
        %2715 = vmatprep.subr.mxu0 0.0
        %2716 = vmatpush1.msra.mxu0 0.0
        %2717 = vmatprep.subr.mxu0 0.0
        %2718 = vmatpush1.msra.mxu0 0.0
        %2719 = vmatprep.subr.mxu0 0.0
        %2720 = vmatpush1.msra.mxu0 0.0
        %2721 = vmatprep.subr.mxu0 0.0
        %2722 = vmatpush1.msra.mxu0 0.0
        %2723 = vmatprep.subr.mxu0 0.0
        %2724 = vmatpush1.msra.mxu0 %v350
        %2725 = vmatprep.subr.mxu0 0.0
        %2726 = vmatpush1.msra.mxu0 %v349
        %2727 = vmatprep.subr.mxu0 0.0
        %2728 = vmatpush1.msra.mxu0 %v348
        %2729 = vmatprep.subr.mxu0 0.0
        %2730 = vmatpush1.msra.mxu0 %v347
        %2731 = vmatprep.subr.mxu0 0.0
        %2732 = vmatpush2.msra.mxu0 0.0
        %2733 = vmatprep.subr.mxu0 0.0
        %2734 = vmatpush2.msra.mxu0 0.0
        %2735 = vmatprep.subr.mxu0 0.0
        %2736 = vmatpush2.msra.mxu0 0.0
        %2737 = vmatprep.subr.mxu0 0.0
        %2738 = vmatpush2.msra.mxu0 0.0
        %2739 = vmatprep.subr.mxu0 0.0
        %2740 = vmatpush2.msra.mxu0 0.0
        %2741 = vmatprep.subr.mxu0 0.0
        %2742 = vmatpush2.msra.mxu0 0.0
        %2743 = vmatprep.subr.mxu0 0.0
        %2744 = vmatpush2.msra.mxu0 0.0
        %2745 = vmatprep.subr.mxu0 0.0
        %2746 = vmatpush2.msra.mxu0 0.0
        %2747 = vmatprep.subr.mxu0 0.0
        %2748 = vmatpush2.msra.mxu0 0.0
        %2749 = vmatprep.subr.mxu0 0.0
        %2750 = vmatpush2.msra.mxu0 0.0
        %2751 = vmatprep.subr.mxu0 0.0
        %2752 = vmatpush2.msra.mxu0 0.0
        %2753 = vmatprep.subr.mxu0 0.0
        %2754 = vmatpush2.msra.mxu0 0.0
        %2755 = vmatprep.subr.mxu0 0.0
        %2756 = vmatpush2.msra.mxu0 0.0
        %2757 = vmatprep.subr.mxu0 0.0
        %2758 = vmatpush2.msra.mxu0 0.0
        %2759 = vmatprep.subr.mxu0 0.0
        %2760 = vmatpush2.msra.mxu0 0.0
        %2761 = vmatprep.subr.mxu0 0.0
        %2762 = vmatpush2.msra.mxu0 0.0
        %2763 = vmatprep.mubr.f32.mxu0 0.0
        %2764 = vmatmul.mubr.f32.gmra.mxu0 %v2697
        %v2765 = vpop.f32.mrf.mxu0
        %v2766 = vadd.f32 %v366, %v2765
        %v2767 = vpop.f32.mrf.mxu0
        %2768 = vdwg.mxu0
        %v2769 = vmax.f32 %v2766, 0.0
        %v2771 = vsel %vm896, %v2769, 0
        %2773 = vmatprep.subr.mxu0 0.0
        %2774 = vmatpush1.msra.mxu0 0.0
        %2775 = vmatprep.subr.mxu0 0.0
        %2776 = vmatpush1.msra.mxu0 0.0
        %2777 = vmatprep.subr.mxu0 0.0
        %2778 = vmatpush1.msra.mxu0 0.0
        %2779 = vmatprep.subr.mxu0 0.0
        %2780 = vmatpush1.msra.mxu0 0.0
        %2781 = vmatprep.subr.mxu0 0.0
        %2782 = vmatpush1.msra.mxu0 0.0
        %2783 = vmatprep.subr.mxu0 0.0
        %2784 = vmatpush1.msra.mxu0 0.0
        %2785 = vmatprep.subr.mxu0 0.0
        %2786 = vmatpush1.msra.mxu0 0.0
        %2787 = vmatprep.subr.mxu0 0.0
        %2788 = vmatpush1.msra.mxu0 0.0
        %2789 = vmatprep.subr.mxu0 0.0
        %2790 = vmatpush1.msra.mxu0 0.0
        %2791 = vmatprep.subr.mxu0 0.0
        %2792 = vmatpush1.msra.mxu0 0.0
        %2793 = vmatprep.subr.mxu0 0.0
        %2794 = vmatpush1.msra.mxu0 0.0
        %2795 = vmatprep.subr.mxu0 0.0
        %2796 = vmatpush1.msra.mxu0 0.0
        %2797 = vmatprep.subr.mxu0 %v358
        %2798 = vmatpush1.msra.mxu0 %v357
        %2799 = vmatprep.subr.mxu0 %v356
        %2800 = vmatpush1.msra.mxu0 %v355
        %2801 = vmatprep.subr.mxu0 %v354
        %2802 = vmatpush1.msra.mxu0 %v353
        %2803 = vmatprep.subr.mxu0 %v352
        %2804 = vmatpush1.msra.mxu0 %v351
        %2805 = vmatprep.subr.mxu0 0.0
        %2806 = vmatpush2.msra.mxu0 0.0
        %2807 = vmatprep.subr.mxu0 0.0
        %2808 = vmatpush2.msra.mxu0 0.0
        %2809 = vmatprep.subr.mxu0 0.0
        %2810 = vmatpush2.msra.mxu0 0.0
        %2811 = vmatprep.subr.mxu0 0.0
        %2812 = vmatpush2.msra.mxu0 0.0
        %2813 = vmatprep.subr.mxu0 0.0
        %2814 = vmatpush2.msra.mxu0 0.0
        %2815 = vmatprep.subr.mxu0 0.0
        %2816 = vmatpush2.msra.mxu0 0.0
        %2817 = vmatprep.subr.mxu0 0.0
        %2818 = vmatpush2.msra.mxu0 0.0
        %2819 = vmatprep.subr.mxu0 0.0
        %2820 = vmatpush2.msra.mxu0 0.0
        %2821 = vmatprep.subr.mxu0 0.0
        %2822 = vmatpush2.msra.mxu0 0.0
        %2823 = vmatprep.subr.mxu0 0.0
        %2824 = vmatpush2.msra.mxu0 0.0
        %2825 = vmatprep.subr.mxu0 0.0
        %2826 = vmatpush2.msra.mxu0 0.0
        %2827 = vmatprep.subr.mxu0 0.0
        %2828 = vmatpush2.msra.mxu0 0.0
        %2829 = vmatprep.subr.mxu0 0.0
        %2830 = vmatpush2.msra.mxu0 0.0
        %2831 = vmatprep.subr.mxu0 0.0
        %2832 = vmatpush2.msra.mxu0 0.0
        %2833 = vmatprep.subr.mxu0 0.0
        %2834 = vmatpush2.msra.mxu0 0.0
        %2835 = vmatprep.subr.mxu0 0.0
        %2836 = vmatpush2.msra.mxu0 0.0
        %2837 = vmatprep.mubr.f32.mxu0 0.0
        %2838 = vmatmul.mubr.f32.gmra.mxu0 %v2771
        %v2839 = vpop.f32.mrf.mxu0
        %v2840 = vadd.f32 0.0, %v2839
        %v2841 = vpop.f32.mrf.mxu0
        %v2842 = vadd.f32 0.0, %v2841
        %2843 = vdwg.mxu0
        %2846 = vrot.lane.b32.xlu0 %v2840, 64
        %v2847 = vpop.permute.xlu0 %2846
        %2848 = vrot.lane.b32.xlu0 %v2842, 64
        %v2849 = vpop.permute.xlu0 %2848
        %v2850 = vsel %vm381, %v2847, %v2849
        %v2853 = vadd.f32 %v2220, %v2847
        %v2854 = vadd.f32 %v2221, %v2850
        %v2855 = vadd.f32 %v2853, %v2218
        %v2856 = vadd.f32 %v2854, %v2219
        %v2857 = vxor.u32 %v2855, 2147483648
        %v2858 = vxor.u32 %v2856, 2147483648
        %v2859 = vmul.f32 %v2857, 1.442695
        %v2860 = vpow.pop %v2859
        %v2861 = vmul.f32 %v2858, 1.442695
        %v2862 = vpow.pop %v2861
        %v2863 = vadd.f32 %v2860, 1.0
        %v2864 = vadd.f32 %v2862, 1.0
        %v2865 = vrcp.pop %v2863
        %v2866 = vmul.f32 1.0, %v2865
        %v2867 = vrcp.pop %v2864
        %v2868 = vmul.f32 1.0, %v2867
        %v2869 = vmul.f32 %v2866, %v2219
        %v2870 = vadd.f32 %v2854, %v2869
        %v2871 = vtanh.pop %v2870
        %v2872 = vsub.f32 1.0, %v2868
        %2874 = vrot.lane.b32.xlu0 %v2871, 64
        %v2875 = vpop.permute.xlu0 %2874
        %v2877 = vmul.f32 %v2872, %v2875
        %v2878 = vmul.f32 %v2868, %v2054
        %v2879 = vadd.f32 %v2877, %v2878
        %s2880 = scalar_lea.vmem %s282, 32 [#allocation11]
        %2881 = vst.msk [vmem:[%s2880] sm:$0xff] %vm381, %v2461
        %2883 = vrot.lane.b32.xlu0 %v2879, 64
        %v2884 = vpop.permute.xlu0 %2883
        %2886 = vst.msk [vmem:[%s2880] sm:$0xff] %vm1234, %v2884
        %2887 = vst.msk [vmem:[%s2880 + $0x8] sm:$0xff] %vm896, %v2769
        %2888 = vst.msk [vmem:[%s2880 + $0x8] sm:$0xff] %vm1237, %v2471
        %s2889 = scalar_lea.vmem %s236, 24 [#allocation3]
        %v2890 = vld [vmem:[%s2889] sm:$0xff]
        %s2891 = scalar_lea.vmem %s245, 24 [#allocation6]
        %v2892 = vld [vmem:[%s2891] sm:$0xff]
        %v2893 = vsel %vm381, %v2879, 0
        %2895 = vmatprep.subr.mxu0 0.0
        %2896 = vmatpush1.msra.mxu0 0.0
        %2897 = vmatprep.subr.mxu0 0.0
        %2898 = vmatpush1.msra.mxu0 0.0
        %2899 = vmatprep.subr.mxu0 0.0
        %2900 = vmatpush1.msra.mxu0 0.0
        %2901 = vmatprep.subr.mxu0 0.0
        %2902 = vmatpush1.msra.mxu0 0.0
        %2903 = vmatprep.subr.mxu0 0.0
        %2904 = vmatpush1.msra.mxu0 0.0
        %2905 = vmatprep.subr.mxu0 0.0
        %2906 = vmatpush1.msra.mxu0 0.0
        %2907 = vmatprep.subr.mxu0 0.0
        %2908 = vmatpush1.msra.mxu0 0.0
        %2909 = vmatprep.subr.mxu0 0.0
        %2910 = vmatpush1.msra.mxu0 0.0
        %2911 = vmatprep.subr.mxu0 %v308
        %2912 = vmatpush1.msra.mxu0 %v307
        %2913 = vmatprep.subr.mxu0 %v306
        %2914 = vmatpush1.msra.mxu0 %v305
        %2915 = vmatprep.subr.mxu0 %v304
        %2916 = vmatpush1.msra.mxu0 %v303
        %2917 = vmatprep.subr.mxu0 %v302
        %2918 = vmatpush1.msra.mxu0 %v301
        %2919 = vmatprep.subr.mxu0 %v300
        %2920 = vmatpush1.msra.mxu0 %v299
        %2921 = vmatprep.subr.mxu0 %v298
        %2922 = vmatpush1.msra.mxu0 %v297
        %2923 = vmatprep.subr.mxu0 %v296
        %2924 = vmatpush1.msra.mxu0 %v295
        %2925 = vmatprep.subr.mxu0 %v294
        %2926 = vmatpush1.msra.mxu0 %v293
        %2927 = vmatprep.subr.mxu0 0.0
        %2928 = vmatpush2.msra.mxu0 0.0
        %2929 = vmatprep.subr.mxu0 0.0
        %2930 = vmatpush2.msra.mxu0 0.0
        %2931 = vmatprep.subr.mxu0 0.0
        %2932 = vmatpush2.msra.mxu0 0.0
        %2933 = vmatprep.subr.mxu0 0.0
        %2934 = vmatpush2.msra.mxu0 0.0
        %2935 = vmatprep.subr.mxu0 0.0
        %2936 = vmatpush2.msra.mxu0 0.0
        %2937 = vmatprep.subr.mxu0 0.0
        %2938 = vmatpush2.msra.mxu0 0.0
        %2939 = vmatprep.subr.mxu0 0.0
        %2940 = vmatpush2.msra.mxu0 0.0
        %2941 = vmatprep.subr.mxu0 0.0
        %2942 = vmatpush2.msra.mxu0 0.0
        %2943 = vmatprep.subr.mxu0 0.0
        %2944 = vmatpush2.msra.mxu0 0.0
        %2945 = vmatprep.subr.mxu0 0.0
        %2946 = vmatpush2.msra.mxu0 0.0
        %2947 = vmatprep.subr.mxu0 0.0
        %2948 = vmatpush2.msra.mxu0 0.0
        %2949 = vmatprep.subr.mxu0 0.0
        %2950 = vmatpush2.msra.mxu0 0.0
        %2951 = vmatprep.subr.mxu0 0.0
        %2952 = vmatpush2.msra.mxu0 0.0
        %2953 = vmatprep.subr.mxu0 0.0
        %2954 = vmatpush2.msra.mxu0 0.0
        %2955 = vmatprep.subr.mxu0 0.0
        %2956 = vmatpush2.msra.mxu0 0.0
        %2957 = vmatprep.subr.mxu0 0.0
        %2958 = vmatpush2.msra.mxu0 0.0
        %2959 = vmatprep.mubr.f32.mxu0 0.0
        %2960 = vmatmul.mubr.f32.gmra.mxu0 %v2893
        %v2961 = vpop.f32.mrf.mxu0
        %v2962 = vadd.f32 0.0, %v2961
        %v2963 = vpop.f32.mrf.mxu0
        %v2964 = vadd.f32 0.0, %v2963
        %2965 = vdwg.mxu0
        %v2967 = vsel %vm456, %v2890, 0
        %2969 = vmatprep.subr.mxu0 0.0
        %2970 = vmatpush1.msra.mxu0 0.0
        %2971 = vmatprep.subr.mxu0 0.0
        %2972 = vmatpush1.msra.mxu0 0.0
        %2973 = vmatprep.subr.mxu0 0.0
        %2974 = vmatpush1.msra.mxu0 0.0
        %2975 = vmatprep.subr.mxu0 0.0
        %2976 = vmatpush1.msra.mxu0 0.0
        %2977 = vmatprep.subr.mxu0 0.0
        %2978 = vmatpush1.msra.mxu0 0.0
        %2979 = vmatprep.subr.mxu0 0.0
        %2980 = vmatpush1.msra.mxu0 0.0
        %2981 = vmatprep.subr.mxu0 0.0
        %2982 = vmatpush1.msra.mxu0 0.0
        %2983 = vmatprep.subr.mxu0 0.0
        %2984 = vmatpush1.msra.mxu0 0.0
        %2985 = vmatprep.subr.mxu0 0.0
        %2986 = vmatpush1.msra.mxu0 0.0
        %2987 = vmatprep.subr.mxu0 0.0
        %2988 = vmatpush1.msra.mxu0 0.0
        %2989 = vmatprep.subr.mxu0 0.0
        %2990 = vmatpush1.msra.mxu0 0.0
        %2991 = vmatprep.subr.mxu0 0.0
        %2992 = vmatpush1.msra.mxu0 0.0
        %2993 = vmatprep.subr.mxu0 0.0
        %2994 = vmatpush1.msra.mxu0 0.0
        %2995 = vmatprep.subr.mxu0 0.0
        %2996 = vmatpush1.msra.mxu0 0.0
        %2997 = vmatprep.subr.mxu0 %v312
        %2998 = vmatpush1.msra.mxu0 %v311
        %2999 = vmatprep.subr.mxu0 %v310
        %3000 = vmatpush1.msra.mxu0 %v309
        %3001 = vmatprep.subr.mxu0 0.0
        %3002 = vmatpush2.msra.mxu0 0.0
        %3003 = vmatprep.subr.mxu0 0.0
        %3004 = vmatpush2.msra.mxu0 0.0
        %3005 = vmatprep.subr.mxu0 0.0
        %3006 = vmatpush2.msra.mxu0 0.0
        %3007 = vmatprep.subr.mxu0 0.0
        %3008 = vmatpush2.msra.mxu0 0.0
        %3009 = vmatprep.subr.mxu0 0.0
        %3010 = vmatpush2.msra.mxu0 0.0
        %3011 = vmatprep.subr.mxu0 0.0
        %3012 = vmatpush2.msra.mxu0 0.0
        %3013 = vmatprep.subr.mxu0 0.0
        %3014 = vmatpush2.msra.mxu0 0.0
        %3015 = vmatprep.subr.mxu0 0.0
        %3016 = vmatpush2.msra.mxu0 0.0
        %3017 = vmatprep.subr.mxu0 0.0
        %3018 = vmatpush2.msra.mxu0 0.0
        %3019 = vmatprep.subr.mxu0 0.0
        %3020 = vmatpush2.msra.mxu0 0.0
        %3021 = vmatprep.subr.mxu0 0.0
        %3022 = vmatpush2.msra.mxu0 0.0
        %3023 = vmatprep.subr.mxu0 0.0
        %3024 = vmatpush2.msra.mxu0 0.0
        %3025 = vmatprep.subr.mxu0 0.0
        %3026 = vmatpush2.msra.mxu0 0.0
        %3027 = vmatprep.subr.mxu0 0.0
        %3028 = vmatpush2.msra.mxu0 0.0
        %3029 = vmatprep.subr.mxu0 0.0
        %3030 = vmatpush2.msra.mxu0 0.0
        %3031 = vmatprep.subr.mxu0 0.0
        %3032 = vmatpush2.msra.mxu0 0.0
        %3033 = vmatprep.mubr.f32.mxu0 0.0
        %3034 = vmatmul.mubr.f32.gmra.mxu0 %v2967
        %v3035 = vpop.f32.mrf.mxu0
        %v3036 = vadd.f32 0.0, %v3035
        %v3037 = vpop.f32.mrf.mxu0
        %v3038 = vadd.f32 0.0, %v3037
        %3039 = vdwg.mxu0
        %v3040 = vadd.f32 %v2962, %v3036
        %v3041 = vadd.f32 %v3040, %v359
        %v3042 = vmax.f32 %v3041, 0.0
        %v3043 = vadd.f32 %v2962, %v544
        %v3044 = vadd.f32 %v2964, %v547
        %v3045 = vadd.f32 %v3036, %v562
        %v3046 = vadd.f32 %v3038, %v565
        %v3048 = vsel %vm381, %v3042, 0
        %3050 = vmatprep.subr.mxu0 0.0
        %3051 = vmatpush1.msra.mxu0 0.0
        %3052 = vmatprep.subr.mxu0 0.0
        %3053 = vmatpush1.msra.mxu0 0.0
        %3054 = vmatprep.subr.mxu0 0.0
        %3055 = vmatpush1.msra.mxu0 0.0
        %3056 = vmatprep.subr.mxu0 0.0
        %3057 = vmatpush1.msra.mxu0 0.0
        %3058 = vmatprep.subr.mxu0 0.0
        %3059 = vmatpush1.msra.mxu0 0.0
        %3060 = vmatprep.subr.mxu0 0.0
        %3061 = vmatpush1.msra.mxu0 0.0
        %3062 = vmatprep.subr.mxu0 0.0
        %3063 = vmatpush1.msra.mxu0 0.0
        %3064 = vmatprep.subr.mxu0 0.0
        %3065 = vmatpush1.msra.mxu0 0.0
        %3066 = vmatprep.subr.mxu0 0.0
        %3067 = vmatpush1.msra.mxu0 %v320
        %3068 = vmatprep.subr.mxu0 0.0
        %3069 = vmatpush1.msra.mxu0 %v319
        %3070 = vmatprep.subr.mxu0 0.0
        %3071 = vmatpush1.msra.mxu0 %v318
        %3072 = vmatprep.subr.mxu0 0.0
        %3073 = vmatpush1.msra.mxu0 %v317
        %3074 = vmatprep.subr.mxu0 0.0
        %3075 = vmatpush1.msra.mxu0 %v316
        %3076 = vmatprep.subr.mxu0 0.0
        %3077 = vmatpush1.msra.mxu0 %v315
        %3078 = vmatprep.subr.mxu0 0.0
        %3079 = vmatpush1.msra.mxu0 %v314
        %3080 = vmatprep.subr.mxu0 0.0
        %3081 = vmatpush1.msra.mxu0 %v313
        %3082 = vmatprep.subr.mxu0 0.0
        %3083 = vmatpush2.msra.mxu0 0.0
        %3084 = vmatprep.subr.mxu0 0.0
        %3085 = vmatpush2.msra.mxu0 0.0
        %3086 = vmatprep.subr.mxu0 0.0
        %3087 = vmatpush2.msra.mxu0 0.0
        %3088 = vmatprep.subr.mxu0 0.0
        %3089 = vmatpush2.msra.mxu0 0.0
        %3090 = vmatprep.subr.mxu0 0.0
        %3091 = vmatpush2.msra.mxu0 0.0
        %3092 = vmatprep.subr.mxu0 0.0
        %3093 = vmatpush2.msra.mxu0 0.0
        %3094 = vmatprep.subr.mxu0 0.0
        %3095 = vmatpush2.msra.mxu0 0.0
        %3096 = vmatprep.subr.mxu0 0.0
        %3097 = vmatpush2.msra.mxu0 0.0
        %3098 = vmatprep.subr.mxu0 0.0
        %3099 = vmatpush2.msra.mxu0 0.0
        %3100 = vmatprep.subr.mxu0 0.0
        %3101 = vmatpush2.msra.mxu0 0.0
        %3102 = vmatprep.subr.mxu0 0.0
        %3103 = vmatpush2.msra.mxu0 0.0
        %3104 = vmatprep.subr.mxu0 0.0
        %3105 = vmatpush2.msra.mxu0 0.0
        %3106 = vmatprep.subr.mxu0 0.0
        %3107 = vmatpush2.msra.mxu0 0.0
        %3108 = vmatprep.subr.mxu0 0.0
        %3109 = vmatpush2.msra.mxu0 0.0
        %3110 = vmatprep.subr.mxu0 0.0
        %3111 = vmatpush2.msra.mxu0 0.0
        %3112 = vmatprep.subr.mxu0 0.0
        %3113 = vmatpush2.msra.mxu0 0.0
        %3114 = vmatprep.mubr.f32.mxu0 0.0
        %3115 = vmatmul.mubr.f32.gmra.mxu0 %v3048
        %v3116 = vpop.f32.mrf.mxu0
        %v3117 = vadd.f32 %v360, %v3116
        %v3118 = vpop.f32.mrf.mxu0
        %3119 = vdwg.mxu0
        %v3120 = vmax.f32 %v3117, 0.0
        %v3122 = vsel %vm381, %v3120, 0
        %3124 = vmatprep.subr.mxu0 0.0
        %3125 = vmatpush1.msra.mxu0 0.0
        %3126 = vmatprep.subr.mxu0 0.0
        %3127 = vmatpush1.msra.mxu0 0.0
        %3128 = vmatprep.subr.mxu0 0.0
        %3129 = vmatpush1.msra.mxu0 0.0
        %3130 = vmatprep.subr.mxu0 0.0
        %3131 = vmatpush1.msra.mxu0 0.0
        %3132 = vmatprep.subr.mxu0 0.0
        %3133 = vmatpush1.msra.mxu0 0.0
        %3134 = vmatprep.subr.mxu0 0.0
        %3135 = vmatpush1.msra.mxu0 0.0
        %3136 = vmatprep.subr.mxu0 0.0
        %3137 = vmatpush1.msra.mxu0 0.0
        %3138 = vmatprep.subr.mxu0 0.0
        %3139 = vmatpush1.msra.mxu0 0.0
        %3140 = vmatprep.subr.mxu0 0.0
        %3141 = vmatpush1.msra.mxu0 %v328
        %3142 = vmatprep.subr.mxu0 0.0
        %3143 = vmatpush1.msra.mxu0 %v327
        %3144 = vmatprep.subr.mxu0 0.0
        %3145 = vmatpush1.msra.mxu0 %v326
        %3146 = vmatprep.subr.mxu0 0.0
        %3147 = vmatpush1.msra.mxu0 %v325
        %3148 = vmatprep.subr.mxu0 0.0
        %3149 = vmatpush1.msra.mxu0 %v324
        %3150 = vmatprep.subr.mxu0 0.0
        %3151 = vmatpush1.msra.mxu0 %v323
        %3152 = vmatprep.subr.mxu0 0.0
        %3153 = vmatpush1.msra.mxu0 %v322
        %3154 = vmatprep.subr.mxu0 0.0
        %3155 = vmatpush1.msra.mxu0 %v321
        %3156 = vmatprep.subr.mxu0 0.0
        %3157 = vmatpush2.msra.mxu0 0.0
        %3158 = vmatprep.subr.mxu0 0.0
        %3159 = vmatpush2.msra.mxu0 0.0
        %3160 = vmatprep.subr.mxu0 0.0
        %3161 = vmatpush2.msra.mxu0 0.0
        %3162 = vmatprep.subr.mxu0 0.0
        %3163 = vmatpush2.msra.mxu0 0.0
        %3164 = vmatprep.subr.mxu0 0.0
        %3165 = vmatpush2.msra.mxu0 0.0
        %3166 = vmatprep.subr.mxu0 0.0
        %3167 = vmatpush2.msra.mxu0 0.0
        %3168 = vmatprep.subr.mxu0 0.0
        %3169 = vmatpush2.msra.mxu0 0.0
        %3170 = vmatprep.subr.mxu0 0.0
        %3171 = vmatpush2.msra.mxu0 0.0
        %3172 = vmatprep.subr.mxu0 0.0
        %3173 = vmatpush2.msra.mxu0 0.0
        %3174 = vmatprep.subr.mxu0 0.0
        %3175 = vmatpush2.msra.mxu0 0.0
        %3176 = vmatprep.subr.mxu0 0.0
        %3177 = vmatpush2.msra.mxu0 0.0
        %3178 = vmatprep.subr.mxu0 0.0
        %3179 = vmatpush2.msra.mxu0 0.0
        %3180 = vmatprep.subr.mxu0 0.0
        %3181 = vmatpush2.msra.mxu0 0.0
        %3182 = vmatprep.subr.mxu0 0.0
        %3183 = vmatpush2.msra.mxu0 0.0
        %3184 = vmatprep.subr.mxu0 0.0
        %3185 = vmatpush2.msra.mxu0 0.0
        %3186 = vmatprep.subr.mxu0 0.0
        %3187 = vmatpush2.msra.mxu0 0.0
        %3188 = vmatprep.mubr.f32.mxu0 0.0
        %3189 = vmatmul.mubr.f32.gmra.mxu0 %v3122
        %v3190 = vpop.f32.mrf.mxu0
        %v3191 = vadd.f32 %v361, %v3190
        %v3192 = vpop.f32.mrf.mxu0
        %3193 = vdwg.mxu0
        %v3194 = vmax.f32 %v3191, 0.0
        %v3196 = vsel %vm381, %v3194, 0
        %3198 = vmatprep.subr.mxu0 0.0
        %3199 = vmatpush1.msra.mxu0 0.0
        %3200 = vmatprep.subr.mxu0 0.0
        %3201 = vmatpush1.msra.mxu0 0.0
        %3202 = vmatprep.subr.mxu0 0.0
        %3203 = vmatpush1.msra.mxu0 0.0
        %3204 = vmatprep.subr.mxu0 0.0
        %3205 = vmatpush1.msra.mxu0 0.0
        %3206 = vmatprep.subr.mxu0 0.0
        %3207 = vmatpush1.msra.mxu0 0.0
        %3208 = vmatprep.subr.mxu0 0.0
        %3209 = vmatpush1.msra.mxu0 0.0
        %3210 = vmatprep.subr.mxu0 0.0
        %3211 = vmatpush1.msra.mxu0 0.0
        %3212 = vmatprep.subr.mxu0 0.0
        %3213 = vmatpush1.msra.mxu0 0.0
        %3214 = vmatprep.subr.mxu0 0.0
        %3215 = vmatpush1.msra.mxu0 %v336
        %3216 = vmatprep.subr.mxu0 0.0
        %3217 = vmatpush1.msra.mxu0 %v335
        %3218 = vmatprep.subr.mxu0 0.0
        %3219 = vmatpush1.msra.mxu0 %v334
        %3220 = vmatprep.subr.mxu0 0.0
        %3221 = vmatpush1.msra.mxu0 %v333
        %3222 = vmatprep.subr.mxu0 0.0
        %3223 = vmatpush1.msra.mxu0 %v332
        %3224 = vmatprep.subr.mxu0 0.0
        %3225 = vmatpush1.msra.mxu0 %v331
        %3226 = vmatprep.subr.mxu0 0.0
        %3227 = vmatpush1.msra.mxu0 %v330
        %3228 = vmatprep.subr.mxu0 0.0
        %3229 = vmatpush1.msra.mxu0 %v329
        %3230 = vmatprep.subr.mxu0 0.0
        %3231 = vmatpush2.msra.mxu0 0.0
        %3232 = vmatprep.subr.mxu0 0.0
        %3233 = vmatpush2.msra.mxu0 0.0
        %3234 = vmatprep.subr.mxu0 0.0
        %3235 = vmatpush2.msra.mxu0 0.0
        %3236 = vmatprep.subr.mxu0 0.0
        %3237 = vmatpush2.msra.mxu0 0.0
        %3238 = vmatprep.subr.mxu0 0.0
        %3239 = vmatpush2.msra.mxu0 0.0
        %3240 = vmatprep.subr.mxu0 0.0
        %3241 = vmatpush2.msra.mxu0 0.0
        %3242 = vmatprep.subr.mxu0 0.0
        %3243 = vmatpush2.msra.mxu0 0.0
        %3244 = vmatprep.subr.mxu0 0.0
        %3245 = vmatpush2.msra.mxu0 0.0
        %3246 = vmatprep.subr.mxu0 0.0
        %3247 = vmatpush2.msra.mxu0 0.0
        %3248 = vmatprep.subr.mxu0 0.0
        %3249 = vmatpush2.msra.mxu0 0.0
        %3250 = vmatprep.subr.mxu0 0.0
        %3251 = vmatpush2.msra.mxu0 0.0
        %3252 = vmatprep.subr.mxu0 0.0
        %3253 = vmatpush2.msra.mxu0 0.0
        %3254 = vmatprep.subr.mxu0 0.0
        %3255 = vmatpush2.msra.mxu0 0.0
        %3256 = vmatprep.subr.mxu0 0.0
        %3257 = vmatpush2.msra.mxu0 0.0
        %3258 = vmatprep.subr.mxu0 0.0
        %3259 = vmatpush2.msra.mxu0 0.0
        %3260 = vmatprep.subr.mxu0 0.0
        %3261 = vmatpush2.msra.mxu0 0.0
        %3262 = vmatprep.mubr.f32.mxu0 0.0
        %3263 = vmatmul.mubr.f32.gmra.mxu0 %v3196
        %v3264 = vpop.f32.mrf.mxu0
        %v3265 = vadd.f32 %v362, %v3264
        %v3266 = vpop.f32.mrf.mxu0
        %3267 = vdwg.mxu0
        %v3268 = vmax.f32 %v3265, 0.0
        %vm3269 = vcmp.ne.f32.partialorder %v3265, %v3265
        %v3270 = vadd.f32 %v3265, 0.0
        %v3271 = vand.u32 2147483647, %v3265
        %v3272 = vsub.f32 0.0, %v3271
        %v3273 = vmul.f32 %v3272, 1.442695
        %v3274 = vpow.pop %v3273
        %v3275 = vadd.f32 %v3274, 1.0
        %v3276 = vlog2.pop %v3275
        %v3277 = vmul.f32 %v3276, 0.6931472
        %v3278 = vmul.f32 -0.5, %v3274
        %v3279 = vadd.f32 %v3278, 1.0
        %v3280 = vmul.f32 %v3279, %v3274
        %v3281 = vand.u32 2147483647, %v3274
        %vm3282 = vcmp.lt.f32.partialorder %v3281, 0.0004427343
        %v3283 = vsel %vm3282, %v3280, %v3277
        %v3284 = vadd.f32 %v3268, %v3283
        %v3285 = vsel %vm3269, %v3270, %v3284
        %v3286 = vsel %vm377, %v3285, %v3265
        %3288 = vrot.lane.b32.xlu0 %v2892, 48
        %v3289 = vpop.permute.xlu0 %3288
        %v3291 = vmul.f32 %v3286, %v3289
        %3293 = vrot.lane.b32.xlu0 %v3291, 112
        %v3294 = vpop.permute.xlu0 %3293
        %v3296 = vadd.f32 %v3286, %v3294
        %3298 = vrot.lane.b32.xlu0 %v3296, 96
        %v3299 = vpop.permute.xlu0 %3298
        %v3300 = vsel %vm456, %v3299, 0
        %3302 = vmatprep.subr.mxu0 0.0
        %3303 = vmatpush1.msra.mxu0 0.0
        %3304 = vmatprep.subr.mxu0 0.0
        %3305 = vmatpush1.msra.mxu0 0.0
        %3306 = vmatprep.subr.mxu0 0.0
        %3307 = vmatpush1.msra.mxu0 0.0
        %3308 = vmatprep.subr.mxu0 0.0
        %3309 = vmatpush1.msra.mxu0 0.0
        %3310 = vmatprep.subr.mxu0 0.0
        %3311 = vmatpush1.msra.mxu0 0.0
        %3312 = vmatprep.subr.mxu0 0.0
        %3313 = vmatpush1.msra.mxu0 0.0
        %3314 = vmatprep.subr.mxu0 0.0
        %3315 = vmatpush1.msra.mxu0 0.0
        %3316 = vmatprep.subr.mxu0 0.0
        %3317 = vmatpush1.msra.mxu0 0.0
        %3318 = vmatprep.subr.mxu0 0.0
        %3319 = vmatpush1.msra.mxu0 0.0
        %3320 = vmatprep.subr.mxu0 0.0
        %3321 = vmatpush1.msra.mxu0 0.0
        %3322 = vmatprep.subr.mxu0 0.0
        %3323 = vmatpush1.msra.mxu0 0.0
        %3324 = vmatprep.subr.mxu0 0.0
        %3325 = vmatpush1.msra.mxu0 0.0
        %3326 = vmatprep.subr.mxu0 0.0
        %3327 = vmatpush1.msra.mxu0 0.0
        %3328 = vmatprep.subr.mxu0 0.0
        %3329 = vmatpush1.msra.mxu0 0.0
        %3330 = vmatprep.subr.mxu0 0.0
        %3331 = vmatpush1.msra.mxu0 %v338
        %3332 = vmatprep.subr.mxu0 0.0
        %3333 = vmatpush1.msra.mxu0 %v337
        %3334 = vmatprep.subr.mxu0 0.0
        %3335 = vmatpush2.msra.mxu0 0.0
        %3336 = vmatprep.subr.mxu0 0.0
        %3337 = vmatpush2.msra.mxu0 0.0
        %3338 = vmatprep.subr.mxu0 0.0
        %3339 = vmatpush2.msra.mxu0 0.0
        %3340 = vmatprep.subr.mxu0 0.0
        %3341 = vmatpush2.msra.mxu0 0.0
        %3342 = vmatprep.subr.mxu0 0.0
        %3343 = vmatpush2.msra.mxu0 0.0
        %3344 = vmatprep.subr.mxu0 0.0
        %3345 = vmatpush2.msra.mxu0 0.0
        %3346 = vmatprep.subr.mxu0 0.0
        %3347 = vmatpush2.msra.mxu0 0.0
        %3348 = vmatprep.subr.mxu0 0.0
        %3349 = vmatpush2.msra.mxu0 0.0
        %3350 = vmatprep.subr.mxu0 0.0
        %3351 = vmatpush2.msra.mxu0 0.0
        %3352 = vmatprep.subr.mxu0 0.0
        %3353 = vmatpush2.msra.mxu0 0.0
        %3354 = vmatprep.subr.mxu0 0.0
        %3355 = vmatpush2.msra.mxu0 0.0
        %3356 = vmatprep.subr.mxu0 0.0
        %3357 = vmatpush2.msra.mxu0 0.0
        %3358 = vmatprep.subr.mxu0 0.0
        %3359 = vmatpush2.msra.mxu0 0.0
        %3360 = vmatprep.subr.mxu0 0.0
        %3361 = vmatpush2.msra.mxu0 0.0
        %3362 = vmatprep.subr.mxu0 0.0
        %3363 = vmatpush2.msra.mxu0 0.0
        %3364 = vmatprep.subr.mxu0 0.0
        %3365 = vmatpush2.msra.mxu0 0.0
        %3366 = vmatprep.mubr.f32.mxu0 0.0
        %3367 = vmatmul.mubr.f32.gmra.mxu0 %v3300
        %v3368 = vpop.f32.mrf.mxu0
        %v3369 = vadd.f32 %v363, %v3368
        %v3370 = vpop.f32.mrf.mxu0
        %3371 = vdwg.mxu0
        %v3372 = vmax.f32 %v3369, 0.0
        %v3374 = vsel %vm896, %v3372, 0
        %3376 = vmatprep.subr.mxu0 0.0
        %3377 = vmatpush1.msra.mxu0 0.0
        %3378 = vmatprep.subr.mxu0 0.0
        %3379 = vmatpush1.msra.mxu0 0.0
        %3380 = vmatprep.subr.mxu0 0.0
        %3381 = vmatpush1.msra.mxu0 0.0
        %3382 = vmatprep.subr.mxu0 0.0
        %3383 = vmatpush1.msra.mxu0 0.0
        %3384 = vmatprep.subr.mxu0 0.0
        %3385 = vmatpush1.msra.mxu0 0.0
        %3386 = vmatprep.subr.mxu0 0.0
        %3387 = vmatpush1.msra.mxu0 0.0
        %3388 = vmatprep.subr.mxu0 0.0
        %3389 = vmatpush1.msra.mxu0 0.0
        %3390 = vmatprep.subr.mxu0 0.0
        %3391 = vmatpush1.msra.mxu0 0.0
        %3392 = vmatprep.subr.mxu0 0.0
        %3393 = vmatpush1.msra.mxu0 0.0
        %3394 = vmatprep.subr.mxu0 0.0
        %3395 = vmatpush1.msra.mxu0 0.0
        %3396 = vmatprep.subr.mxu0 0.0
        %3397 = vmatpush1.msra.mxu0 0.0
        %3398 = vmatprep.subr.mxu0 0.0
        %3399 = vmatpush1.msra.mxu0 0.0
        %3400 = vmatprep.subr.mxu0 0.0
        %3401 = vmatpush1.msra.mxu0 %v342
        %3402 = vmatprep.subr.mxu0 0.0
        %3403 = vmatpush1.msra.mxu0 %v341
        %3404 = vmatprep.subr.mxu0 0.0
        %3405 = vmatpush1.msra.mxu0 %v340
        %3406 = vmatprep.subr.mxu0 0.0
        %3407 = vmatpush1.msra.mxu0 %v339
        %3408 = vmatprep.subr.mxu0 0.0
        %3409 = vmatpush2.msra.mxu0 0.0
        %3410 = vmatprep.subr.mxu0 0.0
        %3411 = vmatpush2.msra.mxu0 0.0
        %3412 = vmatprep.subr.mxu0 0.0
        %3413 = vmatpush2.msra.mxu0 0.0
        %3414 = vmatprep.subr.mxu0 0.0
        %3415 = vmatpush2.msra.mxu0 0.0
        %3416 = vmatprep.subr.mxu0 0.0
        %3417 = vmatpush2.msra.mxu0 0.0
        %3418 = vmatprep.subr.mxu0 0.0
        %3419 = vmatpush2.msra.mxu0 0.0
        %3420 = vmatprep.subr.mxu0 0.0
        %3421 = vmatpush2.msra.mxu0 0.0
        %3422 = vmatprep.subr.mxu0 0.0
        %3423 = vmatpush2.msra.mxu0 0.0
        %3424 = vmatprep.subr.mxu0 0.0
        %3425 = vmatpush2.msra.mxu0 0.0
        %3426 = vmatprep.subr.mxu0 0.0
        %3427 = vmatpush2.msra.mxu0 0.0
        %3428 = vmatprep.subr.mxu0 0.0
        %3429 = vmatpush2.msra.mxu0 0.0
        %3430 = vmatprep.subr.mxu0 0.0
        %3431 = vmatpush2.msra.mxu0 0.0
        %3432 = vmatprep.subr.mxu0 0.0
        %3433 = vmatpush2.msra.mxu0 0.0
        %3434 = vmatprep.subr.mxu0 0.0
        %3435 = vmatpush2.msra.mxu0 0.0
        %3436 = vmatprep.subr.mxu0 0.0
        %3437 = vmatpush2.msra.mxu0 0.0
        %3438 = vmatprep.subr.mxu0 0.0
        %3439 = vmatpush2.msra.mxu0 0.0
        %3440 = vmatprep.mubr.f32.mxu0 0.0
        %3441 = vmatmul.mubr.f32.gmra.mxu0 %v3374
        %v3442 = vpop.f32.mrf.mxu0
        %v3443 = vadd.f32 %v364, %v3442
        %v3444 = vpop.f32.mrf.mxu0
        %3445 = vdwg.mxu0
        %v3446 = vmax.f32 %v3443, 0.0
        %v3448 = vsel %vm896, %v3446, 0
        %3450 = vmatprep.subr.mxu0 0.0
        %3451 = vmatpush1.msra.mxu0 0.0
        %3452 = vmatprep.subr.mxu0 0.0
        %3453 = vmatpush1.msra.mxu0 0.0
        %3454 = vmatprep.subr.mxu0 0.0
        %3455 = vmatpush1.msra.mxu0 0.0
        %3456 = vmatprep.subr.mxu0 0.0
        %3457 = vmatpush1.msra.mxu0 0.0
        %3458 = vmatprep.subr.mxu0 0.0
        %3459 = vmatpush1.msra.mxu0 0.0
        %3460 = vmatprep.subr.mxu0 0.0
        %3461 = vmatpush1.msra.mxu0 0.0
        %3462 = vmatprep.subr.mxu0 0.0
        %3463 = vmatpush1.msra.mxu0 0.0
        %3464 = vmatprep.subr.mxu0 0.0
        %3465 = vmatpush1.msra.mxu0 0.0
        %3466 = vmatprep.subr.mxu0 0.0
        %3467 = vmatpush1.msra.mxu0 0.0
        %3468 = vmatprep.subr.mxu0 0.0
        %3469 = vmatpush1.msra.mxu0 0.0
        %3470 = vmatprep.subr.mxu0 0.0
        %3471 = vmatpush1.msra.mxu0 0.0
        %3472 = vmatprep.subr.mxu0 0.0
        %3473 = vmatpush1.msra.mxu0 0.0
        %3474 = vmatprep.subr.mxu0 0.0
        %3475 = vmatpush1.msra.mxu0 %v346
        %3476 = vmatprep.subr.mxu0 0.0
        %3477 = vmatpush1.msra.mxu0 %v345
        %3478 = vmatprep.subr.mxu0 0.0
        %3479 = vmatpush1.msra.mxu0 %v344
        %3480 = vmatprep.subr.mxu0 0.0
        %3481 = vmatpush1.msra.mxu0 %v343
        %3482 = vmatprep.subr.mxu0 0.0
        %3483 = vmatpush2.msra.mxu0 0.0
        %3484 = vmatprep.subr.mxu0 0.0
        %3485 = vmatpush2.msra.mxu0 0.0
        %3486 = vmatprep.subr.mxu0 0.0
        %3487 = vmatpush2.msra.mxu0 0.0
        %3488 = vmatprep.subr.mxu0 0.0
        %3489 = vmatpush2.msra.mxu0 0.0
        %3490 = vmatprep.subr.mxu0 0.0
        %3491 = vmatpush2.msra.mxu0 0.0
        %3492 = vmatprep.subr.mxu0 0.0
        %3493 = vmatpush2.msra.mxu0 0.0
        %3494 = vmatprep.subr.mxu0 0.0
        %3495 = vmatpush2.msra.mxu0 0.0
        %3496 = vmatprep.subr.mxu0 0.0
        %3497 = vmatpush2.msra.mxu0 0.0
        %3498 = vmatprep.subr.mxu0 0.0
        %3499 = vmatpush2.msra.mxu0 0.0
        %3500 = vmatprep.subr.mxu0 0.0
        %3501 = vmatpush2.msra.mxu0 0.0
        %3502 = vmatprep.subr.mxu0 0.0
        %3503 = vmatpush2.msra.mxu0 0.0
        %3504 = vmatprep.subr.mxu0 0.0
        %3505 = vmatpush2.msra.mxu0 0.0
        %3506 = vmatprep.subr.mxu0 0.0
        %3507 = vmatpush2.msra.mxu0 0.0
        %3508 = vmatprep.subr.mxu0 0.0
        %3509 = vmatpush2.msra.mxu0 0.0
        %3510 = vmatprep.subr.mxu0 0.0
        %3511 = vmatpush2.msra.mxu0 0.0
        %3512 = vmatprep.subr.mxu0 0.0
        %3513 = vmatpush2.msra.mxu0 0.0
        %3514 = vmatprep.mubr.f32.mxu0 0.0
        %3515 = vmatmul.mubr.f32.gmra.mxu0 %v3448
        %v3516 = vpop.f32.mrf.mxu0
        %v3517 = vadd.f32 %v365, %v3516
        %v3518 = vpop.f32.mrf.mxu0
        %3519 = vdwg.mxu0
        %v3520 = vmax.f32 %v3517, 0.0
        %v3522 = vsel %vm896, %v3520, 0
        %3524 = vmatprep.subr.mxu0 0.0
        %3525 = vmatpush1.msra.mxu0 0.0
        %3526 = vmatprep.subr.mxu0 0.0
        %3527 = vmatpush1.msra.mxu0 0.0
        %3528 = vmatprep.subr.mxu0 0.0
        %3529 = vmatpush1.msra.mxu0 0.0
        %3530 = vmatprep.subr.mxu0 0.0
        %3531 = vmatpush1.msra.mxu0 0.0
        %3532 = vmatprep.subr.mxu0 0.0
        %3533 = vmatpush1.msra.mxu0 0.0
        %3534 = vmatprep.subr.mxu0 0.0
        %3535 = vmatpush1.msra.mxu0 0.0
        %3536 = vmatprep.subr.mxu0 0.0
        %3537 = vmatpush1.msra.mxu0 0.0
        %3538 = vmatprep.subr.mxu0 0.0
        %3539 = vmatpush1.msra.mxu0 0.0
        %3540 = vmatprep.subr.mxu0 0.0
        %3541 = vmatpush1.msra.mxu0 0.0
        %3542 = vmatprep.subr.mxu0 0.0
        %3543 = vmatpush1.msra.mxu0 0.0
        %3544 = vmatprep.subr.mxu0 0.0
        %3545 = vmatpush1.msra.mxu0 0.0
        %3546 = vmatprep.subr.mxu0 0.0
        %3547 = vmatpush1.msra.mxu0 0.0
        %3548 = vmatprep.subr.mxu0 0.0
        %3549 = vmatpush1.msra.mxu0 %v350
        %3550 = vmatprep.subr.mxu0 0.0
        %3551 = vmatpush1.msra.mxu0 %v349
        %3552 = vmatprep.subr.mxu0 0.0
        %3553 = vmatpush1.msra.mxu0 %v348
        %3554 = vmatprep.subr.mxu0 0.0
        %3555 = vmatpush1.msra.mxu0 %v347
        %3556 = vmatprep.subr.mxu0 0.0
        %3557 = vmatpush2.msra.mxu0 0.0
        %3558 = vmatprep.subr.mxu0 0.0
        %3559 = vmatpush2.msra.mxu0 0.0
        %3560 = vmatprep.subr.mxu0 0.0
        %3561 = vmatpush2.msra.mxu0 0.0
        %3562 = vmatprep.subr.mxu0 0.0
        %3563 = vmatpush2.msra.mxu0 0.0
        %3564 = vmatprep.subr.mxu0 0.0
        %3565 = vmatpush2.msra.mxu0 0.0
        %3566 = vmatprep.subr.mxu0 0.0
        %3567 = vmatpush2.msra.mxu0 0.0
        %3568 = vmatprep.subr.mxu0 0.0
        %3569 = vmatpush2.msra.mxu0 0.0
        %3570 = vmatprep.subr.mxu0 0.0
        %3571 = vmatpush2.msra.mxu0 0.0
        %3572 = vmatprep.subr.mxu0 0.0
        %3573 = vmatpush2.msra.mxu0 0.0
        %3574 = vmatprep.subr.mxu0 0.0
        %3575 = vmatpush2.msra.mxu0 0.0
        %3576 = vmatprep.subr.mxu0 0.0
        %3577 = vmatpush2.msra.mxu0 0.0
        %3578 = vmatprep.subr.mxu0 0.0
        %3579 = vmatpush2.msra.mxu0 0.0
        %3580 = vmatprep.subr.mxu0 0.0
        %3581 = vmatpush2.msra.mxu0 0.0
        %3582 = vmatprep.subr.mxu0 0.0
        %3583 = vmatpush2.msra.mxu0 0.0
        %3584 = vmatprep.subr.mxu0 0.0
        %3585 = vmatpush2.msra.mxu0 0.0
        %3586 = vmatprep.subr.mxu0 0.0
        %3587 = vmatpush2.msra.mxu0 0.0
        %3588 = vmatprep.mubr.f32.mxu0 0.0
        %3589 = vmatmul.mubr.f32.gmra.mxu0 %v3522
        %v3590 = vpop.f32.mrf.mxu0
        %v3591 = vadd.f32 %v366, %v3590
        %v3592 = vpop.f32.mrf.mxu0
        %3593 = vdwg.mxu0
        %v3594 = vmax.f32 %v3591, 0.0
        %v3596 = vsel %vm896, %v3594, 0
        %3598 = vmatprep.subr.mxu0 0.0
        %3599 = vmatpush1.msra.mxu0 0.0
        %3600 = vmatprep.subr.mxu0 0.0
        %3601 = vmatpush1.msra.mxu0 0.0
        %3602 = vmatprep.subr.mxu0 0.0
        %3603 = vmatpush1.msra.mxu0 0.0
        %3604 = vmatprep.subr.mxu0 0.0
        %3605 = vmatpush1.msra.mxu0 0.0
        %3606 = vmatprep.subr.mxu0 0.0
        %3607 = vmatpush1.msra.mxu0 0.0
        %3608 = vmatprep.subr.mxu0 0.0
        %3609 = vmatpush1.msra.mxu0 0.0
        %3610 = vmatprep.subr.mxu0 0.0
        %3611 = vmatpush1.msra.mxu0 0.0
        %3612 = vmatprep.subr.mxu0 0.0
        %3613 = vmatpush1.msra.mxu0 0.0
        %3614 = vmatprep.subr.mxu0 0.0
        %3615 = vmatpush1.msra.mxu0 0.0
        %3616 = vmatprep.subr.mxu0 0.0
        %3617 = vmatpush1.msra.mxu0 0.0
        %3618 = vmatprep.subr.mxu0 0.0
        %3619 = vmatpush1.msra.mxu0 0.0
        %3620 = vmatprep.subr.mxu0 0.0
        %3621 = vmatpush1.msra.mxu0 0.0
        %3622 = vmatprep.subr.mxu0 %v358
        %3623 = vmatpush1.msra.mxu0 %v357
        %3624 = vmatprep.subr.mxu0 %v356
        %3625 = vmatpush1.msra.mxu0 %v355
        %3626 = vmatprep.subr.mxu0 %v354
        %3627 = vmatpush1.msra.mxu0 %v353
        %3628 = vmatprep.subr.mxu0 %v352
        %3629 = vmatpush1.msra.mxu0 %v351
        %3630 = vmatprep.subr.mxu0 0.0
        %3631 = vmatpush2.msra.mxu0 0.0
        %3632 = vmatprep.subr.mxu0 0.0
        %3633 = vmatpush2.msra.mxu0 0.0
        %3634 = vmatprep.subr.mxu0 0.0
        %3635 = vmatpush2.msra.mxu0 0.0
        %3636 = vmatprep.subr.mxu0 0.0
        %3637 = vmatpush2.msra.mxu0 0.0
        %3638 = vmatprep.subr.mxu0 0.0
        %3639 = vmatpush2.msra.mxu0 0.0
        %3640 = vmatprep.subr.mxu0 0.0
        %3641 = vmatpush2.msra.mxu0 0.0
        %3642 = vmatprep.subr.mxu0 0.0
        %3643 = vmatpush2.msra.mxu0 0.0
        %3644 = vmatprep.subr.mxu0 0.0
        %3645 = vmatpush2.msra.mxu0 0.0
        %3646 = vmatprep.subr.mxu0 0.0
        %3647 = vmatpush2.msra.mxu0 0.0
        %3648 = vmatprep.subr.mxu0 0.0
        %3649 = vmatpush2.msra.mxu0 0.0
        %3650 = vmatprep.subr.mxu0 0.0
        %3651 = vmatpush2.msra.mxu0 0.0
        %3652 = vmatprep.subr.mxu0 0.0
        %3653 = vmatpush2.msra.mxu0 0.0
        %3654 = vmatprep.subr.mxu0 0.0
        %3655 = vmatpush2.msra.mxu0 0.0
        %3656 = vmatprep.subr.mxu0 0.0
        %3657 = vmatpush2.msra.mxu0 0.0
        %3658 = vmatprep.subr.mxu0 0.0
        %3659 = vmatpush2.msra.mxu0 0.0
        %3660 = vmatprep.subr.mxu0 0.0
        %3661 = vmatpush2.msra.mxu0 0.0
        %3662 = vmatprep.mubr.f32.mxu0 0.0
        %3663 = vmatmul.mubr.f32.gmra.mxu0 %v3596
        %v3664 = vpop.f32.mrf.mxu0
        %v3665 = vadd.f32 0.0, %v3664
        %v3666 = vpop.f32.mrf.mxu0
        %v3667 = vadd.f32 0.0, %v3666
        %3668 = vdwg.mxu0
        %3671 = vrot.lane.b32.xlu0 %v3665, 64
        %v3672 = vpop.permute.xlu0 %3671
        %3673 = vrot.lane.b32.xlu0 %v3667, 64
        %v3674 = vpop.permute.xlu0 %3673
        %v3675 = vsel %vm381, %v3672, %v3674
        %v3678 = vadd.f32 %v3045, %v3672
        %v3679 = vadd.f32 %v3046, %v3675
        %v3680 = vadd.f32 %v3678, %v3043
        %v3681 = vadd.f32 %v3679, %v3044
        %v3682 = vxor.u32 %v3680, 2147483648
        %v3683 = vxor.u32 %v3681, 2147483648
        %v3684 = vmul.f32 %v3682, 1.442695
        %v3685 = vpow.pop %v3684
        %v3686 = vmul.f32 %v3683, 1.442695
        %v3687 = vpow.pop %v3686
        %v3688 = vadd.f32 %v3685, 1.0
        %v3689 = vadd.f32 %v3687, 1.0
        %v3690 = vrcp.pop %v3688
        %v3691 = vmul.f32 1.0, %v3690
        %v3692 = vrcp.pop %v3689
        %v3693 = vmul.f32 1.0, %v3692
        %v3694 = vmul.f32 %v3691, %v3044
        %v3695 = vadd.f32 %v3679, %v3694
        %v3696 = vtanh.pop %v3695
        %v3697 = vsub.f32 1.0, %v3693
        %3699 = vrot.lane.b32.xlu0 %v3696, 64
        %v3700 = vpop.permute.xlu0 %3699
        %v3702 = vmul.f32 %v3697, %v3700
        %v3703 = vmul.f32 %v3693, %v2879
        %v3704 = vadd.f32 %v3702, %v3703
        %s3705 = scalar_lea.vmem %s282, 48 [#allocation11]
        %3706 = vst.msk [vmem:[%s3705] sm:$0xff] %vm381, %v3286
        %3708 = vrot.lane.b32.xlu0 %v3704, 64
        %v3709 = vpop.permute.xlu0 %3708
        %3711 = vst.msk [vmem:[%s3705] sm:$0xff] %vm1234, %v3709
        %3712 = vst.msk [vmem:[%s3705 + $0x8] sm:$0xff] %vm896, %v3594
        %3713 = vst.msk [vmem:[%s3705 + $0x8] sm:$0xff] %vm1237, %v3296
        %3714 = vst.msk [vmem:[#allocation2] sm:$0xff] %vm381, %v3704
        %s3715 = sand.u32 %s127, 1
        %s3716 = scalar_lea.sflag [#allocation5], %s3715
        %s3717 = sand.u32 %s127, 1
        %s3718 = smul.addr %s3717, 64
        %s3719 = scalar_lea.vmem [#allocation11], %s3718
        // Predicated region
        $region57: #{tpu_custom_call.1} parent=35 // pred_check
          %p3720 = pneg %p137
        $region58: #{tpu_custom_call.1} parent=35 // pred_check_branch
          %3722 = sbr.rel (%p3720) target = $region60
        $region59: #{tpu_custom_call.1} parent=35 // pred_region
          %s3723 = smul.u32 4, %s25
          %s3725 = ssub.s32 1024, 1024
          %3726 = vsyncadd %s3716, %s3725
          %s3727 = smul.addr %s3723, 2
          %s3728 = smul.addr %s3727, 128
          %s3729 = scalar_lea.hbm %s4, %s3728
          %s3730 = sshll.u32 %s3719, 4
          %s3731 = int_to_ptr.vmem [resolvable:$true] %s3730
          %3736 = dma.vmem_to_hbm [thread:$0]  %s3731, 1024, %s3729, %s3716, 256, 256, 16
        $region60: #{tpu_custom_call.1} parent=35 // pred_fallthru
          _
      $region36: #{tpu_custom_call.1} parent=5 // pred_fallthru
        _
      %p3737 = scmp.le.s32.totalorder 2, %s20
      // Predicated region
      $region61: #{tpu_custom_call.1} parent=5 // pred_check
        %p3738 = pneg %p3737
      $region62: #{tpu_custom_call.1} parent=5 // pred_check_branch
        %3740 = sbr.rel (%p3738) target = $region64
      $region63: #{tpu_custom_call.1} parent=5 // pred_region
        %s3741 = ssub.s32 %s20, 2
        // Predicated region
        $region65: #{tpu_custom_call.1} parent=63 // pred_check
          %p3742 = pneg %p143
        $region66: #{tpu_custom_call.1} parent=63 // pred_check_branch
          %3744 = sbr.rel (%p3742) target = $region68
        $region67: #{tpu_custom_call.1} parent=63 // pred_region
          %s3745 = sand.u32 %s128, 1
          %s3746 = scalar_lea.sflag [#allocation5], %s3745
          %s3747 = sand.u32 %s128, 1
          %s3748 = smul.addr %s3747, 64
          %s3749 = scalar_lea.vmem [#allocation11], %s3748
          %3750 = dma.done %s3746, 1024
        $region68: #{tpu_custom_call.1} parent=63 // pred_fallthru
          _
      $region64: #{tpu_custom_call.1} parent=5 // pred_fallthru
        _
    $region6: #{tpu_custom_call.1} parent=1 // loop_footer
      %s24 = sadd.s32 1, %s20
    $region7: #{tpu_custom_call.1} parent=1 // loop_footer_branch
      %19 = sbr.rel target = $region3
    $region8: #{tpu_custom_call.1} parent=1 // loop_exit
      _
    %3751 = vsyncpa [#allocation4], 1
    %s3752 = scalar_lea.sflag [#allocation4], 1
    %3753 = vsyncpa %s3752, 1
    %3754 = vsyncpa [#allocation7], 1
    %s3755 = scalar_lea.sflag [#allocation7], 1
    %3756 = vsyncpa %s3755, 1
    %3757 = vsyncpa [#allocation10], 1
    %3758 = vsyncpa [#allocation5], 1
    %s3759 = scalar_lea.sflag [#allocation5], 1
    %3760 = vsyncpa %s3759, 1

</llo_original>
